<compile_context>
chip_gen: v7x
topology: tpu7x:2x2x1
jax: 0.10.0
libtpu: 0.0.40
codegen_flags: <defaults>
</compile_context>

<pallas_src>
import jax
import jax.numpy as jnp
from jax.experimental import pallas as pl
from jax.experimental.pallas import tpu as pltpu


def _se_gate_kernel_lanedense(gate_ref, x_ref, o_ref):
    # gate_ref: (1, 1, tc) lane-dense per-channel gate block.
    # x_ref/o_ref: (tc, HW) activation tile (HW on lanes, channels on sublanes).
    g_row = jax.nn.sigmoid(gate_ref[0].astype(jnp.float32))   # (1, tc)  EUP, lane-dense
    g_col = jnp.transpose(g_row, (1, 0))                      # (tc, 1)  XLU relayout
    o_ref[...] = (g_col * x_ref[...]).astype(o_ref.dtype)     # lane-broadcast multiply


def _se_gate_kernel_column(gate_ref, x_ref, o_ref):
    # Fallback: gate_ref is a (tc, 1) column block (sublane-strided gate DMA).
    g = jax.nn.sigmoid(gate_ref[...].astype(jnp.float32))     # (tc, 1)
    o_ref[...] = (g * x_ref[...]).astype(o_ref.dtype)


def _tensorcores_per_chip() -> int:
    """Best-effort TensorCores-per-chip; conservative (1) when unsure."""
    try:
        kind = jax.devices()[0].device_kind.lower()
    except Exception:
        return 1
    # Single-TC chips.
    if ("lite" in kind or "v5e" in kind or "v6" in kind
            or "v2" in kind or "v3" in kind):
        return 1
    # Dual-TC ("megacore") chips.
    if "v4" in kind or "v5p" in kind or "7x" in kind or "v7" in kind:
        return 2
    return 1


def sigmoid_mul(x410: jax.Array, x406: jax.Array, *, num_tensorcores=None) -> jax.Array:
    """sigmoid(x410) * x406 with NCHW broadcasting, matching torch semantics."""
    n, c, h, w = x406.shape
    assert x410.shape == (n, c, 1, 1)

    hw = h * w
    nc = n * c

    if num_tensorcores is None:
        num_tensorcores = _tensorcores_per_chip()

    # Largest tile that fits VMEM; split into 2 "parallel" blocks only when a
    # second TensorCore exists to take the other half AND the split stays
    # sublane-aligned.  On 1-TC chips a second grid step is pure overhead.
    if num_tensorcores >= 2 and nc % 2 == 0 and (nc // 2) % 8 == 0:
        num_blocks = 2
    else:
        num_blocks = 1
    tc = nc // num_blocks

    x_flat = x406.reshape(nc, hw)   # HW on lanes, channels on sublanes

    itemsize = jnp.dtype(x406.dtype).itemsize
    cost = pl.CostEstimate(
        flops=nc * hw,
        transcendentals=nc,
        bytes_accessed=2 * nc * hw * itemsize + nc * jnp.dtype(x410.dtype).itemsize,
    )

    x_spec = pl.BlockSpec((tc, hw), lambda i: (i, 0))
    common = dict(
        out_shape=jax.ShapeDtypeStruct((nc, hw), x406.dtype),
        compiler_params=pltpu.CompilerParams(dimension_semantics=("parallel",)),
        cost_estimate=cost,
    )

    try:
        # Preferred: lane-dense gate -> one contiguous DMA per block.
        g_lane = x410.reshape(num_blocks, 1, tc)
        out_flat = pl.pallas_call(
            _se_gate_kernel_lanedense,
            grid_spec=pltpu.PrefetchScalarGridSpec(
                num_scalar_prefetch=0,
                grid=(num_blocks,),
                in_specs=[pl.BlockSpec((1, 1, tc), lambda i: (i, 0, 0)), x_spec],
                out_specs=x_spec,
            ),
            **common,
        )(g_lane, x_flat)
    except Exception:
        # TODO(synk): safety net only -- used if Mosaic rejects the
        # (1,tc)->(tc,1) relayout; gate DMA is sublane-strided on this path.
        g_col = x410.reshape(nc, 1)
        out_flat = pl.pallas_call(
            _se_gate_kernel_column,
            grid_spec=pltpu.PrefetchScalarGridSpec(
                num_scalar_prefetch=0,
                grid=(num_blocks,),
                in_specs=[pl.BlockSpec((tc, 1), lambda i: (i, 0)), x_spec],
                out_specs=x_spec,
            ),
            **common,
        )(g_col, x_flat)

    return out_flat.reshape(n, c, h, w)


if __name__ == "__main__":
    key = jax.random.PRNGKey(0)
    k1, k2 = jax.random.split(key)

    # Shapes from the reference module (whole problem is ~1.9 MB -> small).
    x406 = jax.random.normal(k1, (1, 1200, 14, 14), dtype=jnp.float32)
    x410 = jax.random.normal(k2, (1, 1200, 1, 1), dtype=jnp.float32)

    out = sigmoid_mul(x410, x406)
    out = jax.block_until_ready(out)

    # Reference check in plain JAX (same semantics as torch sigmoid * mul).
    ref = jax.nn.sigmoid(x410) * x406
    assert out.shape == ref.shape == (1, 1200, 14, 14)
    assert jnp.allclose(out, ref, atol=1e-6, rtol=1e-6)

    print("KERNEL_OK")
</pallas_src>

<mosaic_0001>
module attributes {stable_mosaic.version = 11 : i64} {
  func.func @_se_gate_kernel_lanedense(%arg0: i32, %arg1: memref<1x1x1200xf32, #tpu.memory_space<vmem>>, %arg2: memref<1200x196xf32, #tpu.memory_space<vmem>>, %arg3: memref<1200x196xf32, #tpu.memory_space<vmem>>) attributes {dimension_semantics = [#tpu.dimension_semantics<parallel>], iteration_bounds = array<i64: 1>, scalar_prefetch = 0 : i64, scratch_operands = 0 : i64, tpu.core_type = #tpu.core_type<tc>, window_params = [{transform_indices = @transform_0, window_bounds = array<i64: 1, 1, 1200>}, {transform_indices = @transform_1, window_bounds = array<i64: 1200, 196>}, {transform_indices = @transform_2, window_bounds = array<i64: 1200, 196>}]} {
    %c0 = arith.constant 0 : index
    %c0_0 = arith.constant 0 : index
    %c0_1 = arith.constant 0 : index
    %0 = vector.load %arg1[%c0, %c0_0, %c0_1] : memref<1x1x1200xf32, #tpu.memory_space<vmem>>, vector<1x1x1200xf32>
    %1 = vector.shape_cast %0 : vector<1x1x1200xf32> to vector<1x1200xf32>
    %2 = arith.negf %1 : vector<1x1200xf32>
    %3 = math.exp %2 : vector<1x1200xf32>
    %cst = arith.constant 1.000000e+00 : f32
    %4 = vector.broadcast %cst : f32 to vector<1x1200xf32>
    %5 = arith.addf %4, %3 : vector<1x1200xf32>
    %6 = arith.divf %4, %5 : vector<1x1200xf32>
    %7 = tpu.transpose %6, [1, 0] : vector<1x1200xf32> -> vector<1200x1xf32>
    %c0_2 = arith.constant 0 : index
    %c0_3 = arith.constant 0 : index
    %8 = vector.load %arg2[%c0_2, %c0_3] : memref<1200x196xf32, #tpu.memory_space<vmem>>, vector<1200x196xf32>
    %9 = vector.broadcast %7 : vector<1200x1xf32> to vector<1200x196xf32>
    %10 = arith.mulf %9, %8 : vector<1200x196xf32>
    %c0_4 = arith.constant 0 : index
    %c0_5 = arith.constant 0 : index
    %11 = vector.load %arg3[%c0_4, %c0_5] : memref<1200x196xf32, #tpu.memory_space<vmem>>, vector<1200x196xf32>
    tpu.vector_store %arg3[%c0_4, %c0_5], %10 {strides = array<i32>} : memref<1200x196xf32, #tpu.memory_space<vmem>>, vector<1200x196xf32>,
    return
  }
  func.func @transform_0(%arg0: i32) -> (i32, i32, i32) {
    %c0_i32 = arith.constant 0 : i32
    %c0_i32_0 = arith.constant 0 : i32
    %c0_i32_1 = arith.constant 0 : i32
    return %arg0, %c0_i32, %c0_i32_0 : i32, i32, i32
  }
  func.func @transform_1(%arg0: i32) -> (i32, i32) {
    %c0_i32 = arith.constant 0 : i32
    %c0_i32_0 = arith.constant 0 : i32
    return %arg0, %c0_i32 : i32, i32
  }
  func.func @transform_2(%arg0: i32) -> (i32, i32) {
    %c0_i32 = arith.constant 0 : i32
    %c0_i32_0 = arith.constant 0 : i32
    return %arg0, %c0_i32 : i32, i32
  }
}

module attributes {stable_mosaic.version = 11 : i64} {
  func.func @_se_gate_kernel_column(%arg0: i32, %arg1: memref<1200x1xf32, #tpu.memory_space<vmem>>, %arg2: memref<1200x196xf32, #tpu.memory_space<vmem>>, %arg3: memref<1200x196xf32, #tpu.memory_space<vmem>>) attributes {dimension_semantics = [#tpu.dimension_semantics<parallel>], iteration_bounds = array<i64: 1>, scalar_prefetch = 0 : i64, scratch_operands = 0 : i64, tpu.core_type = #tpu.core_type<tc>, window_params = [{transform_indices = @transform_0, window_bounds = array<i64: 1200, 1>}, {transform_indices = @transform_1, window_bounds = array<i64: 1200, 196>}, {transform_indices = @transform_2, window_bounds = array<i64: 1200, 196>}]} {
    %c0 = arith.constant 0 : index
    %c0_0 = arith.constant 0 : index
    %0 = vector.load %arg1[%c0, %c0_0] : memref<1200x1xf32, #tpu.memory_space<vmem>>, vector<1200x1xf32>
    %1 = arith.negf %0 : vector<1200x1xf32>
    %2 = math.exp %1 : vector<1200x1xf32>
    %cst = arith.constant 1.000000e+00 : f32
    %3 = vector.broadcast %cst : f32 to vector<1200x1xf32>
    %4 = arith.addf %3, %2 : vector<1200x1xf32>
    %5 = arith.divf %3, %4 : vector<1200x1xf32>
    %c0_1 = arith.constant 0 : index
    %c0_2 = arith.constant 0 : index
    %6 = vector.load %arg2[%c0_1, %c0_2] : memref<1200x196xf32, #tpu.memory_space<vmem>>, vector<1200x196xf32>
    %7 = vector.broadcast %5 : vector<1200x1xf32> to vector<1200x196xf32>
    %8 = arith.mulf %7, %6 : vector<1200x196xf32>
    %c0_3 = arith.constant 0 : index
    %c0_4 = arith.constant 0 : index
    %9 = vector.load %arg3[%c0_3, %c0_4] : memref<1200x196xf32, #tpu.memory_space<vmem>>, vector<1200x196xf32>
    tpu.vector_store %arg3[%c0_3, %c0_4], %8 {strides = array<i32>} : memref<1200x196xf32, #tpu.memory_space<vmem>>, vector<1200x196xf32>,
    return
  }
  func.func @transform_0(%arg0: i32) -> (i32, i32) {
    %c0_i32 = arith.constant 0 : i32
    %c0_i32_0 = arith.constant 0 : i32
    return %arg0, %c0_i32 : i32, i32
  }
  func.func @transform_1(%arg0: i32) -> (i32, i32) {
    %c0_i32 = arith.constant 0 : i32
    %c0_i32_0 = arith.constant 0 : i32
    return %arg0, %c0_i32 : i32, i32
  }
  func.func @transform_2(%arg0: i32) -> (i32, i32) {
    %c0_i32 = arith.constant 0 : i32
    %c0_i32_0 = arith.constant 0 : i32
    return %arg0, %c0_i32 : i32, i32
  }
}

</mosaic_0001>

<llo_original>
// kernel: tpu_custom_call.1
$region0: #{tpu_custom_call.1}
  #allocation0 [shape = 'u32[]', space=smem, size = 0x4, offset = 0x4, fixed_abs, tag = 'smem constant byte address 0x4 - core index']
  #allocation1 [shape = 'u32[144,128]{1,0:T(1,128)}', space=vmem, size = 0x12000, scoped, tag = 'internal scratch']
  %s0 = inlined_call_operand.vmem [shape: f32[1,1,1200], index: 0, kind: input, shape index: {}]
  %s1 = inlined_call_operand.vmem [shape: f32[1200,196], index: 1, kind: input, shape index: {}]
  %s2 = inlined_call_operand.vmem [shape: f32[1200,196], index: 2, kind: output, shape index: {}]
  %s3 = sld [smem:[#allocation0]]
  $region18: #{tpu_custom_call.1} parent=0
    _
  %s5 = ssub.s32 1, %s3
  %s6 = scalar_select 0, %s5, %s3
  // Predicated region
  $region2: #{tpu_custom_call.1} parent=0 // pred_check
    _
  $region3: #{tpu_custom_call.1} parent=0 // pred_check_branch
    %8 = sbr.rel (0) target = $region5
  $region4: #{tpu_custom_call.1} parent=0 // pred_region
    _
  $region5: #{tpu_custom_call.1} parent=0 // pred_fallthru
    _
  // Predicated region
  $region6: #{tpu_custom_call.1} parent=0 // pred_check
    _
  $region7: #{tpu_custom_call.1} parent=0 // pred_check_branch
    %10 = sbr.rel (0) target = $region9
  $region8: #{tpu_custom_call.1} parent=0 // pred_region
    _
  $region9: #{tpu_custom_call.1} parent=0 // pred_fallthru
    _
  %v11 = vld [vmem:[%s0] sm:$0xff]
  %v12 = vld [vmem:[%s0 + $0x8] sm:$0x3]
  %v13 = vxor.u32 %v11, 2147483648
  %v14 = vxor.u32 %v12, 2147483648
  %v15 = vmul.f32 %v13, 1.442695
  %v16 = vpow.pop %v15
  %v17 = vmul.f32 %v14, 1.442695
  %v18 = vpow.pop %v17
  %v19 = vadd.f32 %v16, 1.0
  %v20 = vadd.f32 %v18, 1.0
  %v21 = vrcp.pop %v19
  %v22 = vmul.f32 1.0, %v21
  %v23 = vrcp.pop %v20
  %v24 = vmul.f32 1.0, %v23
  %v27 = vlaneseq
  %v28 = vshrl.u32 %v27, 7
  %v29 = vsub.s32 0, %v28
  %v30 = vrot.slane %v22, %v29
  %v31 = vlaneseq
  %v32 = vshrl.u32 %v31, 7
  %v33 = vsub.s32 1, %v32
  %v34 = vrot.slane %v22, %v33
  %v35 = vlaneseq
  %v36 = vshrl.u32 %v35, 7
  %v37 = vsub.s32 2, %v36
  %v38 = vrot.slane %v22, %v37
  %v39 = vlaneseq
  %v40 = vshrl.u32 %v39, 7
  %v41 = vsub.s32 3, %v40
  %v42 = vrot.slane %v22, %v41
  %v43 = vlaneseq
  %v44 = vshrl.u32 %v43, 7
  %v45 = vsub.s32 4, %v44
  %v46 = vrot.slane %v22, %v45
  %v47 = vlaneseq
  %v48 = vshrl.u32 %v47, 7
  %v49 = vsub.s32 5, %v48
  %v50 = vrot.slane %v22, %v49
  %v51 = vlaneseq
  %v52 = vshrl.u32 %v51, 7
  %v53 = vsub.s32 6, %v52
  %v54 = vrot.slane %v22, %v53
  %v55 = vlaneseq
  %v56 = vshrl.u32 %v55, 7
  %v57 = vsub.s32 7, %v56
  %v58 = vrot.slane %v22, %v57
  %v59 = vlaneseq
  %v60 = vshrl.u32 %v59, 7
  %v61 = vsub.s32 0, %v60
  %v62 = vrot.slane %v24, %v61
  %v63 = vlaneseq
  %v64 = vshrl.u32 %v63, 7
  %v65 = vsub.s32 1, %v64
  %v66 = vrot.slane %v24, %v65
  %77 = vxpose.xlu0.b32.start [1/16] %v30, 128
  %78 = vxpose.xlu0.b32.cont [2/16] 0.0, 128
  %79 = vxpose.xlu0.b32.cont [3/16] 0.0, 128
  %80 = vxpose.xlu0.b32.cont [4/16] 0.0, 128
  %81 = vxpose.xlu0.b32.cont [5/16] 0.0, 128
  %82 = vxpose.xlu0.b32.cont [6/16] 0.0, 128
  %83 = vxpose.xlu0.b32.cont [7/16] 0.0, 128
  %84 = vxpose.xlu0.b32.cont [8/16] 0.0, 128
  %85 = vxpose.xlu0.b32.cont [9/16] 0.0, 128
  %86 = vxpose.xlu0.b32.cont [10/16] 0.0, 128
  %87 = vxpose.xlu0.b32.cont [11/16] 0.0, 128
  %88 = vxpose.xlu0.b32.cont [12/16] 0.0, 128
  %89 = vxpose.xlu0.b32.cont [13/16] 0.0, 128
  %90 = vxpose.xlu0.b32.cont [14/16] 0.0, 128
  %91 = vxpose.xlu0.b32.cont [15/16] 0.0, 128
  %92 = vxpose.xlu0.b32.end [16/16] 0.0, 128
  %v93 = vpop.trf.xlu0
  %v94 = vpop.trf.xlu0
  %v95 = vpop.trf.xlu0
  %v96 = vpop.trf.xlu0
  %v97 = vpop.trf.xlu0
  %v98 = vpop.trf.xlu0
  %v99 = vpop.trf.xlu0
  %v100 = vpop.trf.xlu0
  %v101 = vpop.trf.xlu0
  %v102 = vpop.trf.xlu0
  %v103 = vpop.trf.xlu0
  %v104 = vpop.trf.xlu0
  %v105 = vpop.trf.xlu0
  %v106 = vpop.trf.xlu0
  %v107 = vpop.trf.xlu0
  %v108 = vpop.trf.xlu0
  %109 = vxpose.xlu0.b32.start [1/16] %v34, 128
  %110 = vxpose.xlu0.b32.cont [2/16] 0.0, 128
  %111 = vxpose.xlu0.b32.cont [3/16] 0.0, 128
  %112 = vxpose.xlu0.b32.cont [4/16] 0.0, 128
  %113 = vxpose.xlu0.b32.cont [5/16] 0.0, 128
  %114 = vxpose.xlu0.b32.cont [6/16] 0.0, 128
  %115 = vxpose.xlu0.b32.cont [7/16] 0.0, 128
  %116 = vxpose.xlu0.b32.cont [8/16] 0.0, 128
  %117 = vxpose.xlu0.b32.cont [9/16] 0.0, 128
  %118 = vxpose.xlu0.b32.cont [10/16] 0.0, 128
  %119 = vxpose.xlu0.b32.cont [11/16] 0.0, 128
  %120 = vxpose.xlu0.b32.cont [12/16] 0.0, 128
  %121 = vxpose.xlu0.b32.cont [13/16] 0.0, 128
  %122 = vxpose.xlu0.b32.cont [14/16] 0.0, 128
  %123 = vxpose.xlu0.b32.cont [15/16] 0.0, 128
  %124 = vxpose.xlu0.b32.end [16/16] 0.0, 128
  %v125 = vpop.trf.xlu0
  %v126 = vpop.trf.xlu0
  %v127 = vpop.trf.xlu0
  %v128 = vpop.trf.xlu0
  %v129 = vpop.trf.xlu0
  %v130 = vpop.trf.xlu0
  %v131 = vpop.trf.xlu0
  %v132 = vpop.trf.xlu0
  %v133 = vpop.trf.xlu0
  %v134 = vpop.trf.xlu0
  %v135 = vpop.trf.xlu0
  %v136 = vpop.trf.xlu0
  %v137 = vpop.trf.xlu0
  %v138 = vpop.trf.xlu0
  %v139 = vpop.trf.xlu0
  %v140 = vpop.trf.xlu0
  %141 = vxpose.xlu0.b32.start [1/16] %v38, 128
  %142 = vxpose.xlu0.b32.cont [2/16] 0.0, 128
  %143 = vxpose.xlu0.b32.cont [3/16] 0.0, 128
  %144 = vxpose.xlu0.b32.cont [4/16] 0.0, 128
  %145 = vxpose.xlu0.b32.cont [5/16] 0.0, 128
  %146 = vxpose.xlu0.b32.cont [6/16] 0.0, 128
  %147 = vxpose.xlu0.b32.cont [7/16] 0.0, 128
  %148 = vxpose.xlu0.b32.cont [8/16] 0.0, 128
  %149 = vxpose.xlu0.b32.cont [9/16] 0.0, 128
  %150 = vxpose.xlu0.b32.cont [10/16] 0.0, 128
  %151 = vxpose.xlu0.b32.cont [11/16] 0.0, 128
  %152 = vxpose.xlu0.b32.cont [12/16] 0.0, 128
  %153 = vxpose.xlu0.b32.cont [13/16] 0.0, 128
  %154 = vxpose.xlu0.b32.cont [14/16] 0.0, 128
  %155 = vxpose.xlu0.b32.cont [15/16] 0.0, 128
  %156 = vxpose.xlu0.b32.end [16/16] 0.0, 128
  %v157 = vpop.trf.xlu0
  %v158 = vpop.trf.xlu0
  %v159 = vpop.trf.xlu0
  %v160 = vpop.trf.xlu0
  %v161 = vpop.trf.xlu0
  %v162 = vpop.trf.xlu0
  %v163 = vpop.trf.xlu0
  %v164 = vpop.trf.xlu0
  %v165 = vpop.trf.xlu0
  %v166 = vpop.trf.xlu0
  %v167 = vpop.trf.xlu0
  %v168 = vpop.trf.xlu0
  %v169 = vpop.trf.xlu0
  %v170 = vpop.trf.xlu0
  %v171 = vpop.trf.xlu0
  %v172 = vpop.trf.xlu0
  %173 = vxpose.xlu0.b32.start [1/16] %v42, 128
  %174 = vxpose.xlu0.b32.cont [2/16] 0.0, 128
  %175 = vxpose.xlu0.b32.cont [3/16] 0.0, 128
  %176 = vxpose.xlu0.b32.cont [4/16] 0.0, 128
  %177 = vxpose.xlu0.b32.cont [5/16] 0.0, 128
  %178 = vxpose.xlu0.b32.cont [6/16] 0.0, 128
  %179 = vxpose.xlu0.b32.cont [7/16] 0.0, 128
  %180 = vxpose.xlu0.b32.cont [8/16] 0.0, 128
  %181 = vxpose.xlu0.b32.cont [9/16] 0.0, 128
  %182 = vxpose.xlu0.b32.cont [10/16] 0.0, 128
  %183 = vxpose.xlu0.b32.cont [11/16] 0.0, 128
  %184 = vxpose.xlu0.b32.cont [12/16] 0.0, 128
  %185 = vxpose.xlu0.b32.cont [13/16] 0.0, 128
  %186 = vxpose.xlu0.b32.cont [14/16] 0.0, 128
  %187 = vxpose.xlu0.b32.cont [15/16] 0.0, 128
  %188 = vxpose.xlu0.b32.end [16/16] 0.0, 128
  %v189 = vpop.trf.xlu0
  %v190 = vpop.trf.xlu0
  %v191 = vpop.trf.xlu0
  %v192 = vpop.trf.xlu0
  %v193 = vpop.trf.xlu0
  %v194 = vpop.trf.xlu0
  %v195 = vpop.trf.xlu0
  %v196 = vpop.trf.xlu0
  %v197 = vpop.trf.xlu0
  %v198 = vpop.trf.xlu0
  %v199 = vpop.trf.xlu0
  %v200 = vpop.trf.xlu0
  %v201 = vpop.trf.xlu0
  %v202 = vpop.trf.xlu0
  %v203 = vpop.trf.xlu0
  %v204 = vpop.trf.xlu0
  %205 = vxpose.xlu0.b32.start [1/16] %v46, 128
  %206 = vxpose.xlu0.b32.cont [2/16] 0.0, 128
  %207 = vxpose.xlu0.b32.cont [3/16] 0.0, 128
  %208 = vxpose.xlu0.b32.cont [4/16] 0.0, 128
  %209 = vxpose.xlu0.b32.cont [5/16] 0.0, 128
  %210 = vxpose.xlu0.b32.cont [6/16] 0.0, 128
  %211 = vxpose.xlu0.b32.cont [7/16] 0.0, 128
  %212 = vxpose.xlu0.b32.cont [8/16] 0.0, 128
  %213 = vxpose.xlu0.b32.cont [9/16] 0.0, 128
  %214 = vxpose.xlu0.b32.cont [10/16] 0.0, 128
  %215 = vxpose.xlu0.b32.cont [11/16] 0.0, 128
  %216 = vxpose.xlu0.b32.cont [12/16] 0.0, 128
  %217 = vxpose.xlu0.b32.cont [13/16] 0.0, 128
  %218 = vxpose.xlu0.b32.cont [14/16] 0.0, 128
  %219 = vxpose.xlu0.b32.cont [15/16] 0.0, 128
  %220 = vxpose.xlu0.b32.end [16/16] 0.0, 128
  %v221 = vpop.trf.xlu0
  %v222 = vpop.trf.xlu0
  %v223 = vpop.trf.xlu0
  %v224 = vpop.trf.xlu0
  %v225 = vpop.trf.xlu0
  %v226 = vpop.trf.xlu0
  %v227 = vpop.trf.xlu0
  %v228 = vpop.trf.xlu0
  %v229 = vpop.trf.xlu0
  %v230 = vpop.trf.xlu0
  %v231 = vpop.trf.xlu0
  %v232 = vpop.trf.xlu0
  %v233 = vpop.trf.xlu0
  %v234 = vpop.trf.xlu0
  %v235 = vpop.trf.xlu0
  %v236 = vpop.trf.xlu0
  %237 = vxpose.xlu0.b32.start [1/16] %v50, 128
  %238 = vxpose.xlu0.b32.cont [2/16] 0.0, 128
  %239 = vxpose.xlu0.b32.cont [3/16] 0.0, 128
  %240 = vxpose.xlu0.b32.cont [4/16] 0.0, 128
  %241 = vxpose.xlu0.b32.cont [5/16] 0.0, 128
  %242 = vxpose.xlu0.b32.cont [6/16] 0.0, 128
  %243 = vxpose.xlu0.b32.cont [7/16] 0.0, 128
  %244 = vxpose.xlu0.b32.cont [8/16] 0.0, 128
  %245 = vxpose.xlu0.b32.cont [9/16] 0.0, 128
  %246 = vxpose.xlu0.b32.cont [10/16] 0.0, 128
  %247 = vxpose.xlu0.b32.cont [11/16] 0.0, 128
  %248 = vxpose.xlu0.b32.cont [12/16] 0.0, 128
  %249 = vxpose.xlu0.b32.cont [13/16] 0.0, 128
  %250 = vxpose.xlu0.b32.cont [14/16] 0.0, 128
  %251 = vxpose.xlu0.b32.cont [15/16] 0.0, 128
  %252 = vxpose.xlu0.b32.end [16/16] 0.0, 128
  %v253 = vpop.trf.xlu0
  %v254 = vpop.trf.xlu0
  %v255 = vpop.trf.xlu0
  %v256 = vpop.trf.xlu0
  %v257 = vpop.trf.xlu0
  %v258 = vpop.trf.xlu0
  %v259 = vpop.trf.xlu0
  %v260 = vpop.trf.xlu0
  %v261 = vpop.trf.xlu0
  %v262 = vpop.trf.xlu0
  %v263 = vpop.trf.xlu0
  %v264 = vpop.trf.xlu0
  %v265 = vpop.trf.xlu0
  %v266 = vpop.trf.xlu0
  %v267 = vpop.trf.xlu0
  %v268 = vpop.trf.xlu0
  %269 = vxpose.xlu0.b32.start [1/16] %v54, 128
  %270 = vxpose.xlu0.b32.cont [2/16] 0.0, 128
  %271 = vxpose.xlu0.b32.cont [3/16] 0.0, 128
  %272 = vxpose.xlu0.b32.cont [4/16] 0.0, 128
  %273 = vxpose.xlu0.b32.cont [5/16] 0.0, 128
  %274 = vxpose.xlu0.b32.cont [6/16] 0.0, 128
  %275 = vxpose.xlu0.b32.cont [7/16] 0.0, 128
  %276 = vxpose.xlu0.b32.cont [8/16] 0.0, 128
  %277 = vxpose.xlu0.b32.cont [9/16] 0.0, 128
  %278 = vxpose.xlu0.b32.cont [10/16] 0.0, 128
  %279 = vxpose.xlu0.b32.cont [11/16] 0.0, 128
  %280 = vxpose.xlu0.b32.cont [12/16] 0.0, 128
  %281 = vxpose.xlu0.b32.cont [13/16] 0.0, 128
  %282 = vxpose.xlu0.b32.cont [14/16] 0.0, 128
  %283 = vxpose.xlu0.b32.cont [15/16] 0.0, 128
  %284 = vxpose.xlu0.b32.end [16/16] 0.0, 128
  %v285 = vpop.trf.xlu0
  %v286 = vpop.trf.xlu0
  %v287 = vpop.trf.xlu0
  %v288 = vpop.trf.xlu0
  %v289 = vpop.trf.xlu0
  %v290 = vpop.trf.xlu0
  %v291 = vpop.trf.xlu0
  %v292 = vpop.trf.xlu0
  %v293 = vpop.trf.xlu0
  %v294 = vpop.trf.xlu0
  %v295 = vpop.trf.xlu0
  %v296 = vpop.trf.xlu0
  %v297 = vpop.trf.xlu0
  %v298 = vpop.trf.xlu0
  %v299 = vpop.trf.xlu0
  %v300 = vpop.trf.xlu0
  %301 = vxpose.xlu0.b32.start [1/16] %v58, 128
  %302 = vxpose.xlu0.b32.cont [2/16] 0.0, 128
  %303 = vxpose.xlu0.b32.cont [3/16] 0.0, 128
  %304 = vxpose.xlu0.b32.cont [4/16] 0.0, 128
  %305 = vxpose.xlu0.b32.cont [5/16] 0.0, 128
  %306 = vxpose.xlu0.b32.cont [6/16] 0.0, 128
  %307 = vxpose.xlu0.b32.cont [7/16] 0.0, 128
  %308 = vxpose.xlu0.b32.cont [8/16] 0.0, 128
  %309 = vxpose.xlu0.b32.cont [9/16] 0.0, 128
  %310 = vxpose.xlu0.b32.cont [10/16] 0.0, 128
  %311 = vxpose.xlu0.b32.cont [11/16] 0.0, 128
  %312 = vxpose.xlu0.b32.cont [12/16] 0.0, 128
  %313 = vxpose.xlu0.b32.cont [13/16] 0.0, 128
  %314 = vxpose.xlu0.b32.cont [14/16] 0.0, 128
  %315 = vxpose.xlu0.b32.cont [15/16] 0.0, 128
  %316 = vxpose.xlu0.b32.end [16/16] 0.0, 128
  %v317 = vpop.trf.xlu0
  %v318 = vpop.trf.xlu0
  %v319 = vpop.trf.xlu0
  %v320 = vpop.trf.xlu0
  %v321 = vpop.trf.xlu0
  %v322 = vpop.trf.xlu0
  %v323 = vpop.trf.xlu0
  %v324 = vpop.trf.xlu0
  %v325 = vpop.trf.xlu0
  %v326 = vpop.trf.xlu0
  %v327 = vpop.trf.xlu0
  %v328 = vpop.trf.xlu0
  %v329 = vpop.trf.xlu0
  %v330 = vpop.trf.xlu0
  %v331 = vpop.trf.xlu0
  %v332 = vpop.trf.xlu0
  %333 = vxpose.xlu0.b32.start [1/16] %v62, 128
  %334 = vxpose.xlu0.b32.cont [2/16] 0.0, 128
  %335 = vxpose.xlu0.b32.cont [3/16] 0.0, 128
  %336 = vxpose.xlu0.b32.cont [4/16] 0.0, 128
  %337 = vxpose.xlu0.b32.cont [5/16] 0.0, 128
  %338 = vxpose.xlu0.b32.cont [6/16] 0.0, 128
  %339 = vxpose.xlu0.b32.cont [7/16] 0.0, 128
  %340 = vxpose.xlu0.b32.cont [8/16] 0.0, 128
  %341 = vxpose.xlu0.b32.cont [9/16] 0.0, 128
  %342 = vxpose.xlu0.b32.cont [10/16] 0.0, 128
  %343 = vxpose.xlu0.b32.cont [11/16] 0.0, 128
  %344 = vxpose.xlu0.b32.cont [12/16] 0.0, 128
  %345 = vxpose.xlu0.b32.cont [13/16] 0.0, 128
  %346 = vxpose.xlu0.b32.cont [14/16] 0.0, 128
  %347 = vxpose.xlu0.b32.cont [15/16] 0.0, 128
  %348 = vxpose.xlu0.b32.end [16/16] 0.0, 128
  %v349 = vpop.trf.xlu0
  %v350 = vpop.trf.xlu0
  %v351 = vpop.trf.xlu0
  %v352 = vpop.trf.xlu0
  %v353 = vpop.trf.xlu0
  %v354 = vpop.trf.xlu0
  %v355 = vpop.trf.xlu0
  %v356 = vpop.trf.xlu0
  %v357 = vpop.trf.xlu0
  %v358 = vpop.trf.xlu0
  %v359 = vpop.trf.xlu0
  %v360 = vpop.trf.xlu0
  %v361 = vpop.trf.xlu0
  %v362 = vpop.trf.xlu0
  %v363 = vpop.trf.xlu0
  %v364 = vpop.trf.xlu0
  %365 = vxpose.xlu0.b32.start [1/16] %v66, 128
  %366 = vxpose.xlu0.b32.cont [2/16] 0.0, 128
  %367 = vxpose.xlu0.b32.cont [3/16] 0.0, 128
  %368 = vxpose.xlu0.b32.cont [4/16] 0.0, 128
  %369 = vxpose.xlu0.b32.cont [5/16] 0.0, 128
  %370 = vxpose.xlu0.b32.cont [6/16] 0.0, 128
  %371 = vxpose.xlu0.b32.cont [7/16] 0.0, 128
  %372 = vxpose.xlu0.b32.cont [8/16] 0.0, 128
  %373 = vxpose.xlu0.b32.cont [9/16] 0.0, 128
  %374 = vxpose.xlu0.b32.cont [10/16] 0.0, 128
  %375 = vxpose.xlu0.b32.cont [11/16] 0.0, 128
  %376 = vxpose.xlu0.b32.cont [12/16] 0.0, 128
  %377 = vxpose.xlu0.b32.cont [13/16] 0.0, 128
  %378 = vxpose.xlu0.b32.cont [14/16] 0.0, 128
  %379 = vxpose.xlu0.b32.cont [15/16] 0.0, 128
  %380 = vxpose.xlu0.b32.end [16/16] 0.0, 128
  %v381 = vpop.trf.xlu0
  %v382 = vpop.trf.xlu0
  %v383 = vpop.trf.xlu0
  %v384 = vpop.trf.xlu0
  %v385 = vpop.trf.xlu0
  %v386 = vpop.trf.xlu0
  %v387 = vpop.trf.xlu0
  %v388 = vpop.trf.xlu0
  %v389 = vpop.trf.xlu0
  %v390 = vpop.trf.xlu0
  %v391 = vpop.trf.xlu0
  %v392 = vpop.trf.xlu0
  %v393 = vpop.trf.xlu0
  %v394 = vpop.trf.xlu0
  %v395 = vpop.trf.xlu0
  %v396 = vpop.trf.xlu0
  %v397 = vld [vmem:[%s1] sm:$0xff]
  %v398 = vld [vmem:[%s1 + $0x8] sm:$0xff]
  %v399 = vld [vmem:[%s1 + $0x10] sm:$0xff]
  %v400 = vld [vmem:[%s1 + $0x18] sm:$0xff]
  %v401 = vld [vmem:[%s1 + $0x20] sm:$0xff]
  %v402 = vld [vmem:[%s1 + $0x28] sm:$0xff]
  %v403 = vld [vmem:[%s1 + $0x30] sm:$0xff]
  %v404 = vld [vmem:[%s1 + $0x38] sm:$0xff]
  %v405 = vld [vmem:[%s1 + $0x40] sm:$0xff]
  %v406 = vld [vmem:[%s1 + $0x48] sm:$0xff]
  %v407 = vld [vmem:[%s1 + $0x50] sm:$0xff]
  %v408 = vld [vmem:[%s1 + $0x58] sm:$0xff]
  %v409 = vld [vmem:[%s1 + $0x60] sm:$0xff]
  %v410 = vld [vmem:[%s1 + $0x68] sm:$0xff]
  %v411 = vld [vmem:[%s1 + $0x70] sm:$0xff]
  %v412 = vld [vmem:[%s1 + $0x78] sm:$0xff]
  %v413 = vld [vmem:[%s1 + $0x80] sm:$0xff]
  %v414 = vld [vmem:[%s1 + $0x88] sm:$0xff]
  %v415 = vld [vmem:[%s1 + $0x90] sm:$0xff]
  %v416 = vld [vmem:[%s1 + $0x98] sm:$0xff]
  %v417 = vld [vmem:[%s1 + $0xa0] sm:$0xff]
  %v418 = vld [vmem:[%s1 + $0xa8] sm:$0xff]
  %v419 = vld [vmem:[%s1 + $0xb0] sm:$0xff]
  %v420 = vld [vmem:[%s1 + $0xb8] sm:$0xff]
  %v421 = vld [vmem:[%s1 + $0xc0] sm:$0xff]
  %v422 = vld [vmem:[%s1 + $0xc8] sm:$0xff]
  %v423 = vld [vmem:[%s1 + $0xd0] sm:$0xff]
  %v424 = vld [vmem:[%s1 + $0xd8] sm:$0xff]
  %v425 = vld [vmem:[%s1 + $0xe0] sm:$0xff]
  %v426 = vld [vmem:[%s1 + $0xe8] sm:$0xff]
  %v427 = vld [vmem:[%s1 + $0xf0] sm:$0xff]
  %v428 = vld [vmem:[%s1 + $0xf8] sm:$0xff]
  %v429 = vld [vmem:[%s1 + $0x100] sm:$0xff]
  %v430 = vld [vmem:[%s1 + $0x108] sm:$0xff]
  %v431 = vld [vmem:[%s1 + $0x110] sm:$0xff]
  %v432 = vld [vmem:[%s1 + $0x118] sm:$0xff]
  %v433 = vld [vmem:[%s1 + $0x120] sm:$0xff]
  %v434 = vld [vmem:[%s1 + $0x128] sm:$0xff]
  %v435 = vld [vmem:[%s1 + $0x130] sm:$0xff]
  %v436 = vld [vmem:[%s1 + $0x138] sm:$0xff]
  %v437 = vld [vmem:[%s1 + $0x140] sm:$0xff]
  %v438 = vld [vmem:[%s1 + $0x148] sm:$0xff]
  %v439 = vld [vmem:[%s1 + $0x150] sm:$0xff]
  %v440 = vld [vmem:[%s1 + $0x158] sm:$0xff]
  %v441 = vld [vmem:[%s1 + $0x160] sm:$0xff]
  %v442 = vld [vmem:[%s1 + $0x168] sm:$0xff]
  %v443 = vld [vmem:[%s1 + $0x170] sm:$0xff]
  %v444 = vld [vmem:[%s1 + $0x178] sm:$0xff]
  %v445 = vld [vmem:[%s1 + $0x180] sm:$0xff]
  %v446 = vld [vmem:[%s1 + $0x188] sm:$0xff]
  %v447 = vld [vmem:[%s1 + $0x190] sm:$0xff]
  %v448 = vld [vmem:[%s1 + $0x198] sm:$0xff]
  %v449 = vld [vmem:[%s1 + $0x1a0] sm:$0xff]
  %v450 = vld [vmem:[%s1 + $0x1a8] sm:$0xff]
  %v451 = vld [vmem:[%s1 + $0x1b0] sm:$0xff]
  %v452 = vld [vmem:[%s1 + $0x1b8] sm:$0xff]
  %v453 = vld [vmem:[%s1 + $0x1c0] sm:$0xff]
  %v454 = vld [vmem:[%s1 + $0x1c8] sm:$0xff]
  %v455 = vld [vmem:[%s1 + $0x1d0] sm:$0xff]
  %v456 = vld [vmem:[%s1 + $0x1d8] sm:$0xff]
  %v457 = vld [vmem:[%s1 + $0x1e0] sm:$0xff]
  %v458 = vld [vmem:[%s1 + $0x1e8] sm:$0xff]
  %v459 = vld [vmem:[%s1 + $0x1f0] sm:$0xff]
  %v460 = vld [vmem:[%s1 + $0x1f8] sm:$0xff]
  %v461 = vld [vmem:[%s1 + $0x200] sm:$0xff]
  %v462 = vld [vmem:[%s1 + $0x208] sm:$0xff]
  %v463 = vld [vmem:[%s1 + $0x210] sm:$0xff]
  %v464 = vld [vmem:[%s1 + $0x218] sm:$0xff]
  %v465 = vld [vmem:[%s1 + $0x220] sm:$0xff]
  %v466 = vld [vmem:[%s1 + $0x228] sm:$0xff]
  %v467 = vld [vmem:[%s1 + $0x230] sm:$0xff]
  %v468 = vld [vmem:[%s1 + $0x238] sm:$0xff]
  %v469 = vld [vmem:[%s1 + $0x240] sm:$0xff]
  %v470 = vld [vmem:[%s1 + $0x248] sm:$0xff]
  %v471 = vld [vmem:[%s1 + $0x250] sm:$0xff]
  %v472 = vld [vmem:[%s1 + $0x258] sm:$0xff]
  %v473 = vld [vmem:[%s1 + $0x260] sm:$0xff]
  %v474 = vld [vmem:[%s1 + $0x268] sm:$0xff]
  %v475 = vld [vmem:[%s1 + $0x270] sm:$0xff]
  %v476 = vld [vmem:[%s1 + $0x278] sm:$0xff]
  %v477 = vld [vmem:[%s1 + $0x280] sm:$0xff]
  %v478 = vld [vmem:[%s1 + $0x288] sm:$0xff]
  %v479 = vld [vmem:[%s1 + $0x290] sm:$0xff]
  %v480 = vld [vmem:[%s1 + $0x298] sm:$0xff]
  %v481 = vld [vmem:[%s1 + $0x2a0] sm:$0xff]
  %v482 = vld [vmem:[%s1 + $0x2a8] sm:$0xff]
  %v483 = vld [vmem:[%s1 + $0x2b0] sm:$0xff]
  %v484 = vld [vmem:[%s1 + $0x2b8] sm:$0xff]
  %v485 = vld [vmem:[%s1 + $0x2c0] sm:$0xff]
  %v486 = vld [vmem:[%s1 + $0x2c8] sm:$0xff]
  %v487 = vld [vmem:[%s1 + $0x2d0] sm:$0xff]
  %v488 = vld [vmem:[%s1 + $0x2d8] sm:$0xff]
  %v489 = vld [vmem:[%s1 + $0x2e0] sm:$0xff]
  %v490 = vld [vmem:[%s1 + $0x2e8] sm:$0xff]
  %v491 = vld [vmem:[%s1 + $0x2f0] sm:$0xff]
  %v492 = vld [vmem:[%s1 + $0x2f8] sm:$0xff]
  %v493 = vld [vmem:[%s1 + $0x300] sm:$0xff]
  %v494 = vld [vmem:[%s1 + $0x308] sm:$0xff]
  %v495 = vld [vmem:[%s1 + $0x310] sm:$0xff]
  %v496 = vld [vmem:[%s1 + $0x318] sm:$0xff]
  %v497 = vld [vmem:[%s1 + $0x320] sm:$0xff]
  %v498 = vld [vmem:[%s1 + $0x328] sm:$0xff]
  %v499 = vld [vmem:[%s1 + $0x330] sm:$0xff]
  %v500 = vld [vmem:[%s1 + $0x338] sm:$0xff]
  %v501 = vld [vmem:[%s1 + $0x340] sm:$0xff]
  %v502 = vld [vmem:[%s1 + $0x348] sm:$0xff]
  %v503 = vld [vmem:[%s1 + $0x350] sm:$0xff]
  %v504 = vld [vmem:[%s1 + $0x358] sm:$0xff]
  %v505 = vld [vmem:[%s1 + $0x360] sm:$0xff]
  %v506 = vld [vmem:[%s1 + $0x368] sm:$0xff]
  %v507 = vld [vmem:[%s1 + $0x370] sm:$0xff]
  %v508 = vld [vmem:[%s1 + $0x378] sm:$0xff]
  %v509 = vld [vmem:[%s1 + $0x380] sm:$0xff]
  %v510 = vld [vmem:[%s1 + $0x388] sm:$0xff]
  %v511 = vld [vmem:[%s1 + $0x390] sm:$0xff]
  %v512 = vld [vmem:[%s1 + $0x398] sm:$0xff]
  %v513 = vld [vmem:[%s1 + $0x3a0] sm:$0xff]
  %v514 = vld [vmem:[%s1 + $0x3a8] sm:$0xff]
  %v515 = vld [vmem:[%s1 + $0x3b0] sm:$0xff]
  %v516 = vld [vmem:[%s1 + $0x3b8] sm:$0xff]
  %v517 = vld [vmem:[%s1 + $0x3c0] sm:$0xff]
  %v518 = vld [vmem:[%s1 + $0x3c8] sm:$0xff]
  %v519 = vld [vmem:[%s1 + $0x3d0] sm:$0xff]
  %v520 = vld [vmem:[%s1 + $0x3d8] sm:$0xff]
  %v521 = vld [vmem:[%s1 + $0x3e0] sm:$0xff]
  %v522 = vld [vmem:[%s1 + $0x3e8] sm:$0xff]
  %v523 = vld [vmem:[%s1 + $0x3f0] sm:$0xff]
  %v524 = vld [vmem:[%s1 + $0x3f8] sm:$0xff]
  %v525 = vld [vmem:[%s1 + $0x400] sm:$0xff]
  %v526 = vld [vmem:[%s1 + $0x408] sm:$0xff]
  %v527 = vld [vmem:[%s1 + $0x410] sm:$0xff]
  %v528 = vld [vmem:[%s1 + $0x418] sm:$0xff]
  %v529 = vld [vmem:[%s1 + $0x420] sm:$0xff]
  %v530 = vld [vmem:[%s1 + $0x428] sm:$0xff]
  %v531 = vld [vmem:[%s1 + $0x430] sm:$0xff]
  %v532 = vld [vmem:[%s1 + $0x438] sm:$0xff]
  %v533 = vld [vmem:[%s1 + $0x440] sm:$0xff]
  %v534 = vld [vmem:[%s1 + $0x448] sm:$0xff]
  %v535 = vld [vmem:[%s1 + $0x450] sm:$0xff]
  %v536 = vld [vmem:[%s1 + $0x458] sm:$0xff]
  %v537 = vld [vmem:[%s1 + $0x460] sm:$0xff]
  %v538 = vld [vmem:[%s1 + $0x468] sm:$0xff]
  %v539 = vld [vmem:[%s1 + $0x470] sm:$0xff]
  %v540 = vld [vmem:[%s1 + $0x478] sm:$0xff]
  %v541 = vld [vmem:[%s1 + $0x480] sm:$0xff]
  %v542 = vld [vmem:[%s1 + $0x488] sm:$0xff]
  %v543 = vld [vmem:[%s1 + $0x490] sm:$0xff]
  %v544 = vld [vmem:[%s1 + $0x498] sm:$0xff]
  %v545 = vld [vmem:[%s1 + $0x4a0] sm:$0xff]
  %v546 = vld [vmem:[%s1 + $0x4a8] sm:$0xff]
  %v547 = vld [vmem:[%s1 + $0x4b0] sm:$0xff]
  %v548 = vld [vmem:[%s1 + $0x4b8] sm:$0xff]
  %v549 = vld [vmem:[%s1 + $0x4c0] sm:$0xff]
  %v550 = vld [vmem:[%s1 + $0x4c8] sm:$0xff]
  %v551 = vld [vmem:[%s1 + $0x4d0] sm:$0xff]
  %v552 = vld [vmem:[%s1 + $0x4d8] sm:$0xff]
  %v553 = vld [vmem:[%s1 + $0x4e0] sm:$0xff]
  %v554 = vld [vmem:[%s1 + $0x4e8] sm:$0xff]
  %v555 = vld [vmem:[%s1 + $0x4f0] sm:$0xff]
  %v556 = vld [vmem:[%s1 + $0x4f8] sm:$0xff]
  %v557 = vld [vmem:[%s1 + $0x500] sm:$0xff]
  %v558 = vld [vmem:[%s1 + $0x508] sm:$0xff]
  %v559 = vld [vmem:[%s1 + $0x510] sm:$0xff]
  %v560 = vld [vmem:[%s1 + $0x518] sm:$0xff]
  %v561 = vld [vmem:[%s1 + $0x520] sm:$0xff]
  %v562 = vld [vmem:[%s1 + $0x528] sm:$0xff]
  %v563 = vld [vmem:[%s1 + $0x530] sm:$0xff]
  %v564 = vld [vmem:[%s1 + $0x538] sm:$0xff]
  %v565 = vld [vmem:[%s1 + $0x540] sm:$0xff]
  %v566 = vld [vmem:[%s1 + $0x548] sm:$0xff]
  %v567 = vld [vmem:[%s1 + $0x550] sm:$0xff]
  %v568 = vld [vmem:[%s1 + $0x558] sm:$0xff]
  %v569 = vld [vmem:[%s1 + $0x560] sm:$0xff]
  %v570 = vld [vmem:[%s1 + $0x568] sm:$0xff]
  %v571 = vld [vmem:[%s1 + $0x570] sm:$0xff]
  %v572 = vld [vmem:[%s1 + $0x578] sm:$0xff]
  %v573 = vld [vmem:[%s1 + $0x580] sm:$0xff]
  %v574 = vld [vmem:[%s1 + $0x588] sm:$0xff]
  %v575 = vld [vmem:[%s1 + $0x590] sm:$0xff]
  %v576 = vld [vmem:[%s1 + $0x598] sm:$0xff]
  %v577 = vld [vmem:[%s1 + $0x5a0] sm:$0xff]
  %v578 = vld [vmem:[%s1 + $0x5a8] sm:$0xff]
  %v579 = vld [vmem:[%s1 + $0x5b0] sm:$0xff]
  %v580 = vld [vmem:[%s1 + $0x5b8] sm:$0xff]
  %v581 = vld [vmem:[%s1 + $0x5c0] sm:$0xff]
  %v582 = vld [vmem:[%s1 + $0x5c8] sm:$0xff]
  %v583 = vld [vmem:[%s1 + $0x5d0] sm:$0xff]
  %v584 = vld [vmem:[%s1 + $0x5d8] sm:$0xff]
  %v585 = vld [vmem:[%s1 + $0x5e0] sm:$0xff]
  %v586 = vld [vmem:[%s1 + $0x5e8] sm:$0xff]
  %v587 = vld [vmem:[%s1 + $0x5f0] sm:$0xff]
  %v588 = vld [vmem:[%s1 + $0x5f8] sm:$0xff]
  %v589 = vld [vmem:[%s1 + $0x600] sm:$0xff]
  %v590 = vld [vmem:[%s1 + $0x608] sm:$0xff]
  %v591 = vld [vmem:[%s1 + $0x610] sm:$0xff]
  %v592 = vld [vmem:[%s1 + $0x618] sm:$0xff]
  %v593 = vld [vmem:[%s1 + $0x620] sm:$0xff]
  %v594 = vld [vmem:[%s1 + $0x628] sm:$0xff]
  %v595 = vld [vmem:[%s1 + $0x630] sm:$0xff]
  %v596 = vld [vmem:[%s1 + $0x638] sm:$0xff]
  %v597 = vld [vmem:[%s1 + $0x640] sm:$0xff]
  %v598 = vld [vmem:[%s1 + $0x648] sm:$0xff]
  %v599 = vld [vmem:[%s1 + $0x650] sm:$0xff]
  %v600 = vld [vmem:[%s1 + $0x658] sm:$0xff]
  %v601 = vld [vmem:[%s1 + $0x660] sm:$0xff]
  %v602 = vld [vmem:[%s1 + $0x668] sm:$0xff]
  %v603 = vld [vmem:[%s1 + $0x670] sm:$0xff]
  %v604 = vld [vmem:[%s1 + $0x678] sm:$0xff]
  %v605 = vld [vmem:[%s1 + $0x680] sm:$0xff]
  %v606 = vld [vmem:[%s1 + $0x688] sm:$0xff]
  %v607 = vld [vmem:[%s1 + $0x690] sm:$0xff]
  %v608 = vld [vmem:[%s1 + $0x698] sm:$0xff]
  %v609 = vld [vmem:[%s1 + $0x6a0] sm:$0xff]
  %v610 = vld [vmem:[%s1 + $0x6a8] sm:$0xff]
  %v611 = vld [vmem:[%s1 + $0x6b0] sm:$0xff]
  %v612 = vld [vmem:[%s1 + $0x6b8] sm:$0xff]
  %v613 = vld [vmem:[%s1 + $0x6c0] sm:$0xff]
  %v614 = vld [vmem:[%s1 + $0x6c8] sm:$0xff]
  %v615 = vld [vmem:[%s1 + $0x6d0] sm:$0xff]
  %v616 = vld [vmem:[%s1 + $0x6d8] sm:$0xff]
  %v617 = vld [vmem:[%s1 + $0x6e0] sm:$0xff]
  %v618 = vld [vmem:[%s1 + $0x6e8] sm:$0xff]
  %v619 = vld [vmem:[%s1 + $0x6f0] sm:$0xff]
  %v620 = vld [vmem:[%s1 + $0x6f8] sm:$0xff]
  %v621 = vld [vmem:[%s1 + $0x700] sm:$0xff]
  %v622 = vld [vmem:[%s1 + $0x708] sm:$0xff]
  %v623 = vld [vmem:[%s1 + $0x710] sm:$0xff]
  %v624 = vld [vmem:[%s1 + $0x718] sm:$0xff]
  %v625 = vld [vmem:[%s1 + $0x720] sm:$0xff]
  %v626 = vld [vmem:[%s1 + $0x728] sm:$0xff]
  %v627 = vld [vmem:[%s1 + $0x730] sm:$0xff]
  %v628 = vld [vmem:[%s1 + $0x738] sm:$0xff]
  %v629 = vld [vmem:[%s1 + $0x740] sm:$0xff]
  %v630 = vld [vmem:[%s1 + $0x748] sm:$0xff]
  %v631 = vld [vmem:[%s1 + $0x750] sm:$0xff]
  %v632 = vld [vmem:[%s1 + $0x758] sm:$0xff]
  %v633 = vld [vmem:[%s1 + $0x760] sm:$0xff]
  %v634 = vld [vmem:[%s1 + $0x768] sm:$0xff]
  %v635 = vld [vmem:[%s1 + $0x770] sm:$0xff]
  %v636 = vld [vmem:[%s1 + $0x778] sm:$0xff]
  %v637 = vld [vmem:[%s1 + $0x780] sm:$0xff]
  %v638 = vld [vmem:[%s1 + $0x788] sm:$0xff]
  %v639 = vld [vmem:[%s1 + $0x790] sm:$0xff]
  %v640 = vld [vmem:[%s1 + $0x798] sm:$0xff]
  %v641 = vld [vmem:[%s1 + $0x7a0] sm:$0xff]
  %v642 = vld [vmem:[%s1 + $0x7a8] sm:$0xff]
  %v643 = vld [vmem:[%s1 + $0x7b0] sm:$0xff]
  %v644 = vld [vmem:[%s1 + $0x7b8] sm:$0xff]
  %v645 = vld [vmem:[%s1 + $0x7c0] sm:$0xff]
  %v646 = vld [vmem:[%s1 + $0x7c8] sm:$0xff]
  %v647 = vld [vmem:[%s1 + $0x7d0] sm:$0xff]
  %v648 = vld [vmem:[%s1 + $0x7d8] sm:$0xff]
  %v649 = vld [vmem:[%s1 + $0x7e0] sm:$0xff]
  %v650 = vld [vmem:[%s1 + $0x7e8] sm:$0xff]
  %v651 = vld [vmem:[%s1 + $0x7f0] sm:$0xff]
  %v652 = vld [vmem:[%s1 + $0x7f8] sm:$0xff]
  %v653 = vld [vmem:[%s1 + $0x800] sm:$0xff]
  %v654 = vld [vmem:[%s1 + $0x808] sm:$0xff]
  %v655 = vld [vmem:[%s1 + $0x810] sm:$0xff]
  %v656 = vld [vmem:[%s1 + $0x818] sm:$0xff]
  %v657 = vld [vmem:[%s1 + $0x820] sm:$0xff]
  %v658 = vld [vmem:[%s1 + $0x828] sm:$0xff]
  %v659 = vld [vmem:[%s1 + $0x830] sm:$0xff]
  %v660 = vld [vmem:[%s1 + $0x838] sm:$0xff]
  %v661 = vld [vmem:[%s1 + $0x840] sm:$0xff]
  %v662 = vld [vmem:[%s1 + $0x848] sm:$0xff]
  %v663 = vld [vmem:[%s1 + $0x850] sm:$0xff]
  %v664 = vld [vmem:[%s1 + $0x858] sm:$0xff]
  %v665 = vld [vmem:[%s1 + $0x860] sm:$0xff]
  %v666 = vld [vmem:[%s1 + $0x868] sm:$0xff]
  %v667 = vld [vmem:[%s1 + $0x870] sm:$0xff]
  %v668 = vld [vmem:[%s1 + $0x878] sm:$0xff]
  %v669 = vld [vmem:[%s1 + $0x880] sm:$0xff]
  %v670 = vld [vmem:[%s1 + $0x888] sm:$0xff]
  %v671 = vld [vmem:[%s1 + $0x890] sm:$0xff]
  %v672 = vld [vmem:[%s1 + $0x898] sm:$0xff]
  %v673 = vld [vmem:[%s1 + $0x8a0] sm:$0xff]
  %v674 = vld [vmem:[%s1 + $0x8a8] sm:$0xff]
  %v675 = vld [vmem:[%s1 + $0x8b0] sm:$0xff]
  %v676 = vld [vmem:[%s1 + $0x8b8] sm:$0xff]
  %v677 = vld [vmem:[%s1 + $0x8c0] sm:$0xff]
  %v678 = vld [vmem:[%s1 + $0x8c8] sm:$0xff]
  %v679 = vld [vmem:[%s1 + $0x8d0] sm:$0xff]
  %v680 = vld [vmem:[%s1 + $0x8d8] sm:$0xff]
  %v681 = vld [vmem:[%s1 + $0x8e0] sm:$0xff]
  %v682 = vld [vmem:[%s1 + $0x8e8] sm:$0xff]
  %v683 = vld [vmem:[%s1 + $0x8f0] sm:$0xff]
  %v684 = vld [vmem:[%s1 + $0x8f8] sm:$0xff]
  %v685 = vld [vmem:[%s1 + $0x900] sm:$0xff]
  %v686 = vld [vmem:[%s1 + $0x908] sm:$0xff]
  %v687 = vld [vmem:[%s1 + $0x910] sm:$0xff]
  %v688 = vld [vmem:[%s1 + $0x918] sm:$0xff]
  %v689 = vld [vmem:[%s1 + $0x920] sm:$0xff]
  %v690 = vld [vmem:[%s1 + $0x928] sm:$0xff]
  %v691 = vld [vmem:[%s1 + $0x930] sm:$0xff]
  %v692 = vld [vmem:[%s1 + $0x938] sm:$0xff]
  %v693 = vld [vmem:[%s1 + $0x940] sm:$0xff]
  %v694 = vld [vmem:[%s1 + $0x948] sm:$0xff]
  %v695 = vld [vmem:[%s1 + $0x950] sm:$0xff]
  %v696 = vld [vmem:[%s1 + $0x958] sm:$0xff]
  %698 = vset.pattern.permute.xlu0 0
  %699 = vperm.xlu0 %698, %v93
  %v700 = vpop.permute.xlu0 %699
  %703 = vset.pattern.permute.xlu0 0
  %704 = vperm.xlu0 %703, %v94
  %v705 = vpop.permute.xlu0 %704
  %708 = vset.pattern.permute.xlu0 0
  %709 = vperm.xlu0 %708, %v95
  %v710 = vpop.permute.xlu0 %709
  %713 = vset.pattern.permute.xlu0 0
  %714 = vperm.xlu0 %713, %v96
  %v715 = vpop.permute.xlu0 %714
  %718 = vset.pattern.permute.xlu0 0
  %719 = vperm.xlu0 %718, %v97
  %v720 = vpop.permute.xlu0 %719
  %723 = vset.pattern.permute.xlu0 0
  %724 = vperm.xlu0 %723, %v98
  %v725 = vpop.permute.xlu0 %724
  %728 = vset.pattern.permute.xlu0 0
  %729 = vperm.xlu0 %728, %v99
  %v730 = vpop.permute.xlu0 %729
  %733 = vset.pattern.permute.xlu0 0
  %734 = vperm.xlu0 %733, %v100
  %v735 = vpop.permute.xlu0 %734
  %738 = vset.pattern.permute.xlu0 0
  %739 = vperm.xlu0 %738, %v101
  %v740 = vpop.permute.xlu0 %739
  %743 = vset.pattern.permute.xlu0 0
  %744 = vperm.xlu0 %743, %v102
  %v745 = vpop.permute.xlu0 %744
  %748 = vset.pattern.permute.xlu0 0
  %749 = vperm.xlu0 %748, %v103
  %v750 = vpop.permute.xlu0 %749
  %753 = vset.pattern.permute.xlu0 0
  %754 = vperm.xlu0 %753, %v104
  %v755 = vpop.permute.xlu0 %754
  %758 = vset.pattern.permute.xlu0 0
  %759 = vperm.xlu0 %758, %v105
  %v760 = vpop.permute.xlu0 %759
  %763 = vset.pattern.permute.xlu0 0
  %764 = vperm.xlu0 %763, %v106
  %v765 = vpop.permute.xlu0 %764
  %768 = vset.pattern.permute.xlu0 0
  %769 = vperm.xlu0 %768, %v107
  %v770 = vpop.permute.xlu0 %769
  %773 = vset.pattern.permute.xlu0 0
  %774 = vperm.xlu0 %773, %v108
  %v775 = vpop.permute.xlu0 %774
  %778 = vset.pattern.permute.xlu0 0
  %779 = vperm.xlu0 %778, %v125
  %v780 = vpop.permute.xlu0 %779
  %783 = vset.pattern.permute.xlu0 0
  %784 = vperm.xlu0 %783, %v126
  %v785 = vpop.permute.xlu0 %784
  %788 = vset.pattern.permute.xlu0 0
  %789 = vperm.xlu0 %788, %v127
  %v790 = vpop.permute.xlu0 %789
  %793 = vset.pattern.permute.xlu0 0
  %794 = vperm.xlu0 %793, %v128
  %v795 = vpop.permute.xlu0 %794
  %798 = vset.pattern.permute.xlu0 0
  %799 = vperm.xlu0 %798, %v129
  %v800 = vpop.permute.xlu0 %799
  %803 = vset.pattern.permute.xlu0 0
  %804 = vperm.xlu0 %803, %v130
  %v805 = vpop.permute.xlu0 %804
  %808 = vset.pattern.permute.xlu0 0
  %809 = vperm.xlu0 %808, %v131
  %v810 = vpop.permute.xlu0 %809
  %813 = vset.pattern.permute.xlu0 0
  %814 = vperm.xlu0 %813, %v132
  %v815 = vpop.permute.xlu0 %814
  %818 = vset.pattern.permute.xlu0 0
  %819 = vperm.xlu0 %818, %v133
  %v820 = vpop.permute.xlu0 %819
  %823 = vset.pattern.permute.xlu0 0
  %824 = vperm.xlu0 %823, %v134
  %v825 = vpop.permute.xlu0 %824
  %828 = vset.pattern.permute.xlu0 0
  %829 = vperm.xlu0 %828, %v135
  %v830 = vpop.permute.xlu0 %829
  %833 = vset.pattern.permute.xlu0 0
  %834 = vperm.xlu0 %833, %v136
  %v835 = vpop.permute.xlu0 %834
  %838 = vset.pattern.permute.xlu0 0
  %839 = vperm.xlu0 %838, %v137
  %v840 = vpop.permute.xlu0 %839
  %843 = vset.pattern.permute.xlu0 0
  %844 = vperm.xlu0 %843, %v138
  %v845 = vpop.permute.xlu0 %844
  %848 = vset.pattern.permute.xlu0 0
  %849 = vperm.xlu0 %848, %v139
  %v850 = vpop.permute.xlu0 %849
  %853 = vset.pattern.permute.xlu0 0
  %854 = vperm.xlu0 %853, %v140
  %v855 = vpop.permute.xlu0 %854
  %858 = vset.pattern.permute.xlu0 0
  %859 = vperm.xlu0 %858, %v157
  %v860 = vpop.permute.xlu0 %859
  %863 = vset.pattern.permute.xlu0 0
  %864 = vperm.xlu0 %863, %v158
  %v865 = vpop.permute.xlu0 %864
  %868 = vset.pattern.permute.xlu0 0
  %869 = vperm.xlu0 %868, %v159
  %v870 = vpop.permute.xlu0 %869
  %873 = vset.pattern.permute.xlu0 0
  %874 = vperm.xlu0 %873, %v160
  %v875 = vpop.permute.xlu0 %874
  %878 = vset.pattern.permute.xlu0 0
  %879 = vperm.xlu0 %878, %v161
  %v880 = vpop.permute.xlu0 %879
  %883 = vset.pattern.permute.xlu0 0
  %884 = vperm.xlu0 %883, %v162
  %v885 = vpop.permute.xlu0 %884
  %888 = vset.pattern.permute.xlu0 0
  %889 = vperm.xlu0 %888, %v163
  %v890 = vpop.permute.xlu0 %889
  %893 = vset.pattern.permute.xlu0 0
  %894 = vperm.xlu0 %893, %v164
  %v895 = vpop.permute.xlu0 %894
  %898 = vset.pattern.permute.xlu0 0
  %899 = vperm.xlu0 %898, %v165
  %v900 = vpop.permute.xlu0 %899
  %903 = vset.pattern.permute.xlu0 0
  %904 = vperm.xlu0 %903, %v166
  %v905 = vpop.permute.xlu0 %904
  %908 = vset.pattern.permute.xlu0 0
  %909 = vperm.xlu0 %908, %v167
  %v910 = vpop.permute.xlu0 %909
  %913 = vset.pattern.permute.xlu0 0
  %914 = vperm.xlu0 %913, %v168
  %v915 = vpop.permute.xlu0 %914
  %918 = vset.pattern.permute.xlu0 0
  %919 = vperm.xlu0 %918, %v169
  %v920 = vpop.permute.xlu0 %919
  %923 = vset.pattern.permute.xlu0 0
  %924 = vperm.xlu0 %923, %v170
  %v925 = vpop.permute.xlu0 %924
  %928 = vset.pattern.permute.xlu0 0
  %929 = vperm.xlu0 %928, %v171
  %v930 = vpop.permute.xlu0 %929
  %933 = vset.pattern.permute.xlu0 0
  %934 = vperm.xlu0 %933, %v172
  %v935 = vpop.permute.xlu0 %934
  %938 = vset.pattern.permute.xlu0 0
  %939 = vperm.xlu0 %938, %v189
  %v940 = vpop.permute.xlu0 %939
  %943 = vset.pattern.permute.xlu0 0
  %944 = vperm.xlu0 %943, %v190
  %v945 = vpop.permute.xlu0 %944
  %948 = vset.pattern.permute.xlu0 0
  %949 = vperm.xlu0 %948, %v191
  %v950 = vpop.permute.xlu0 %949
  %953 = vset.pattern.permute.xlu0 0
  %954 = vperm.xlu0 %953, %v192
  %v955 = vpop.permute.xlu0 %954
  %958 = vset.pattern.permute.xlu0 0
  %959 = vperm.xlu0 %958, %v193
  %v960 = vpop.permute.xlu0 %959
  %963 = vset.pattern.permute.xlu0 0
  %964 = vperm.xlu0 %963, %v194
  %v965 = vpop.permute.xlu0 %964
  %968 = vset.pattern.permute.xlu0 0
  %969 = vperm.xlu0 %968, %v195
  %v970 = vpop.permute.xlu0 %969
  %973 = vset.pattern.permute.xlu0 0
  %974 = vperm.xlu0 %973, %v196
  %v975 = vpop.permute.xlu0 %974
  %978 = vset.pattern.permute.xlu0 0
  %979 = vperm.xlu0 %978, %v197
  %v980 = vpop.permute.xlu0 %979
  %983 = vset.pattern.permute.xlu0 0
  %984 = vperm.xlu0 %983, %v198
  %v985 = vpop.permute.xlu0 %984
  %988 = vset.pattern.permute.xlu0 0
  %989 = vperm.xlu0 %988, %v199
  %v990 = vpop.permute.xlu0 %989
  %993 = vset.pattern.permute.xlu0 0
  %994 = vperm.xlu0 %993, %v200
  %v995 = vpop.permute.xlu0 %994
  %998 = vset.pattern.permute.xlu0 0
  %999 = vperm.xlu0 %998, %v201
  %v1000 = vpop.permute.xlu0 %999
  %1003 = vset.pattern.permute.xlu0 0
  %1004 = vperm.xlu0 %1003, %v202
  %v1005 = vpop.permute.xlu0 %1004
  %1008 = vset.pattern.permute.xlu0 0
  %1009 = vperm.xlu0 %1008, %v203
  %v1010 = vpop.permute.xlu0 %1009
  %1013 = vset.pattern.permute.xlu0 0
  %1014 = vperm.xlu0 %1013, %v204
  %v1015 = vpop.permute.xlu0 %1014
  %1018 = vset.pattern.permute.xlu0 0
  %1019 = vperm.xlu0 %1018, %v221
  %v1020 = vpop.permute.xlu0 %1019
  %1023 = vset.pattern.permute.xlu0 0
  %1024 = vperm.xlu0 %1023, %v222
  %v1025 = vpop.permute.xlu0 %1024
  %1028 = vset.pattern.permute.xlu0 0
  %1029 = vperm.xlu0 %1028, %v223
  %v1030 = vpop.permute.xlu0 %1029
  %1033 = vset.pattern.permute.xlu0 0
  %1034 = vperm.xlu0 %1033, %v224
  %v1035 = vpop.permute.xlu0 %1034
  %1038 = vset.pattern.permute.xlu0 0
  %1039 = vperm.xlu0 %1038, %v225
  %v1040 = vpop.permute.xlu0 %1039
  %1043 = vset.pattern.permute.xlu0 0
  %1044 = vperm.xlu0 %1043, %v226
  %v1045 = vpop.permute.xlu0 %1044
  %1048 = vset.pattern.permute.xlu0 0
  %1049 = vperm.xlu0 %1048, %v227
  %v1050 = vpop.permute.xlu0 %1049
  %1053 = vset.pattern.permute.xlu0 0
  %1054 = vperm.xlu0 %1053, %v228
  %v1055 = vpop.permute.xlu0 %1054
  %1058 = vset.pattern.permute.xlu0 0
  %1059 = vperm.xlu0 %1058, %v229
  %v1060 = vpop.permute.xlu0 %1059
  %1063 = vset.pattern.permute.xlu0 0
  %1064 = vperm.xlu0 %1063, %v230
  %v1065 = vpop.permute.xlu0 %1064
  %1068 = vset.pattern.permute.xlu0 0
  %1069 = vperm.xlu0 %1068, %v231
  %v1070 = vpop.permute.xlu0 %1069
  %1073 = vset.pattern.permute.xlu0 0
  %1074 = vperm.xlu0 %1073, %v232
  %v1075 = vpop.permute.xlu0 %1074
  %1078 = vset.pattern.permute.xlu0 0
  %1079 = vperm.xlu0 %1078, %v233
  %v1080 = vpop.permute.xlu0 %1079
  %1083 = vset.pattern.permute.xlu0 0
  %1084 = vperm.xlu0 %1083, %v234
  %v1085 = vpop.permute.xlu0 %1084
  %1088 = vset.pattern.permute.xlu0 0
  %1089 = vperm.xlu0 %1088, %v235
  %v1090 = vpop.permute.xlu0 %1089
  %1093 = vset.pattern.permute.xlu0 0
  %1094 = vperm.xlu0 %1093, %v236
  %v1095 = vpop.permute.xlu0 %1094
  %1098 = vset.pattern.permute.xlu0 0
  %1099 = vperm.xlu0 %1098, %v253
  %v1100 = vpop.permute.xlu0 %1099
  %1103 = vset.pattern.permute.xlu0 0
  %1104 = vperm.xlu0 %1103, %v254
  %v1105 = vpop.permute.xlu0 %1104
  %1108 = vset.pattern.permute.xlu0 0
  %1109 = vperm.xlu0 %1108, %v255
  %v1110 = vpop.permute.xlu0 %1109
  %1113 = vset.pattern.permute.xlu0 0
  %1114 = vperm.xlu0 %1113, %v256
  %v1115 = vpop.permute.xlu0 %1114
  %1118 = vset.pattern.permute.xlu0 0
  %1119 = vperm.xlu0 %1118, %v257
  %v1120 = vpop.permute.xlu0 %1119
  %1123 = vset.pattern.permute.xlu0 0
  %1124 = vperm.xlu0 %1123, %v258
  %v1125 = vpop.permute.xlu0 %1124
  %1128 = vset.pattern.permute.xlu0 0
  %1129 = vperm.xlu0 %1128, %v259
  %v1130 = vpop.permute.xlu0 %1129
  %1133 = vset.pattern.permute.xlu0 0
  %1134 = vperm.xlu0 %1133, %v260
  %v1135 = vpop.permute.xlu0 %1134
  %1138 = vset.pattern.permute.xlu0 0
  %1139 = vperm.xlu0 %1138, %v261
  %v1140 = vpop.permute.xlu0 %1139
  %1143 = vset.pattern.permute.xlu0 0
  %1144 = vperm.xlu0 %1143, %v262
  %v1145 = vpop.permute.xlu0 %1144
  %1148 = vset.pattern.permute.xlu0 0
  %1149 = vperm.xlu0 %1148, %v263
  %v1150 = vpop.permute.xlu0 %1149
  %1153 = vset.pattern.permute.xlu0 0
  %1154 = vperm.xlu0 %1153, %v264
  %v1155 = vpop.permute.xlu0 %1154
  %1158 = vset.pattern.permute.xlu0 0
  %1159 = vperm.xlu0 %1158, %v265
  %v1160 = vpop.permute.xlu0 %1159
  %1163 = vset.pattern.permute.xlu0 0
  %1164 = vperm.xlu0 %1163, %v266
  %v1165 = vpop.permute.xlu0 %1164
  %1168 = vset.pattern.permute.xlu0 0
  %1169 = vperm.xlu0 %1168, %v267
  %v1170 = vpop.permute.xlu0 %1169
  %1173 = vset.pattern.permute.xlu0 0
  %1174 = vperm.xlu0 %1173, %v268
  %v1175 = vpop.permute.xlu0 %1174
  %1178 = vset.pattern.permute.xlu0 0
  %1179 = vperm.xlu0 %1178, %v285
  %v1180 = vpop.permute.xlu0 %1179
  %1183 = vset.pattern.permute.xlu0 0
  %1184 = vperm.xlu0 %1183, %v286
  %v1185 = vpop.permute.xlu0 %1184
  %1188 = vset.pattern.permute.xlu0 0
  %1189 = vperm.xlu0 %1188, %v287
  %v1190 = vpop.permute.xlu0 %1189
  %1193 = vset.pattern.permute.xlu0 0
  %1194 = vperm.xlu0 %1193, %v288
  %v1195 = vpop.permute.xlu0 %1194
  %1198 = vset.pattern.permute.xlu0 0
  %1199 = vperm.xlu0 %1198, %v289
  %v1200 = vpop.permute.xlu0 %1199
  %1203 = vset.pattern.permute.xlu0 0
  %1204 = vperm.xlu0 %1203, %v290
  %v1205 = vpop.permute.xlu0 %1204
  %1208 = vset.pattern.permute.xlu0 0
  %1209 = vperm.xlu0 %1208, %v291
  %v1210 = vpop.permute.xlu0 %1209
  %1213 = vset.pattern.permute.xlu0 0
  %1214 = vperm.xlu0 %1213, %v292
  %v1215 = vpop.permute.xlu0 %1214
  %1218 = vset.pattern.permute.xlu0 0
  %1219 = vperm.xlu0 %1218, %v293
  %v1220 = vpop.permute.xlu0 %1219
  %1223 = vset.pattern.permute.xlu0 0
  %1224 = vperm.xlu0 %1223, %v294
  %v1225 = vpop.permute.xlu0 %1224
  %1228 = vset.pattern.permute.xlu0 0
  %1229 = vperm.xlu0 %1228, %v295
  %v1230 = vpop.permute.xlu0 %1229
  %1233 = vset.pattern.permute.xlu0 0
  %1234 = vperm.xlu0 %1233, %v296
  %v1235 = vpop.permute.xlu0 %1234
  %1238 = vset.pattern.permute.xlu0 0
  %1239 = vperm.xlu0 %1238, %v297
  %v1240 = vpop.permute.xlu0 %1239
  %1243 = vset.pattern.permute.xlu0 0
  %1244 = vperm.xlu0 %1243, %v298
  %v1245 = vpop.permute.xlu0 %1244
  %1248 = vset.pattern.permute.xlu0 0
  %1249 = vperm.xlu0 %1248, %v299
  %v1250 = vpop.permute.xlu0 %1249
  %1253 = vset.pattern.permute.xlu0 0
  %1254 = vperm.xlu0 %1253, %v300
  %v1255 = vpop.permute.xlu0 %1254
  %1258 = vset.pattern.permute.xlu0 0
  %1259 = vperm.xlu0 %1258, %v317
  %v1260 = vpop.permute.xlu0 %1259
  %1263 = vset.pattern.permute.xlu0 0
  %1264 = vperm.xlu0 %1263, %v318
  %v1265 = vpop.permute.xlu0 %1264
  %1268 = vset.pattern.permute.xlu0 0
  %1269 = vperm.xlu0 %1268, %v319
  %v1270 = vpop.permute.xlu0 %1269
  %1273 = vset.pattern.permute.xlu0 0
  %1274 = vperm.xlu0 %1273, %v320
  %v1275 = vpop.permute.xlu0 %1274
  %1278 = vset.pattern.permute.xlu0 0
  %1279 = vperm.xlu0 %1278, %v321
  %v1280 = vpop.permute.xlu0 %1279
  %1283 = vset.pattern.permute.xlu0 0
  %1284 = vperm.xlu0 %1283, %v322
  %v1285 = vpop.permute.xlu0 %1284
  %1288 = vset.pattern.permute.xlu0 0
  %1289 = vperm.xlu0 %1288, %v323
  %v1290 = vpop.permute.xlu0 %1289
  %1293 = vset.pattern.permute.xlu0 0
  %1294 = vperm.xlu0 %1293, %v324
  %v1295 = vpop.permute.xlu0 %1294
  %1298 = vset.pattern.permute.xlu0 0
  %1299 = vperm.xlu0 %1298, %v325
  %v1300 = vpop.permute.xlu0 %1299
  %1303 = vset.pattern.permute.xlu0 0
  %1304 = vperm.xlu0 %1303, %v326
  %v1305 = vpop.permute.xlu0 %1304
  %1308 = vset.pattern.permute.xlu0 0
  %1309 = vperm.xlu0 %1308, %v327
  %v1310 = vpop.permute.xlu0 %1309
  %1313 = vset.pattern.permute.xlu0 0
  %1314 = vperm.xlu0 %1313, %v328
  %v1315 = vpop.permute.xlu0 %1314
  %1318 = vset.pattern.permute.xlu0 0
  %1319 = vperm.xlu0 %1318, %v329
  %v1320 = vpop.permute.xlu0 %1319
  %1323 = vset.pattern.permute.xlu0 0
  %1324 = vperm.xlu0 %1323, %v330
  %v1325 = vpop.permute.xlu0 %1324
  %1328 = vset.pattern.permute.xlu0 0
  %1329 = vperm.xlu0 %1328, %v331
  %v1330 = vpop.permute.xlu0 %1329
  %1333 = vset.pattern.permute.xlu0 0
  %1334 = vperm.xlu0 %1333, %v332
  %v1335 = vpop.permute.xlu0 %1334
  %1338 = vset.pattern.permute.xlu0 0
  %1339 = vperm.xlu0 %1338, %v349
  %v1340 = vpop.permute.xlu0 %1339
  %1343 = vset.pattern.permute.xlu0 0
  %1344 = vperm.xlu0 %1343, %v350
  %v1345 = vpop.permute.xlu0 %1344
  %1348 = vset.pattern.permute.xlu0 0
  %1349 = vperm.xlu0 %1348, %v351
  %v1350 = vpop.permute.xlu0 %1349
  %1353 = vset.pattern.permute.xlu0 0
  %1354 = vperm.xlu0 %1353, %v352
  %v1355 = vpop.permute.xlu0 %1354
  %1358 = vset.pattern.permute.xlu0 0
  %1359 = vperm.xlu0 %1358, %v353
  %v1360 = vpop.permute.xlu0 %1359
  %1363 = vset.pattern.permute.xlu0 0
  %1364 = vperm.xlu0 %1363, %v354
  %v1365 = vpop.permute.xlu0 %1364
  %1368 = vset.pattern.permute.xlu0 0
  %1369 = vperm.xlu0 %1368, %v355
  %v1370 = vpop.permute.xlu0 %1369
  %1373 = vset.pattern.permute.xlu0 0
  %1374 = vperm.xlu0 %1373, %v356
  %v1375 = vpop.permute.xlu0 %1374
  %1378 = vset.pattern.permute.xlu0 0
  %1379 = vperm.xlu0 %1378, %v357
  %v1380 = vpop.permute.xlu0 %1379
  %1383 = vset.pattern.permute.xlu0 0
  %1384 = vperm.xlu0 %1383, %v358
  %v1385 = vpop.permute.xlu0 %1384
  %1388 = vset.pattern.permute.xlu0 0
  %1389 = vperm.xlu0 %1388, %v359
  %v1390 = vpop.permute.xlu0 %1389
  %1393 = vset.pattern.permute.xlu0 0
  %1394 = vperm.xlu0 %1393, %v360
  %v1395 = vpop.permute.xlu0 %1394
  %1398 = vset.pattern.permute.xlu0 0
  %1399 = vperm.xlu0 %1398, %v361
  %v1400 = vpop.permute.xlu0 %1399
  %1403 = vset.pattern.permute.xlu0 0
  %1404 = vperm.xlu0 %1403, %v362
  %v1405 = vpop.permute.xlu0 %1404
  %1408 = vset.pattern.permute.xlu0 0
  %1409 = vperm.xlu0 %1408, %v363
  %v1410 = vpop.permute.xlu0 %1409
  %1413 = vset.pattern.permute.xlu0 0
  %1414 = vperm.xlu0 %1413, %v364
  %v1415 = vpop.permute.xlu0 %1414
  %1418 = vset.pattern.permute.xlu0 0
  %1419 = vperm.xlu0 %1418, %v381
  %v1420 = vpop.permute.xlu0 %1419
  %1423 = vset.pattern.permute.xlu0 0
  %1424 = vperm.xlu0 %1423, %v382
  %v1425 = vpop.permute.xlu0 %1424
  %1428 = vset.pattern.permute.xlu0 0
  %1429 = vperm.xlu0 %1428, %v383
  %v1430 = vpop.permute.xlu0 %1429
  %1433 = vset.pattern.permute.xlu0 0
  %1434 = vperm.xlu0 %1433, %v384
  %v1435 = vpop.permute.xlu0 %1434
  %1438 = vset.pattern.permute.xlu0 0
  %1439 = vperm.xlu0 %1438, %v385
  %v1440 = vpop.permute.xlu0 %1439
  %1443 = vset.pattern.permute.xlu0 0
  %1444 = vperm.xlu0 %1443, %v386
  %v1445 = vpop.permute.xlu0 %1444
  %v1447 = vmul.f32 %v700, %v397
  %v1448 = vmul.f32 %v700, %v398
  %v1449 = vmul.f32 %v705, %v399
  %v1450 = vmul.f32 %v705, %v400
  %v1451 = vmul.f32 %v710, %v401
  %v1452 = vmul.f32 %v710, %v402
  %v1453 = vmul.f32 %v715, %v403
  %v1454 = vmul.f32 %v715, %v404
  %v1455 = vmul.f32 %v720, %v405
  %v1456 = vmul.f32 %v720, %v406
  %v1457 = vmul.f32 %v725, %v407
  %v1458 = vmul.f32 %v725, %v408
  %v1459 = vmul.f32 %v730, %v409
  %v1460 = vmul.f32 %v730, %v410
  %v1461 = vmul.f32 %v735, %v411
  %v1462 = vmul.f32 %v735, %v412
  %v1463 = vmul.f32 %v740, %v413
  %v1464 = vmul.f32 %v740, %v414
  %v1465 = vmul.f32 %v745, %v415
  %v1466 = vmul.f32 %v745, %v416
  %v1467 = vmul.f32 %v750, %v417
  %v1468 = vmul.f32 %v750, %v418
  %v1469 = vmul.f32 %v755, %v419
  %v1470 = vmul.f32 %v755, %v420
  %v1471 = vmul.f32 %v760, %v421
  %v1472 = vmul.f32 %v760, %v422
  %v1473 = vmul.f32 %v765, %v423
  %v1474 = vmul.f32 %v765, %v424
  %v1475 = vmul.f32 %v770, %v425
  %v1476 = vmul.f32 %v770, %v426
  %v1477 = vmul.f32 %v775, %v427
  %v1478 = vmul.f32 %v775, %v428
  %v1479 = vmul.f32 %v780, %v429
  %v1480 = vmul.f32 %v780, %v430
  %v1481 = vmul.f32 %v785, %v431
  %v1482 = vmul.f32 %v785, %v432
  %v1483 = vmul.f32 %v790, %v433
  %v1484 = vmul.f32 %v790, %v434
  %v1485 = vmul.f32 %v795, %v435
  %v1486 = vmul.f32 %v795, %v436
  %v1487 = vmul.f32 %v800, %v437
  %v1488 = vmul.f32 %v800, %v438
  %v1489 = vmul.f32 %v805, %v439
  %v1490 = vmul.f32 %v805, %v440
  %v1491 = vmul.f32 %v810, %v441
  %v1492 = vmul.f32 %v810, %v442
  %v1493 = vmul.f32 %v815, %v443
  %v1494 = vmul.f32 %v815, %v444
  %v1495 = vmul.f32 %v820, %v445
  %v1496 = vmul.f32 %v820, %v446
  %v1497 = vmul.f32 %v825, %v447
  %v1498 = vmul.f32 %v825, %v448
  %v1499 = vmul.f32 %v830, %v449
  %v1500 = vmul.f32 %v830, %v450
  %v1501 = vmul.f32 %v835, %v451
  %v1502 = vmul.f32 %v835, %v452
  %v1503 = vmul.f32 %v840, %v453
  %v1504 = vmul.f32 %v840, %v454
  %v1505 = vmul.f32 %v845, %v455
  %v1506 = vmul.f32 %v845, %v456
  %v1507 = vmul.f32 %v850, %v457
  %v1508 = vmul.f32 %v850, %v458
  %v1509 = vmul.f32 %v855, %v459
  %v1510 = vmul.f32 %v855, %v460
  %v1511 = vmul.f32 %v860, %v461
  %v1512 = vmul.f32 %v860, %v462
  %v1513 = vmul.f32 %v865, %v463
  %v1514 = vmul.f32 %v865, %v464
  %v1515 = vmul.f32 %v870, %v465
  %v1516 = vmul.f32 %v870, %v466
  %v1517 = vmul.f32 %v875, %v467
  %v1518 = vmul.f32 %v875, %v468
  %v1519 = vmul.f32 %v880, %v469
  %v1520 = vmul.f32 %v880, %v470
  %v1521 = vmul.f32 %v885, %v471
  %v1522 = vmul.f32 %v885, %v472
  %v1523 = vmul.f32 %v890, %v473
  %v1524 = vmul.f32 %v890, %v474
  %v1525 = vmul.f32 %v895, %v475
  %v1526 = vmul.f32 %v895, %v476
  %v1527 = vmul.f32 %v900, %v477
  %v1528 = vmul.f32 %v900, %v478
  %v1529 = vmul.f32 %v905, %v479
  %v1530 = vmul.f32 %v905, %v480
  %v1531 = vmul.f32 %v910, %v481
  %v1532 = vmul.f32 %v910, %v482
  %v1533 = vmul.f32 %v915, %v483
  %v1534 = vmul.f32 %v915, %v484
  %v1535 = vmul.f32 %v920, %v485
  %v1536 = vmul.f32 %v920, %v486
  %v1537 = vmul.f32 %v925, %v487
  %v1538 = vmul.f32 %v925, %v488
  %v1539 = vmul.f32 %v930, %v489
  %v1540 = vmul.f32 %v930, %v490
  %v1541 = vmul.f32 %v935, %v491
  %v1542 = vmul.f32 %v935, %v492
  %v1543 = vmul.f32 %v940, %v493
  %v1544 = vmul.f32 %v940, %v494
  %v1545 = vmul.f32 %v945, %v495
  %v1546 = vmul.f32 %v945, %v496
  %v1547 = vmul.f32 %v950, %v497
  %v1548 = vmul.f32 %v950, %v498
  %v1549 = vmul.f32 %v955, %v499
  %v1550 = vmul.f32 %v955, %v500
  %v1551 = vmul.f32 %v960, %v501
  %v1552 = vmul.f32 %v960, %v502
  %v1553 = vmul.f32 %v965, %v503
  %v1554 = vmul.f32 %v965, %v504
  %v1555 = vmul.f32 %v970, %v505
  %v1556 = vmul.f32 %v970, %v506
  %v1557 = vmul.f32 %v975, %v507
  %v1558 = vmul.f32 %v975, %v508
  %v1559 = vmul.f32 %v980, %v509
  %v1560 = vmul.f32 %v980, %v510
  %v1561 = vmul.f32 %v985, %v511
  %v1562 = vmul.f32 %v985, %v512
  %v1563 = vmul.f32 %v990, %v513
  %v1564 = vmul.f32 %v990, %v514
  %v1565 = vmul.f32 %v995, %v515
  %v1566 = vmul.f32 %v995, %v516
  %v1567 = vmul.f32 %v1000, %v517
  %v1568 = vmul.f32 %v1000, %v518
  %v1569 = vmul.f32 %v1005, %v519
  %v1570 = vmul.f32 %v1005, %v520
  %v1571 = vmul.f32 %v1010, %v521
  %v1572 = vmul.f32 %v1010, %v522
  %v1573 = vmul.f32 %v1015, %v523
  %v1574 = vmul.f32 %v1015, %v524
  %v1575 = vmul.f32 %v1020, %v525
  %v1576 = vmul.f32 %v1020, %v526
  %v1577 = vmul.f32 %v1025, %v527
  %v1578 = vmul.f32 %v1025, %v528
  %v1579 = vmul.f32 %v1030, %v529
  %v1580 = vmul.f32 %v1030, %v530
  %v1581 = vmul.f32 %v1035, %v531
  %v1582 = vmul.f32 %v1035, %v532
  %v1583 = vmul.f32 %v1040, %v533
  %v1584 = vmul.f32 %v1040, %v534
  %v1585 = vmul.f32 %v1045, %v535
  %v1586 = vmul.f32 %v1045, %v536
  %v1587 = vmul.f32 %v1050, %v537
  %v1588 = vmul.f32 %v1050, %v538
  %v1589 = vmul.f32 %v1055, %v539
  %v1590 = vmul.f32 %v1055, %v540
  %v1591 = vmul.f32 %v1060, %v541
  %v1592 = vmul.f32 %v1060, %v542
  %v1593 = vmul.f32 %v1065, %v543
  %v1594 = vmul.f32 %v1065, %v544
  %v1595 = vmul.f32 %v1070, %v545
  %v1596 = vmul.f32 %v1070, %v546
  %v1597 = vmul.f32 %v1075, %v547
  %v1598 = vmul.f32 %v1075, %v548
  %v1599 = vmul.f32 %v1080, %v549
  %v1600 = vmul.f32 %v1080, %v550
  %v1601 = vmul.f32 %v1085, %v551
  %v1602 = vmul.f32 %v1085, %v552
  %v1603 = vmul.f32 %v1090, %v553
  %v1604 = vmul.f32 %v1090, %v554
  %v1605 = vmul.f32 %v1095, %v555
  %v1606 = vmul.f32 %v1095, %v556
  %v1607 = vmul.f32 %v1100, %v557
  %v1608 = vmul.f32 %v1100, %v558
  %v1609 = vmul.f32 %v1105, %v559
  %v1610 = vmul.f32 %v1105, %v560
  %v1611 = vmul.f32 %v1110, %v561
  %v1612 = vmul.f32 %v1110, %v562
  %v1613 = vmul.f32 %v1115, %v563
  %v1614 = vmul.f32 %v1115, %v564
  %v1615 = vmul.f32 %v1120, %v565
  %v1616 = vmul.f32 %v1120, %v566
  %v1617 = vmul.f32 %v1125, %v567
  %v1618 = vmul.f32 %v1125, %v568
  %v1619 = vmul.f32 %v1130, %v569
  %v1620 = vmul.f32 %v1130, %v570
  %v1621 = vmul.f32 %v1135, %v571
  %v1622 = vmul.f32 %v1135, %v572
  %v1623 = vmul.f32 %v1140, %v573
  %v1624 = vmul.f32 %v1140, %v574
  %v1625 = vmul.f32 %v1145, %v575
  %v1626 = vmul.f32 %v1145, %v576
  %v1627 = vmul.f32 %v1150, %v577
  %v1628 = vmul.f32 %v1150, %v578
  %v1629 = vmul.f32 %v1155, %v579
  %v1630 = vmul.f32 %v1155, %v580
  %v1631 = vmul.f32 %v1160, %v581
  %v1632 = vmul.f32 %v1160, %v582
  %v1633 = vmul.f32 %v1165, %v583
  %v1634 = vmul.f32 %v1165, %v584
  %v1635 = vmul.f32 %v1170, %v585
  %v1636 = vmul.f32 %v1170, %v586
  %v1637 = vmul.f32 %v1175, %v587
  %v1638 = vmul.f32 %v1175, %v588
  %v1639 = vmul.f32 %v1180, %v589
  %v1640 = vmul.f32 %v1180, %v590
  %v1641 = vmul.f32 %v1185, %v591
  %v1642 = vmul.f32 %v1185, %v592
  %v1643 = vmul.f32 %v1190, %v593
  %v1644 = vmul.f32 %v1190, %v594
  %v1645 = vmul.f32 %v1195, %v595
  %v1646 = vmul.f32 %v1195, %v596
  %v1647 = vmul.f32 %v1200, %v597
  %v1648 = vmul.f32 %v1200, %v598
  %v1649 = vmul.f32 %v1205, %v599
  %v1650 = vmul.f32 %v1205, %v600
  %v1651 = vmul.f32 %v1210, %v601
  %v1652 = vmul.f32 %v1210, %v602
  %v1653 = vmul.f32 %v1215, %v603
  %v1654 = vmul.f32 %v1215, %v604
  %v1655 = vmul.f32 %v1220, %v605
  %v1656 = vmul.f32 %v1220, %v606
  %v1657 = vmul.f32 %v1225, %v607
  %v1658 = vmul.f32 %v1225, %v608
  %v1659 = vmul.f32 %v1230, %v609
  %v1660 = vmul.f32 %v1230, %v610
  %v1661 = vmul.f32 %v1235, %v611
  %v1662 = vmul.f32 %v1235, %v612
  %v1663 = vmul.f32 %v1240, %v613
  %v1664 = vmul.f32 %v1240, %v614
  %v1665 = vmul.f32 %v1245, %v615
  %v1666 = vmul.f32 %v1245, %v616
  %v1667 = vmul.f32 %v1250, %v617
  %v1668 = vmul.f32 %v1250, %v618
  %v1669 = vmul.f32 %v1255, %v619
  %v1670 = vmul.f32 %v1255, %v620
  %v1671 = vmul.f32 %v1260, %v621
  %v1672 = vmul.f32 %v1260, %v622
  %v1673 = vmul.f32 %v1265, %v623
  %v1674 = vmul.f32 %v1265, %v624
  %v1675 = vmul.f32 %v1270, %v625
  %v1676 = vmul.f32 %v1270, %v626
  %v1677 = vmul.f32 %v1275, %v627
  %v1678 = vmul.f32 %v1275, %v628
  %v1679 = vmul.f32 %v1280, %v629
  %v1680 = vmul.f32 %v1280, %v630
  %v1681 = vmul.f32 %v1285, %v631
  %v1682 = vmul.f32 %v1285, %v632
  %v1683 = vmul.f32 %v1290, %v633
  %v1684 = vmul.f32 %v1290, %v634
  %v1685 = vmul.f32 %v1295, %v635
  %v1686 = vmul.f32 %v1295, %v636
  %v1687 = vmul.f32 %v1300, %v637
  %v1688 = vmul.f32 %v1300, %v638
  %v1689 = vmul.f32 %v1305, %v639
  %v1690 = vmul.f32 %v1305, %v640
  %v1691 = vmul.f32 %v1310, %v641
  %v1692 = vmul.f32 %v1310, %v642
  %v1693 = vmul.f32 %v1315, %v643
  %v1694 = vmul.f32 %v1315, %v644
  %v1695 = vmul.f32 %v1320, %v645
  %v1696 = vmul.f32 %v1320, %v646
  %v1697 = vmul.f32 %v1325, %v647
  %v1698 = vmul.f32 %v1325, %v648
  %v1699 = vmul.f32 %v1330, %v649
  %v1700 = vmul.f32 %v1330, %v650
  %v1701 = vmul.f32 %v1335, %v651
  %v1702 = vmul.f32 %v1335, %v652
  %v1703 = vmul.f32 %v1340, %v653
  %v1704 = vmul.f32 %v1340, %v654
  %v1705 = vmul.f32 %v1345, %v655
  %v1706 = vmul.f32 %v1345, %v656
  %v1707 = vmul.f32 %v1350, %v657
  %v1708 = vmul.f32 %v1350, %v658
  %v1709 = vmul.f32 %v1355, %v659
  %v1710 = vmul.f32 %v1355, %v660
  %v1711 = vmul.f32 %v1360, %v661
  %v1712 = vmul.f32 %v1360, %v662
  %v1713 = vmul.f32 %v1365, %v663
  %v1714 = vmul.f32 %v1365, %v664
  %v1715 = vmul.f32 %v1370, %v665
  %v1716 = vmul.f32 %v1370, %v666
  %v1717 = vmul.f32 %v1375, %v667
  %v1718 = vmul.f32 %v1375, %v668
  %v1719 = vmul.f32 %v1380, %v669
  %v1720 = vmul.f32 %v1380, %v670
  %v1721 = vmul.f32 %v1385, %v671
  %v1722 = vmul.f32 %v1385, %v672
  %v1723 = vmul.f32 %v1390, %v673
  %v1724 = vmul.f32 %v1390, %v674
  %v1725 = vmul.f32 %v1395, %v675
  %v1726 = vmul.f32 %v1395, %v676
  %v1727 = vmul.f32 %v1400, %v677
  %v1728 = vmul.f32 %v1400, %v678
  %v1729 = vmul.f32 %v1405, %v679
  %v1730 = vmul.f32 %v1405, %v680
  %v1731 = vmul.f32 %v1410, %v681
  %v1732 = vmul.f32 %v1410, %v682
  %v1733 = vmul.f32 %v1415, %v683
  %v1734 = vmul.f32 %v1415, %v684
  %v1735 = vmul.f32 %v1420, %v685
  %v1736 = vmul.f32 %v1420, %v686
  %v1737 = vmul.f32 %v1425, %v687
  %v1738 = vmul.f32 %v1425, %v688
  %v1739 = vmul.f32 %v1430, %v689
  %v1740 = vmul.f32 %v1430, %v690
  %v1741 = vmul.f32 %v1435, %v691
  %v1742 = vmul.f32 %v1435, %v692
  %v1743 = vmul.f32 %v1440, %v693
  %v1744 = vmul.f32 %v1440, %v694
  %v1745 = vmul.f32 %v1445, %v695
  %v1746 = vmul.f32 %v1445, %v696
  %1747 = vst [vmem:[%s2] sm:$0xff] %v1447
  %vm1748 = vcmask 556032
  %1749 = vst.msk [vmem:[%s2 + $0x8] sm:$0xff] %vm1748, %v1448
  %1750 = vst [vmem:[%s2 + $0x10] sm:$0xff] %v1449
  %1751 = vst.msk [vmem:[%s2 + $0x18] sm:$0xff] %vm1748, %v1450
  %1752 = vst [vmem:[%s2 + $0x20] sm:$0xff] %v1451
  %1753 = vst.msk [vmem:[%s2 + $0x28] sm:$0xff] %vm1748, %v1452
  %1754 = vst [vmem:[%s2 + $0x30] sm:$0xff] %v1453
  %1755 = vst.msk [vmem:[%s2 + $0x38] sm:$0xff] %vm1748, %v1454
  %1756 = vst [vmem:[%s2 + $0x40] sm:$0xff] %v1455
  %1757 = vst.msk [vmem:[%s2 + $0x48] sm:$0xff] %vm1748, %v1456
  %1758 = vst [vmem:[%s2 + $0x50] sm:$0xff] %v1457
  %1759 = vst.msk [vmem:[%s2 + $0x58] sm:$0xff] %vm1748, %v1458
  %1760 = vst [vmem:[%s2 + $0x60] sm:$0xff] %v1459
  %1761 = vst.msk [vmem:[%s2 + $0x68] sm:$0xff] %vm1748, %v1460
  %1762 = vst [vmem:[%s2 + $0x70] sm:$0xff] %v1461
  %1763 = vst.msk [vmem:[%s2 + $0x78] sm:$0xff] %vm1748, %v1462
  %1764 = vst [vmem:[%s2 + $0x80] sm:$0xff] %v1463
  %1765 = vst.msk [vmem:[%s2 + $0x88] sm:$0xff] %vm1748, %v1464
  %1766 = vst [vmem:[%s2 + $0x90] sm:$0xff] %v1465
  %1767 = vst.msk [vmem:[%s2 + $0x98] sm:$0xff] %vm1748, %v1466
  %1768 = vst [vmem:[%s2 + $0xa0] sm:$0xff] %v1467
  %1769 = vst.msk [vmem:[%s2 + $0xa8] sm:$0xff] %vm1748, %v1468
  %1770 = vst [vmem:[%s2 + $0xb0] sm:$0xff] %v1469
  %1771 = vst.msk [vmem:[%s2 + $0xb8] sm:$0xff] %vm1748, %v1470
  %1772 = vst [vmem:[%s2 + $0xc0] sm:$0xff] %v1471
  %1773 = vst.msk [vmem:[%s2 + $0xc8] sm:$0xff] %vm1748, %v1472
  %1774 = vst [vmem:[%s2 + $0xd0] sm:$0xff] %v1473
  %1775 = vst.msk [vmem:[%s2 + $0xd8] sm:$0xff] %vm1748, %v1474
  %1776 = vst [vmem:[%s2 + $0xe0] sm:$0xff] %v1475
  %1777 = vst.msk [vmem:[%s2 + $0xe8] sm:$0xff] %vm1748, %v1476
  %1778 = vst [vmem:[%s2 + $0xf0] sm:$0xff] %v1477
  %1779 = vst.msk [vmem:[%s2 + $0xf8] sm:$0xff] %vm1748, %v1478
  %1780 = vst [vmem:[%s2 + $0x100] sm:$0xff] %v1479
  %1781 = vst.msk [vmem:[%s2 + $0x108] sm:$0xff] %vm1748, %v1480
  %1782 = vst [vmem:[%s2 + $0x110] sm:$0xff] %v1481
  %1783 = vst.msk [vmem:[%s2 + $0x118] sm:$0xff] %vm1748, %v1482
  %1784 = vst [vmem:[%s2 + $0x120] sm:$0xff] %v1483
  %1785 = vst.msk [vmem:[%s2 + $0x128] sm:$0xff] %vm1748, %v1484
  %1786 = vst [vmem:[%s2 + $0x130] sm:$0xff] %v1485
  %1787 = vst.msk [vmem:[%s2 + $0x138] sm:$0xff] %vm1748, %v1486
  %1788 = vst [vmem:[%s2 + $0x140] sm:$0xff] %v1487
  %1789 = vst.msk [vmem:[%s2 + $0x148] sm:$0xff] %vm1748, %v1488
  %1790 = vst [vmem:[%s2 + $0x150] sm:$0xff] %v1489
  %1791 = vst.msk [vmem:[%s2 + $0x158] sm:$0xff] %vm1748, %v1490
  %1792 = vst [vmem:[%s2 + $0x160] sm:$0xff] %v1491
  %1793 = vst.msk [vmem:[%s2 + $0x168] sm:$0xff] %vm1748, %v1492
  %1794 = vst [vmem:[%s2 + $0x170] sm:$0xff] %v1493
  %1795 = vst.msk [vmem:[%s2 + $0x178] sm:$0xff] %vm1748, %v1494
  %1796 = vst [vmem:[%s2 + $0x180] sm:$0xff] %v1495
  %1797 = vst.msk [vmem:[%s2 + $0x188] sm:$0xff] %vm1748, %v1496
  %1798 = vst [vmem:[%s2 + $0x190] sm:$0xff] %v1497
  %1799 = vst.msk [vmem:[%s2 + $0x198] sm:$0xff] %vm1748, %v1498
  %1800 = vst [vmem:[%s2 + $0x1a0] sm:$0xff] %v1499
  %1801 = vst.msk [vmem:[%s2 + $0x1a8] sm:$0xff] %vm1748, %v1500
  %1802 = vst [vmem:[%s2 + $0x1b0] sm:$0xff] %v1501
  %1803 = vst.msk [vmem:[%s2 + $0x1b8] sm:$0xff] %vm1748, %v1502
  %1804 = vst [vmem:[%s2 + $0x1c0] sm:$0xff] %v1503
  %1805 = vst.msk [vmem:[%s2 + $0x1c8] sm:$0xff] %vm1748, %v1504
  %1806 = vst [vmem:[%s2 + $0x1d0] sm:$0xff] %v1505
  %1807 = vst.msk [vmem:[%s2 + $0x1d8] sm:$0xff] %vm1748, %v1506
  %1808 = vst [vmem:[%s2 + $0x1e0] sm:$0xff] %v1507
  %1809 = vst.msk [vmem:[%s2 + $0x1e8] sm:$0xff] %vm1748, %v1508
  %1810 = vst [vmem:[%s2 + $0x1f0] sm:$0xff] %v1509
  %1811 = vst.msk [vmem:[%s2 + $0x1f8] sm:$0xff] %vm1748, %v1510
  %1812 = vst [vmem:[%s2 + $0x200] sm:$0xff] %v1511
  %1813 = vst.msk [vmem:[%s2 + $0x208] sm:$0xff] %vm1748, %v1512
  %1814 = vst [vmem:[%s2 + $0x210] sm:$0xff] %v1513
  %1815 = vst.msk [vmem:[%s2 + $0x218] sm:$0xff] %vm1748, %v1514
  %1816 = vst [vmem:[%s2 + $0x220] sm:$0xff] %v1515
  %1817 = vst.msk [vmem:[%s2 + $0x228] sm:$0xff] %vm1748, %v1516
  %1818 = vst [vmem:[%s2 + $0x230] sm:$0xff] %v1517
  %1819 = vst.msk [vmem:[%s2 + $0x238] sm:$0xff] %vm1748, %v1518
  %1820 = vst [vmem:[%s2 + $0x240] sm:$0xff] %v1519
  %1821 = vst.msk [vmem:[%s2 + $0x248] sm:$0xff] %vm1748, %v1520
  %1822 = vst [vmem:[%s2 + $0x250] sm:$0xff] %v1521
  %1823 = vst.msk [vmem:[%s2 + $0x258] sm:$0xff] %vm1748, %v1522
  %1824 = vst [vmem:[%s2 + $0x260] sm:$0xff] %v1523
  %1825 = vst.msk [vmem:[%s2 + $0x268] sm:$0xff] %vm1748, %v1524
  %1826 = vst [vmem:[%s2 + $0x270] sm:$0xff] %v1525
  %1827 = vst.msk [vmem:[%s2 + $0x278] sm:$0xff] %vm1748, %v1526
  %1828 = vst [vmem:[%s2 + $0x280] sm:$0xff] %v1527
  %1829 = vst.msk [vmem:[%s2 + $0x288] sm:$0xff] %vm1748, %v1528
  %1830 = vst [vmem:[%s2 + $0x290] sm:$0xff] %v1529
  %1831 = vst.msk [vmem:[%s2 + $0x298] sm:$0xff] %vm1748, %v1530
  %1832 = vst [vmem:[%s2 + $0x2a0] sm:$0xff] %v1531
  %1833 = vst.msk [vmem:[%s2 + $0x2a8] sm:$0xff] %vm1748, %v1532
  %1834 = vst [vmem:[%s2 + $0x2b0] sm:$0xff] %v1533
  %1835 = vst.msk [vmem:[%s2 + $0x2b8] sm:$0xff] %vm1748, %v1534
  %1836 = vst [vmem:[%s2 + $0x2c0] sm:$0xff] %v1535
  %1837 = vst.msk [vmem:[%s2 + $0x2c8] sm:$0xff] %vm1748, %v1536
  %1838 = vst [vmem:[%s2 + $0x2d0] sm:$0xff] %v1537
  %1839 = vst.msk [vmem:[%s2 + $0x2d8] sm:$0xff] %vm1748, %v1538
  %1840 = vst [vmem:[%s2 + $0x2e0] sm:$0xff] %v1539
  %1841 = vst.msk [vmem:[%s2 + $0x2e8] sm:$0xff] %vm1748, %v1540
  %1842 = vst [vmem:[%s2 + $0x2f0] sm:$0xff] %v1541
  %1843 = vst.msk [vmem:[%s2 + $0x2f8] sm:$0xff] %vm1748, %v1542
  %1844 = vst [vmem:[%s2 + $0x300] sm:$0xff] %v1543
  %1845 = vst.msk [vmem:[%s2 + $0x308] sm:$0xff] %vm1748, %v1544
  %1846 = vst [vmem:[%s2 + $0x310] sm:$0xff] %v1545
  %1847 = vst.msk [vmem:[%s2 + $0x318] sm:$0xff] %vm1748, %v1546
  %1848 = vst [vmem:[%s2 + $0x320] sm:$0xff] %v1547
  %1849 = vst.msk [vmem:[%s2 + $0x328] sm:$0xff] %vm1748, %v1548
  %1850 = vst [vmem:[%s2 + $0x330] sm:$0xff] %v1549
  %1851 = vst.msk [vmem:[%s2 + $0x338] sm:$0xff] %vm1748, %v1550
  %1852 = vst [vmem:[%s2 + $0x340] sm:$0xff] %v1551
  %1853 = vst.msk [vmem:[%s2 + $0x348] sm:$0xff] %vm1748, %v1552
  %1854 = vst [vmem:[%s2 + $0x350] sm:$0xff] %v1553
  %1855 = vst.msk [vmem:[%s2 + $0x358] sm:$0xff] %vm1748, %v1554
  %1856 = vst [vmem:[%s2 + $0x360] sm:$0xff] %v1555
  %1857 = vst.msk [vmem:[%s2 + $0x368] sm:$0xff] %vm1748, %v1556
  %1858 = vst [vmem:[%s2 + $0x370] sm:$0xff] %v1557
  %1859 = vst.msk [vmem:[%s2 + $0x378] sm:$0xff] %vm1748, %v1558
  %1860 = vst [vmem:[%s2 + $0x380] sm:$0xff] %v1559
  %1861 = vst.msk [vmem:[%s2 + $0x388] sm:$0xff] %vm1748, %v1560
  %1862 = vst [vmem:[%s2 + $0x390] sm:$0xff] %v1561
  %1863 = vst.msk [vmem:[%s2 + $0x398] sm:$0xff] %vm1748, %v1562
  %1864 = vst [vmem:[%s2 + $0x3a0] sm:$0xff] %v1563
  %1865 = vst.msk [vmem:[%s2 + $0x3a8] sm:$0xff] %vm1748, %v1564
  %1866 = vst [vmem:[%s2 + $0x3b0] sm:$0xff] %v1565
  %1867 = vst.msk [vmem:[%s2 + $0x3b8] sm:$0xff] %vm1748, %v1566
  %1868 = vst [vmem:[%s2 + $0x3c0] sm:$0xff] %v1567
  %1869 = vst.msk [vmem:[%s2 + $0x3c8] sm:$0xff] %vm1748, %v1568
  %1870 = vst [vmem:[%s2 + $0x3d0] sm:$0xff] %v1569
  %1871 = vst.msk [vmem:[%s2 + $0x3d8] sm:$0xff] %vm1748, %v1570
  %1872 = vst [vmem:[%s2 + $0x3e0] sm:$0xff] %v1571
  %1873 = vst.msk [vmem:[%s2 + $0x3e8] sm:$0xff] %vm1748, %v1572
  %1874 = vst [vmem:[%s2 + $0x3f0] sm:$0xff] %v1573
  %1875 = vst.msk [vmem:[%s2 + $0x3f8] sm:$0xff] %vm1748, %v1574
  %1876 = vst [vmem:[%s2 + $0x400] sm:$0xff] %v1575
  %1877 = vst.msk [vmem:[%s2 + $0x408] sm:$0xff] %vm1748, %v1576
  %1878 = vst [vmem:[%s2 + $0x410] sm:$0xff] %v1577
  %1879 = vst.msk [vmem:[%s2 + $0x418] sm:$0xff] %vm1748, %v1578
  %1880 = vst [vmem:[%s2 + $0x420] sm:$0xff] %v1579
  %1881 = vst.msk [vmem:[%s2 + $0x428] sm:$0xff] %vm1748, %v1580
  %1882 = vst [vmem:[%s2 + $0x430] sm:$0xff] %v1581
  %1883 = vst.msk [vmem:[%s2 + $0x438] sm:$0xff] %vm1748, %v1582
  %1884 = vst [vmem:[%s2 + $0x440] sm:$0xff] %v1583
  %1885 = vst.msk [vmem:[%s2 + $0x448] sm:$0xff] %vm1748, %v1584
  %1886 = vst [vmem:[%s2 + $0x450] sm:$0xff] %v1585
  %1887 = vst.msk [vmem:[%s2 + $0x458] sm:$0xff] %vm1748, %v1586
  %1888 = vst [vmem:[%s2 + $0x460] sm:$0xff] %v1587
  %1889 = vst.msk [vmem:[%s2 + $0x468] sm:$0xff] %vm1748, %v1588
  %1890 = vst [vmem:[%s2 + $0x470] sm:$0xff] %v1589
  %1891 = vst.msk [vmem:[%s2 + $0x478] sm:$0xff] %vm1748, %v1590
  %1892 = vst [vmem:[%s2 + $0x480] sm:$0xff] %v1591
  %1893 = vst.msk [vmem:[%s2 + $0x488] sm:$0xff] %vm1748, %v1592
  %1894 = vst [vmem:[%s2 + $0x490] sm:$0xff] %v1593
  %1895 = vst.msk [vmem:[%s2 + $0x498] sm:$0xff] %vm1748, %v1594
  %1896 = vst [vmem:[%s2 + $0x4a0] sm:$0xff] %v1595
  %1897 = vst.msk [vmem:[%s2 + $0x4a8] sm:$0xff] %vm1748, %v1596
  %1898 = vst [vmem:[%s2 + $0x4b0] sm:$0xff] %v1597
  %1899 = vst.msk [vmem:[%s2 + $0x4b8] sm:$0xff] %vm1748, %v1598
  %1900 = vst [vmem:[%s2 + $0x4c0] sm:$0xff] %v1599
  %1901 = vst.msk [vmem:[%s2 + $0x4c8] sm:$0xff] %vm1748, %v1600
  %1902 = vst [vmem:[%s2 + $0x4d0] sm:$0xff] %v1601
  %1903 = vst.msk [vmem:[%s2 + $0x4d8] sm:$0xff] %vm1748, %v1602
  %1904 = vst [vmem:[%s2 + $0x4e0] sm:$0xff] %v1603
  %1905 = vst.msk [vmem:[%s2 + $0x4e8] sm:$0xff] %vm1748, %v1604
  %1906 = vst [vmem:[%s2 + $0x4f0] sm:$0xff] %v1605
  %1907 = vst.msk [vmem:[%s2 + $0x4f8] sm:$0xff] %vm1748, %v1606
  %1908 = vst [vmem:[%s2 + $0x500] sm:$0xff] %v1607
  %1909 = vst.msk [vmem:[%s2 + $0x508] sm:$0xff] %vm1748, %v1608
  %1910 = vst [vmem:[%s2 + $0x510] sm:$0xff] %v1609
  %1911 = vst.msk [vmem:[%s2 + $0x518] sm:$0xff] %vm1748, %v1610
  %1912 = vst [vmem:[%s2 + $0x520] sm:$0xff] %v1611
  %1913 = vst.msk [vmem:[%s2 + $0x528] sm:$0xff] %vm1748, %v1612
  %1914 = vst [vmem:[%s2 + $0x530] sm:$0xff] %v1613
  %1915 = vst.msk [vmem:[%s2 + $0x538] sm:$0xff] %vm1748, %v1614
  %1916 = vst [vmem:[%s2 + $0x540] sm:$0xff] %v1615
  %1917 = vst.msk [vmem:[%s2 + $0x548] sm:$0xff] %vm1748, %v1616
  %1918 = vst [vmem:[%s2 + $0x550] sm:$0xff] %v1617
  %1919 = vst.msk [vmem:[%s2 + $0x558] sm:$0xff] %vm1748, %v1618
  %1920 = vst [vmem:[%s2 + $0x560] sm:$0xff] %v1619
  %1921 = vst.msk [vmem:[%s2 + $0x568] sm:$0xff] %vm1748, %v1620
  %1922 = vst [vmem:[%s2 + $0x570] sm:$0xff] %v1621
  %1923 = vst.msk [vmem:[%s2 + $0x578] sm:$0xff] %vm1748, %v1622
  %1924 = vst [vmem:[%s2 + $0x580] sm:$0xff] %v1623
  %1925 = vst.msk [vmem:[%s2 + $0x588] sm:$0xff] %vm1748, %v1624
  %1926 = vst [vmem:[%s2 + $0x590] sm:$0xff] %v1625
  %1927 = vst.msk [vmem:[%s2 + $0x598] sm:$0xff] %vm1748, %v1626
  %1928 = vst [vmem:[%s2 + $0x5a0] sm:$0xff] %v1627
  %1929 = vst.msk [vmem:[%s2 + $0x5a8] sm:$0xff] %vm1748, %v1628
  %1930 = vst [vmem:[%s2 + $0x5b0] sm:$0xff] %v1629
  %1931 = vst.msk [vmem:[%s2 + $0x5b8] sm:$0xff] %vm1748, %v1630
  %1932 = vst [vmem:[%s2 + $0x5c0] sm:$0xff] %v1631
  %1933 = vst.msk [vmem:[%s2 + $0x5c8] sm:$0xff] %vm1748, %v1632
  %1934 = vst [vmem:[%s2 + $0x5d0] sm:$0xff] %v1633
  %1935 = vst.msk [vmem:[%s2 + $0x5d8] sm:$0xff] %vm1748, %v1634
  %1936 = vst [vmem:[%s2 + $0x5e0] sm:$0xff] %v1635
  %1937 = vst.msk [vmem:[%s2 + $0x5e8] sm:$0xff] %vm1748, %v1636
  %1938 = vst [vmem:[%s2 + $0x5f0] sm:$0xff] %v1637
  %1939 = vst.msk [vmem:[%s2 + $0x5f8] sm:$0xff] %vm1748, %v1638
  %1940 = vst [vmem:[%s2 + $0x600] sm:$0xff] %v1639
  %1941 = vst.msk [vmem:[%s2 + $0x608] sm:$0xff] %vm1748, %v1640
  %1942 = vst [vmem:[%s2 + $0x610] sm:$0xff] %v1641
  %1943 = vst.msk [vmem:[%s2 + $0x618] sm:$0xff] %vm1748, %v1642
  %1944 = vst [vmem:[%s2 + $0x620] sm:$0xff] %v1643
  %1945 = vst.msk [vmem:[%s2 + $0x628] sm:$0xff] %vm1748, %v1644
  %1946 = vst [vmem:[%s2 + $0x630] sm:$0xff] %v1645
  %1947 = vst.msk [vmem:[%s2 + $0x638] sm:$0xff] %vm1748, %v1646
  %1948 = vst [vmem:[%s2 + $0x640] sm:$0xff] %v1647
  %1949 = vst.msk [vmem:[%s2 + $0x648] sm:$0xff] %vm1748, %v1648
  %1950 = vst [vmem:[%s2 + $0x650] sm:$0xff] %v1649
  %1951 = vst.msk [vmem:[%s2 + $0x658] sm:$0xff] %vm1748, %v1650
  %1952 = vst [vmem:[%s2 + $0x660] sm:$0xff] %v1651
  %1953 = vst.msk [vmem:[%s2 + $0x668] sm:$0xff] %vm1748, %v1652
  %1954 = vst [vmem:[%s2 + $0x670] sm:$0xff] %v1653
  %1955 = vst.msk [vmem:[%s2 + $0x678] sm:$0xff] %vm1748, %v1654
  %1956 = vst [vmem:[%s2 + $0x680] sm:$0xff] %v1655
  %1957 = vst.msk [vmem:[%s2 + $0x688] sm:$0xff] %vm1748, %v1656
  %1958 = vst [vmem:[%s2 + $0x690] sm:$0xff] %v1657
  %1959 = vst.msk [vmem:[%s2 + $0x698] sm:$0xff] %vm1748, %v1658
  %1960 = vst [vmem:[%s2 + $0x6a0] sm:$0xff] %v1659
  %1961 = vst.msk [vmem:[%s2 + $0x6a8] sm:$0xff] %vm1748, %v1660
  %1962 = vst [vmem:[%s2 + $0x6b0] sm:$0xff] %v1661
  %1963 = vst.msk [vmem:[%s2 + $0x6b8] sm:$0xff] %vm1748, %v1662
  %1964 = vst [vmem:[%s2 + $0x6c0] sm:$0xff] %v1663
  %1965 = vst.msk [vmem:[%s2 + $0x6c8] sm:$0xff] %vm1748, %v1664
  %1966 = vst [vmem:[%s2 + $0x6d0] sm:$0xff] %v1665
  %1967 = vst.msk [vmem:[%s2 + $0x6d8] sm:$0xff] %vm1748, %v1666
  %1968 = vst [vmem:[%s2 + $0x6e0] sm:$0xff] %v1667
  %1969 = vst.msk [vmem:[%s2 + $0x6e8] sm:$0xff] %vm1748, %v1668
  %1970 = vst [vmem:[%s2 + $0x6f0] sm:$0xff] %v1669
  %1971 = vst.msk [vmem:[%s2 + $0x6f8] sm:$0xff] %vm1748, %v1670
  %1972 = vst [vmem:[%s2 + $0x700] sm:$0xff] %v1671
  %1973 = vst.msk [vmem:[%s2 + $0x708] sm:$0xff] %vm1748, %v1672
  %1974 = vst [vmem:[%s2 + $0x710] sm:$0xff] %v1673
  %1975 = vst.msk [vmem:[%s2 + $0x718] sm:$0xff] %vm1748, %v1674
  %1976 = vst [vmem:[%s2 + $0x720] sm:$0xff] %v1675
  %1977 = vst.msk [vmem:[%s2 + $0x728] sm:$0xff] %vm1748, %v1676
  %1978 = vst [vmem:[%s2 + $0x730] sm:$0xff] %v1677
  %1979 = vst.msk [vmem:[%s2 + $0x738] sm:$0xff] %vm1748, %v1678
  %1980 = vst [vmem:[%s2 + $0x740] sm:$0xff] %v1679
  %1981 = vst.msk [vmem:[%s2 + $0x748] sm:$0xff] %vm1748, %v1680
  %1982 = vst [vmem:[%s2 + $0x750] sm:$0xff] %v1681
  %1983 = vst.msk [vmem:[%s2 + $0x758] sm:$0xff] %vm1748, %v1682
  %1984 = vst [vmem:[%s2 + $0x760] sm:$0xff] %v1683
  %1985 = vst.msk [vmem:[%s2 + $0x768] sm:$0xff] %vm1748, %v1684
  %1986 = vst [vmem:[%s2 + $0x770] sm:$0xff] %v1685
  %1987 = vst.msk [vmem:[%s2 + $0x778] sm:$0xff] %vm1748, %v1686
  %1988 = vst [vmem:[%s2 + $0x780] sm:$0xff] %v1687
  %1989 = vst.msk [vmem:[%s2 + $0x788] sm:$0xff] %vm1748, %v1688
  %1990 = vst [vmem:[%s2 + $0x790] sm:$0xff] %v1689
  %1991 = vst.msk [vmem:[%s2 + $0x798] sm:$0xff] %vm1748, %v1690
  %1992 = vst [vmem:[%s2 + $0x7a0] sm:$0xff] %v1691
  %1993 = vst.msk [vmem:[%s2 + $0x7a8] sm:$0xff] %vm1748, %v1692
  %1994 = vst [vmem:[%s2 + $0x7b0] sm:$0xff] %v1693
  %1995 = vst.msk [vmem:[%s2 + $0x7b8] sm:$0xff] %vm1748, %v1694
  %1996 = vst [vmem:[%s2 + $0x7c0] sm:$0xff] %v1695
  %1997 = vst.msk [vmem:[%s2 + $0x7c8] sm:$0xff] %vm1748, %v1696
  %1998 = vst [vmem:[%s2 + $0x7d0] sm:$0xff] %v1697
  %1999 = vst.msk [vmem:[%s2 + $0x7d8] sm:$0xff] %vm1748, %v1698
  %2000 = vst [vmem:[%s2 + $0x7e0] sm:$0xff] %v1699
  %2001 = vst.msk [vmem:[%s2 + $0x7e8] sm:$0xff] %vm1748, %v1700
  %2002 = vst [vmem:[%s2 + $0x7f0] sm:$0xff] %v1701
  %2003 = vst.msk [vmem:[%s2 + $0x7f8] sm:$0xff] %vm1748, %v1702
  %2004 = vst [vmem:[%s2 + $0x800] sm:$0xff] %v1703
  %2005 = vst.msk [vmem:[%s2 + $0x808] sm:$0xff] %vm1748, %v1704
  %2006 = vst [vmem:[%s2 + $0x810] sm:$0xff] %v1705
  %2007 = vst.msk [vmem:[%s2 + $0x818] sm:$0xff] %vm1748, %v1706
  %2008 = vst [vmem:[%s2 + $0x820] sm:$0xff] %v1707
  %2009 = vst.msk [vmem:[%s2 + $0x828] sm:$0xff] %vm1748, %v1708
  %2010 = vst [vmem:[%s2 + $0x830] sm:$0xff] %v1709
  %2011 = vst.msk [vmem:[%s2 + $0x838] sm:$0xff] %vm1748, %v1710
  %2012 = vst [vmem:[%s2 + $0x840] sm:$0xff] %v1711
  %2013 = vst.msk [vmem:[%s2 + $0x848] sm:$0xff] %vm1748, %v1712
  %2014 = vst [vmem:[%s2 + $0x850] sm:$0xff] %v1713
  %2015 = vst.msk [vmem:[%s2 + $0x858] sm:$0xff] %vm1748, %v1714
  %2016 = vst [vmem:[%s2 + $0x860] sm:$0xff] %v1715
  %2017 = vst.msk [vmem:[%s2 + $0x868] sm:$0xff] %vm1748, %v1716
  %2018 = vst [vmem:[%s2 + $0x870] sm:$0xff] %v1717
  %2019 = vst.msk [vmem:[%s2 + $0x878] sm:$0xff] %vm1748, %v1718
  %2020 = vst [vmem:[%s2 + $0x880] sm:$0xff] %v1719
  %2021 = vst.msk [vmem:[%s2 + $0x888] sm:$0xff] %vm1748, %v1720
  %2022 = vst [vmem:[%s2 + $0x890] sm:$0xff] %v1721
  %2023 = vst.msk [vmem:[%s2 + $0x898] sm:$0xff] %vm1748, %v1722
  %2024 = vst [vmem:[%s2 + $0x8a0] sm:$0xff] %v1723
  %2025 = vst.msk [vmem:[%s2 + $0x8a8] sm:$0xff] %vm1748, %v1724
  %2026 = vst [vmem:[%s2 + $0x8b0] sm:$0xff] %v1725
  %2027 = vst.msk [vmem:[%s2 + $0x8b8] sm:$0xff] %vm1748, %v1726
  %2028 = vst [vmem:[%s2 + $0x8c0] sm:$0xff] %v1727
  %2029 = vst.msk [vmem:[%s2 + $0x8c8] sm:$0xff] %vm1748, %v1728
  %2030 = vst [vmem:[%s2 + $0x8d0] sm:$0xff] %v1729
  %2031 = vst.msk [vmem:[%s2 + $0x8d8] sm:$0xff] %vm1748, %v1730
  %2032 = vst [vmem:[%s2 + $0x8e0] sm:$0xff] %v1731
  %2033 = vst.msk [vmem:[%s2 + $0x8e8] sm:$0xff] %vm1748, %v1732
  %2034 = vst [vmem:[%s2 + $0x8f0] sm:$0xff] %v1733
  %2035 = vst.msk [vmem:[%s2 + $0x8f8] sm:$0xff] %vm1748, %v1734
  %2036 = vst [vmem:[%s2 + $0x900] sm:$0xff] %v1735
  %2037 = vst.msk [vmem:[%s2 + $0x908] sm:$0xff] %vm1748, %v1736
  %2038 = vst [vmem:[%s2 + $0x910] sm:$0xff] %v1737
  %2039 = vst.msk [vmem:[%s2 + $0x918] sm:$0xff] %vm1748, %v1738
  %2040 = vst [vmem:[%s2 + $0x920] sm:$0xff] %v1739
  %2041 = vst.msk [vmem:[%s2 + $0x928] sm:$0xff] %vm1748, %v1740
  %2042 = vst [vmem:[%s2 + $0x930] sm:$0xff] %v1741
  %2043 = vst.msk [vmem:[%s2 + $0x938] sm:$0xff] %vm1748, %v1742
  %2044 = vst [vmem:[%s2 + $0x940] sm:$0xff] %v1743
  %2045 = vst.msk [vmem:[%s2 + $0x948] sm:$0xff] %vm1748, %v1744
  %2046 = vst [vmem:[%s2 + $0x950] sm:$0xff] %v1745
  %2047 = vst.msk [vmem:[%s2 + $0x958] sm:$0xff] %vm1748, %v1746
  // Predicated region
  $region10: #{tpu_custom_call.1} parent=0 // pred_check
    _
  $region11: #{tpu_custom_call.1} parent=0 // pred_check_branch
    %2049 = sbr.rel (0) target = $region13
  $region12: #{tpu_custom_call.1} parent=0 // pred_region
    _
  $region13: #{tpu_custom_call.1} parent=0 // pred_fallthru
    _
  // Predicated region
  $region14: #{tpu_custom_call.1} parent=0 // pred_check
    _
  $region15: #{tpu_custom_call.1} parent=0 // pred_check_branch
    %2051 = sbr.rel (0) target = $region17
  $region16: #{tpu_custom_call.1} parent=0 // pred_region
    _
  $region17: #{tpu_custom_call.1} parent=0 // pred_fallthru
    _

// kernel: tpu_custom_call.1
$region0: #{tpu_custom_call.1}
  #allocation0 [shape = 'u32[]', space=smem, size = 0x4, offset = 0x4, fixed_abs, tag = 'smem constant byte address 0x4 - core index']
  #allocation1 [shape = 'u32[144,128]{1,0:T(1,128)}', space=vmem, size = 0x12000, scoped, tag = 'internal scratch']
  %s0 = inlined_call_operand.vmem [shape: f32[1200,1], index: 0, kind: input, shape index: {}]
  %s1 = inlined_call_operand.vmem [shape: f32[1200,196], index: 1, kind: input, shape index: {}]
  %s2 = inlined_call_operand.vmem [shape: f32[1200,196], index: 2, kind: output, shape index: {}]
  %s3 = sld [smem:[#allocation0]]
  $region18: #{tpu_custom_call.1} parent=0
    _
  %s5 = ssub.s32 1, %s3
  %s6 = scalar_select 0, %s5, %s3
  // Predicated region
  $region2: #{tpu_custom_call.1} parent=0 // pred_check
    _
  $region3: #{tpu_custom_call.1} parent=0 // pred_check_branch
    %8 = sbr.rel (0) target = $region5
  $region4: #{tpu_custom_call.1} parent=0 // pred_region
    _
  $region5: #{tpu_custom_call.1} parent=0 // pred_fallthru
    _
  // Predicated region
  $region6: #{tpu_custom_call.1} parent=0 // pred_check
    _
  $region7: #{tpu_custom_call.1} parent=0 // pred_check_branch
    %10 = sbr.rel (0) target = $region9
  $region8: #{tpu_custom_call.1} parent=0 // pred_region
    _
  $region9: #{tpu_custom_call.1} parent=0 // pred_fallthru
    _
  %v11 = vld [vmem:[%s0] sm:$0xff]
  %v12 = vld [vmem:[%s0 + $0x8] sm:$0xff]
  %v13 = vld [vmem:[%s0 + $0x10] sm:$0xff]
  %v14 = vld [vmem:[%s0 + $0x18] sm:$0xff]
  %v15 = vld [vmem:[%s0 + $0x20] sm:$0xff]
  %v16 = vld [vmem:[%s0 + $0x28] sm:$0xff]
  %v17 = vld [vmem:[%s0 + $0x30] sm:$0xff]
  %v18 = vld [vmem:[%s0 + $0x38] sm:$0xff]
  %v19 = vld [vmem:[%s0 + $0x40] sm:$0xff]
  %v20 = vld [vmem:[%s0 + $0x48] sm:$0xff]
  %v21 = vld [vmem:[%s0 + $0x50] sm:$0xff]
  %v22 = vld [vmem:[%s0 + $0x58] sm:$0xff]
  %v23 = vld [vmem:[%s0 + $0x60] sm:$0xff]
  %v24 = vld [vmem:[%s0 + $0x68] sm:$0xff]
  %v25 = vld [vmem:[%s0 + $0x70] sm:$0xff]
  %v26 = vld [vmem:[%s0 + $0x78] sm:$0xff]
  %v27 = vld [vmem:[%s0 + $0x80] sm:$0xff]
  %v28 = vld [vmem:[%s0 + $0x88] sm:$0xff]
  %v29 = vld [vmem:[%s0 + $0x90] sm:$0xff]
  %v30 = vld [vmem:[%s0 + $0x98] sm:$0xff]
  %v31 = vld [vmem:[%s0 + $0xa0] sm:$0xff]
  %v32 = vld [vmem:[%s0 + $0xa8] sm:$0xff]
  %v33 = vld [vmem:[%s0 + $0xb0] sm:$0xff]
  %v34 = vld [vmem:[%s0 + $0xb8] sm:$0xff]
  %v35 = vld [vmem:[%s0 + $0xc0] sm:$0xff]
  %v36 = vld [vmem:[%s0 + $0xc8] sm:$0xff]
  %v37 = vld [vmem:[%s0 + $0xd0] sm:$0xff]
  %v38 = vld [vmem:[%s0 + $0xd8] sm:$0xff]
  %v39 = vld [vmem:[%s0 + $0xe0] sm:$0xff]
  %v40 = vld [vmem:[%s0 + $0xe8] sm:$0xff]
  %v41 = vld [vmem:[%s0 + $0xf0] sm:$0xff]
  %v42 = vld [vmem:[%s0 + $0xf8] sm:$0xff]
  %v43 = vld [vmem:[%s0 + $0x100] sm:$0xff]
  %v44 = vld [vmem:[%s0 + $0x108] sm:$0xff]
  %v45 = vld [vmem:[%s0 + $0x110] sm:$0xff]
  %v46 = vld [vmem:[%s0 + $0x118] sm:$0xff]
  %v47 = vld [vmem:[%s0 + $0x120] sm:$0xff]
  %v48 = vld [vmem:[%s0 + $0x128] sm:$0xff]
  %v49 = vld [vmem:[%s0 + $0x130] sm:$0xff]
  %v50 = vld [vmem:[%s0 + $0x138] sm:$0xff]
  %v51 = vld [vmem:[%s0 + $0x140] sm:$0xff]
  %v52 = vld [vmem:[%s0 + $0x148] sm:$0xff]
  %v53 = vld [vmem:[%s0 + $0x150] sm:$0xff]
  %v54 = vld [vmem:[%s0 + $0x158] sm:$0xff]
  %v55 = vld [vmem:[%s0 + $0x160] sm:$0xff]
  %v56 = vld [vmem:[%s0 + $0x168] sm:$0xff]
  %v57 = vld [vmem:[%s0 + $0x170] sm:$0xff]
  %v58 = vld [vmem:[%s0 + $0x178] sm:$0xff]
  %v59 = vld [vmem:[%s0 + $0x180] sm:$0xff]
  %v60 = vld [vmem:[%s0 + $0x188] sm:$0xff]
  %v61 = vld [vmem:[%s0 + $0x190] sm:$0xff]
  %v62 = vld [vmem:[%s0 + $0x198] sm:$0xff]
  %v63 = vld [vmem:[%s0 + $0x1a0] sm:$0xff]
  %v64 = vld [vmem:[%s0 + $0x1a8] sm:$0xff]
  %v65 = vld [vmem:[%s0 + $0x1b0] sm:$0xff]
  %v66 = vld [vmem:[%s0 + $0x1b8] sm:$0xff]
  %v67 = vld [vmem:[%s0 + $0x1c0] sm:$0xff]
  %v68 = vld [vmem:[%s0 + $0x1c8] sm:$0xff]
  %v69 = vld [vmem:[%s0 + $0x1d0] sm:$0xff]
  %v70 = vld [vmem:[%s0 + $0x1d8] sm:$0xff]
  %v71 = vld [vmem:[%s0 + $0x1e0] sm:$0xff]
  %v72 = vld [vmem:[%s0 + $0x1e8] sm:$0xff]
  %v73 = vld [vmem:[%s0 + $0x1f0] sm:$0xff]
  %v74 = vld [vmem:[%s0 + $0x1f8] sm:$0xff]
  %v75 = vld [vmem:[%s0 + $0x200] sm:$0xff]
  %v76 = vld [vmem:[%s0 + $0x208] sm:$0xff]
  %v77 = vld [vmem:[%s0 + $0x210] sm:$0xff]
  %v78 = vld [vmem:[%s0 + $0x218] sm:$0xff]
  %v79 = vld [vmem:[%s0 + $0x220] sm:$0xff]
  %v80 = vld [vmem:[%s0 + $0x228] sm:$0xff]
  %v81 = vld [vmem:[%s0 + $0x230] sm:$0xff]
  %v82 = vld [vmem:[%s0 + $0x238] sm:$0xff]
  %v83 = vld [vmem:[%s0 + $0x240] sm:$0xff]
  %v84 = vld [vmem:[%s0 + $0x248] sm:$0xff]
  %v85 = vld [vmem:[%s0 + $0x250] sm:$0xff]
  %v86 = vld [vmem:[%s0 + $0x258] sm:$0xff]
  %v87 = vld [vmem:[%s0 + $0x260] sm:$0xff]
  %v88 = vld [vmem:[%s0 + $0x268] sm:$0xff]
  %v89 = vld [vmem:[%s0 + $0x270] sm:$0xff]
  %v90 = vld [vmem:[%s0 + $0x278] sm:$0xff]
  %v91 = vld [vmem:[%s0 + $0x280] sm:$0xff]
  %v92 = vld [vmem:[%s0 + $0x288] sm:$0xff]
  %v93 = vld [vmem:[%s0 + $0x290] sm:$0xff]
  %v94 = vld [vmem:[%s0 + $0x298] sm:$0xff]
  %v95 = vld [vmem:[%s0 + $0x2a0] sm:$0xff]
  %v96 = vld [vmem:[%s0 + $0x2a8] sm:$0xff]
  %v97 = vld [vmem:[%s0 + $0x2b0] sm:$0xff]
  %v98 = vld [vmem:[%s0 + $0x2b8] sm:$0xff]
  %v99 = vld [vmem:[%s0 + $0x2c0] sm:$0xff]
  %v100 = vld [vmem:[%s0 + $0x2c8] sm:$0xff]
  %v101 = vld [vmem:[%s0 + $0x2d0] sm:$0xff]
  %v102 = vld [vmem:[%s0 + $0x2d8] sm:$0xff]
  %v103 = vld [vmem:[%s0 + $0x2e0] sm:$0xff]
  %v104 = vld [vmem:[%s0 + $0x2e8] sm:$0xff]
  %v105 = vld [vmem:[%s0 + $0x2f0] sm:$0xff]
  %v106 = vld [vmem:[%s0 + $0x2f8] sm:$0xff]
  %v107 = vld [vmem:[%s0 + $0x300] sm:$0xff]
  %v108 = vld [vmem:[%s0 + $0x308] sm:$0xff]
  %v109 = vld [vmem:[%s0 + $0x310] sm:$0xff]
  %v110 = vld [vmem:[%s0 + $0x318] sm:$0xff]
  %v111 = vld [vmem:[%s0 + $0x320] sm:$0xff]
  %v112 = vld [vmem:[%s0 + $0x328] sm:$0xff]
  %v113 = vld [vmem:[%s0 + $0x330] sm:$0xff]
  %v114 = vld [vmem:[%s0 + $0x338] sm:$0xff]
  %v115 = vld [vmem:[%s0 + $0x340] sm:$0xff]
  %v116 = vld [vmem:[%s0 + $0x348] sm:$0xff]
  %v117 = vld [vmem:[%s0 + $0x350] sm:$0xff]
  %v118 = vld [vmem:[%s0 + $0x358] sm:$0xff]
  %v119 = vld [vmem:[%s0 + $0x360] sm:$0xff]
  %v120 = vld [vmem:[%s0 + $0x368] sm:$0xff]
  %v121 = vld [vmem:[%s0 + $0x370] sm:$0xff]
  %v122 = vld [vmem:[%s0 + $0x378] sm:$0xff]
  %v123 = vld [vmem:[%s0 + $0x380] sm:$0xff]
  %v124 = vld [vmem:[%s0 + $0x388] sm:$0xff]
  %v125 = vld [vmem:[%s0 + $0x390] sm:$0xff]
  %v126 = vld [vmem:[%s0 + $0x398] sm:$0xff]
  %v127 = vld [vmem:[%s0 + $0x3a0] sm:$0xff]
  %v128 = vld [vmem:[%s0 + $0x3a8] sm:$0xff]
  %v129 = vld [vmem:[%s0 + $0x3b0] sm:$0xff]
  %v130 = vld [vmem:[%s0 + $0x3b8] sm:$0xff]
  %v131 = vld [vmem:[%s0 + $0x3c0] sm:$0xff]
  %v132 = vld [vmem:[%s0 + $0x3c8] sm:$0xff]
  %v133 = vld [vmem:[%s0 + $0x3d0] sm:$0xff]
  %v134 = vld [vmem:[%s0 + $0x3d8] sm:$0xff]
  %v135 = vld [vmem:[%s0 + $0x3e0] sm:$0xff]
  %v136 = vld [vmem:[%s0 + $0x3e8] sm:$0xff]
  %v137 = vld [vmem:[%s0 + $0x3f0] sm:$0xff]
  %v138 = vld [vmem:[%s0 + $0x3f8] sm:$0xff]
  %v139 = vld [vmem:[%s0 + $0x400] sm:$0xff]
  %v140 = vld [vmem:[%s0 + $0x408] sm:$0xff]
  %v141 = vld [vmem:[%s0 + $0x410] sm:$0xff]
  %v142 = vld [vmem:[%s0 + $0x418] sm:$0xff]
  %v143 = vld [vmem:[%s0 + $0x420] sm:$0xff]
  %v144 = vld [vmem:[%s0 + $0x428] sm:$0xff]
  %v145 = vld [vmem:[%s0 + $0x430] sm:$0xff]
  %v146 = vld [vmem:[%s0 + $0x438] sm:$0xff]
  %v147 = vld [vmem:[%s0 + $0x440] sm:$0xff]
  %v148 = vld [vmem:[%s0 + $0x448] sm:$0xff]
  %v149 = vld [vmem:[%s0 + $0x450] sm:$0xff]
  %v150 = vld [vmem:[%s0 + $0x458] sm:$0xff]
  %v151 = vld [vmem:[%s0 + $0x460] sm:$0xff]
  %v152 = vld [vmem:[%s0 + $0x468] sm:$0xff]
  %v153 = vld [vmem:[%s0 + $0x470] sm:$0xff]
  %v154 = vld [vmem:[%s0 + $0x478] sm:$0xff]
  %v155 = vld [vmem:[%s0 + $0x480] sm:$0xff]
  %v156 = vld [vmem:[%s0 + $0x488] sm:$0xff]
  %v157 = vld [vmem:[%s0 + $0x490] sm:$0xff]
  %v158 = vld [vmem:[%s0 + $0x498] sm:$0xff]
  %v159 = vld [vmem:[%s0 + $0x4a0] sm:$0xff]
  %v160 = vld [vmem:[%s0 + $0x4a8] sm:$0xff]
  %v161 = vxor.u32 %v11, 2147483648
  %v162 = vxor.u32 %v12, 2147483648
  %v163 = vxor.u32 %v13, 2147483648
  %v164 = vxor.u32 %v14, 2147483648
  %v165 = vxor.u32 %v15, 2147483648
  %v166 = vxor.u32 %v16, 2147483648
  %v167 = vxor.u32 %v17, 2147483648
  %v168 = vxor.u32 %v18, 2147483648
  %v169 = vxor.u32 %v19, 2147483648
  %v170 = vxor.u32 %v20, 2147483648
  %v171 = vxor.u32 %v21, 2147483648
  %v172 = vxor.u32 %v22, 2147483648
  %v173 = vxor.u32 %v23, 2147483648
  %v174 = vxor.u32 %v24, 2147483648
  %v175 = vxor.u32 %v25, 2147483648
  %v176 = vxor.u32 %v26, 2147483648
  %v177 = vxor.u32 %v27, 2147483648
  %v178 = vxor.u32 %v28, 2147483648
  %v179 = vxor.u32 %v29, 2147483648
  %v180 = vxor.u32 %v30, 2147483648
  %v181 = vxor.u32 %v31, 2147483648
  %v182 = vxor.u32 %v32, 2147483648
  %v183 = vxor.u32 %v33, 2147483648
  %v184 = vxor.u32 %v34, 2147483648
  %v185 = vxor.u32 %v35, 2147483648
  %v186 = vxor.u32 %v36, 2147483648
  %v187 = vxor.u32 %v37, 2147483648
  %v188 = vxor.u32 %v38, 2147483648
  %v189 = vxor.u32 %v39, 2147483648
  %v190 = vxor.u32 %v40, 2147483648
  %v191 = vxor.u32 %v41, 2147483648
  %v192 = vxor.u32 %v42, 2147483648
  %v193 = vxor.u32 %v43, 2147483648
  %v194 = vxor.u32 %v44, 2147483648
  %v195 = vxor.u32 %v45, 2147483648
  %v196 = vxor.u32 %v46, 2147483648
  %v197 = vxor.u32 %v47, 2147483648
  %v198 = vxor.u32 %v48, 2147483648
  %v199 = vxor.u32 %v49, 2147483648
  %v200 = vxor.u32 %v50, 2147483648
  %v201 = vxor.u32 %v51, 2147483648
  %v202 = vxor.u32 %v52, 2147483648
  %v203 = vxor.u32 %v53, 2147483648
  %v204 = vxor.u32 %v54, 2147483648
  %v205 = vxor.u32 %v55, 2147483648
  %v206 = vxor.u32 %v56, 2147483648
  %v207 = vxor.u32 %v57, 2147483648
  %v208 = vxor.u32 %v58, 2147483648
  %v209 = vxor.u32 %v59, 2147483648
  %v210 = vxor.u32 %v60, 2147483648
  %v211 = vxor.u32 %v61, 2147483648
  %v212 = vxor.u32 %v62, 2147483648
  %v213 = vxor.u32 %v63, 2147483648
  %v214 = vxor.u32 %v64, 2147483648
  %v215 = vxor.u32 %v65, 2147483648
  %v216 = vxor.u32 %v66, 2147483648
  %v217 = vxor.u32 %v67, 2147483648
  %v218 = vxor.u32 %v68, 2147483648
  %v219 = vxor.u32 %v69, 2147483648
  %v220 = vxor.u32 %v70, 2147483648
  %v221 = vxor.u32 %v71, 2147483648
  %v222 = vxor.u32 %v72, 2147483648
  %v223 = vxor.u32 %v73, 2147483648
  %v224 = vxor.u32 %v74, 2147483648
  %v225 = vxor.u32 %v75, 2147483648
  %v226 = vxor.u32 %v76, 2147483648
  %v227 = vxor.u32 %v77, 2147483648
  %v228 = vxor.u32 %v78, 2147483648
  %v229 = vxor.u32 %v79, 2147483648
  %v230 = vxor.u32 %v80, 2147483648
  %v231 = vxor.u32 %v81, 2147483648
  %v232 = vxor.u32 %v82, 2147483648
  %v233 = vxor.u32 %v83, 2147483648
  %v234 = vxor.u32 %v84, 2147483648
  %v235 = vxor.u32 %v85, 2147483648
  %v236 = vxor.u32 %v86, 2147483648
  %v237 = vxor.u32 %v87, 2147483648
  %v238 = vxor.u32 %v88, 2147483648
  %v239 = vxor.u32 %v89, 2147483648
  %v240 = vxor.u32 %v90, 2147483648
  %v241 = vxor.u32 %v91, 2147483648
  %v242 = vxor.u32 %v92, 2147483648
  %v243 = vxor.u32 %v93, 2147483648
  %v244 = vxor.u32 %v94, 2147483648
  %v245 = vxor.u32 %v95, 2147483648
  %v246 = vxor.u32 %v96, 2147483648
  %v247 = vxor.u32 %v97, 2147483648
  %v248 = vxor.u32 %v98, 2147483648
  %v249 = vxor.u32 %v99, 2147483648
  %v250 = vxor.u32 %v100, 2147483648
  %v251 = vxor.u32 %v101, 2147483648
  %v252 = vxor.u32 %v102, 2147483648
  %v253 = vxor.u32 %v103, 2147483648
  %v254 = vxor.u32 %v104, 2147483648
  %v255 = vxor.u32 %v105, 2147483648
  %v256 = vxor.u32 %v106, 2147483648
  %v257 = vxor.u32 %v107, 2147483648
  %v258 = vxor.u32 %v108, 2147483648
  %v259 = vxor.u32 %v109, 2147483648
  %v260 = vxor.u32 %v110, 2147483648
  %v261 = vxor.u32 %v111, 2147483648
  %v262 = vxor.u32 %v112, 2147483648
  %v263 = vxor.u32 %v113, 2147483648
  %v264 = vxor.u32 %v114, 2147483648
  %v265 = vxor.u32 %v115, 2147483648
  %v266 = vxor.u32 %v116, 2147483648
  %v267 = vxor.u32 %v117, 2147483648
  %v268 = vxor.u32 %v118, 2147483648
  %v269 = vxor.u32 %v119, 2147483648
  %v270 = vxor.u32 %v120, 2147483648
  %v271 = vxor.u32 %v121, 2147483648
  %v272 = vxor.u32 %v122, 2147483648
  %v273 = vxor.u32 %v123, 2147483648
  %v274 = vxor.u32 %v124, 2147483648
  %v275 = vxor.u32 %v125, 2147483648
  %v276 = vxor.u32 %v126, 2147483648
  %v277 = vxor.u32 %v127, 2147483648
  %v278 = vxor.u32 %v128, 2147483648
  %v279 = vxor.u32 %v129, 2147483648
  %v280 = vxor.u32 %v130, 2147483648
  %v281 = vxor.u32 %v131, 2147483648
  %v282 = vxor.u32 %v132, 2147483648
  %v283 = vxor.u32 %v133, 2147483648
  %v284 = vxor.u32 %v134, 2147483648
  %v285 = vxor.u32 %v135, 2147483648
  %v286 = vxor.u32 %v136, 2147483648
  %v287 = vxor.u32 %v137, 2147483648
  %v288 = vxor.u32 %v138, 2147483648
  %v289 = vxor.u32 %v139, 2147483648
  %v290 = vxor.u32 %v140, 2147483648
  %v291 = vxor.u32 %v141, 2147483648
  %v292 = vxor.u32 %v142, 2147483648
  %v293 = vxor.u32 %v143, 2147483648
  %v294 = vxor.u32 %v144, 2147483648
  %v295 = vxor.u32 %v145, 2147483648
  %v296 = vxor.u32 %v146, 2147483648
  %v297 = vxor.u32 %v147, 2147483648
  %v298 = vxor.u32 %v148, 2147483648
  %v299 = vxor.u32 %v149, 2147483648
  %v300 = vxor.u32 %v150, 2147483648
  %v301 = vxor.u32 %v151, 2147483648
  %v302 = vxor.u32 %v152, 2147483648
  %v303 = vxor.u32 %v153, 2147483648
  %v304 = vxor.u32 %v154, 2147483648
  %v305 = vxor.u32 %v155, 2147483648
  %v306 = vxor.u32 %v156, 2147483648
  %v307 = vxor.u32 %v157, 2147483648
  %v308 = vxor.u32 %v158, 2147483648
  %v309 = vxor.u32 %v159, 2147483648
  %v310 = vxor.u32 %v160, 2147483648
  %v311 = vmul.f32 %v161, 1.442695
  %v312 = vpow.pop %v311
  %v313 = vmul.f32 %v162, 1.442695
  %v314 = vpow.pop %v313
  %v315 = vmul.f32 %v163, 1.442695
  %v316 = vpow.pop %v315
  %v317 = vmul.f32 %v164, 1.442695
  %v318 = vpow.pop %v317
  %v319 = vmul.f32 %v165, 1.442695
  %v320 = vpow.pop %v319
  %v321 = vmul.f32 %v166, 1.442695
  %v322 = vpow.pop %v321
  %v323 = vmul.f32 %v167, 1.442695
  %v324 = vpow.pop %v323
  %v325 = vmul.f32 %v168, 1.442695
  %v326 = vpow.pop %v325
  %v327 = vmul.f32 %v169, 1.442695
  %v328 = vpow.pop %v327
  %v329 = vmul.f32 %v170, 1.442695
  %v330 = vpow.pop %v329
  %v331 = vmul.f32 %v171, 1.442695
  %v332 = vpow.pop %v331
  %v333 = vmul.f32 %v172, 1.442695
  %v334 = vpow.pop %v333
  %v335 = vmul.f32 %v173, 1.442695
  %v336 = vpow.pop %v335
  %v337 = vmul.f32 %v174, 1.442695
  %v338 = vpow.pop %v337
  %v339 = vmul.f32 %v175, 1.442695
  %v340 = vpow.pop %v339
  %v341 = vmul.f32 %v176, 1.442695
  %v342 = vpow.pop %v341
  %v343 = vmul.f32 %v177, 1.442695
  %v344 = vpow.pop %v343
  %v345 = vmul.f32 %v178, 1.442695
  %v346 = vpow.pop %v345
  %v347 = vmul.f32 %v179, 1.442695
  %v348 = vpow.pop %v347
  %v349 = vmul.f32 %v180, 1.442695
  %v350 = vpow.pop %v349
  %v351 = vmul.f32 %v181, 1.442695
  %v352 = vpow.pop %v351
  %v353 = vmul.f32 %v182, 1.442695
  %v354 = vpow.pop %v353
  %v355 = vmul.f32 %v183, 1.442695
  %v356 = vpow.pop %v355
  %v357 = vmul.f32 %v184, 1.442695
  %v358 = vpow.pop %v357
  %v359 = vmul.f32 %v185, 1.442695
  %v360 = vpow.pop %v359
  %v361 = vmul.f32 %v186, 1.442695
  %v362 = vpow.pop %v361
  %v363 = vmul.f32 %v187, 1.442695
  %v364 = vpow.pop %v363
  %v365 = vmul.f32 %v188, 1.442695
  %v366 = vpow.pop %v365
  %v367 = vmul.f32 %v189, 1.442695
  %v368 = vpow.pop %v367
  %v369 = vmul.f32 %v190, 1.442695
  %v370 = vpow.pop %v369
  %v371 = vmul.f32 %v191, 1.442695
  %v372 = vpow.pop %v371
  %v373 = vmul.f32 %v192, 1.442695
  %v374 = vpow.pop %v373
  %v375 = vmul.f32 %v193, 1.442695
  %v376 = vpow.pop %v375
  %v377 = vmul.f32 %v194, 1.442695
  %v378 = vpow.pop %v377
  %v379 = vmul.f32 %v195, 1.442695
  %v380 = vpow.pop %v379
  %v381 = vmul.f32 %v196, 1.442695
  %v382 = vpow.pop %v381
  %v383 = vmul.f32 %v197, 1.442695
  %v384 = vpow.pop %v383
  %v385 = vmul.f32 %v198, 1.442695
  %v386 = vpow.pop %v385
  %v387 = vmul.f32 %v199, 1.442695
  %v388 = vpow.pop %v387
  %v389 = vmul.f32 %v200, 1.442695
  %v390 = vpow.pop %v389
  %v391 = vmul.f32 %v201, 1.442695
  %v392 = vpow.pop %v391
  %v393 = vmul.f32 %v202, 1.442695
  %v394 = vpow.pop %v393
  %v395 = vmul.f32 %v203, 1.442695
  %v396 = vpow.pop %v395
  %v397 = vmul.f32 %v204, 1.442695
  %v398 = vpow.pop %v397
  %v399 = vmul.f32 %v205, 1.442695
  %v400 = vpow.pop %v399
  %v401 = vmul.f32 %v206, 1.442695
  %v402 = vpow.pop %v401
  %v403 = vmul.f32 %v207, 1.442695
  %v404 = vpow.pop %v403
  %v405 = vmul.f32 %v208, 1.442695
  %v406 = vpow.pop %v405
  %v407 = vmul.f32 %v209, 1.442695
  %v408 = vpow.pop %v407
  %v409 = vmul.f32 %v210, 1.442695
  %v410 = vpow.pop %v409
  %v411 = vmul.f32 %v211, 1.442695
  %v412 = vpow.pop %v411
  %v413 = vmul.f32 %v212, 1.442695
  %v414 = vpow.pop %v413
  %v415 = vmul.f32 %v213, 1.442695
  %v416 = vpow.pop %v415
  %v417 = vmul.f32 %v214, 1.442695
  %v418 = vpow.pop %v417
  %v419 = vmul.f32 %v215, 1.442695
  %v420 = vpow.pop %v419
  %v421 = vmul.f32 %v216, 1.442695
  %v422 = vpow.pop %v421
  %v423 = vmul.f32 %v217, 1.442695
  %v424 = vpow.pop %v423
  %v425 = vmul.f32 %v218, 1.442695
  %v426 = vpow.pop %v425
  %v427 = vmul.f32 %v219, 1.442695
  %v428 = vpow.pop %v427
  %v429 = vmul.f32 %v220, 1.442695
  %v430 = vpow.pop %v429
  %v431 = vmul.f32 %v221, 1.442695
  %v432 = vpow.pop %v431
  %v433 = vmul.f32 %v222, 1.442695
  %v434 = vpow.pop %v433
  %v435 = vmul.f32 %v223, 1.442695
  %v436 = vpow.pop %v435
  %v437 = vmul.f32 %v224, 1.442695
  %v438 = vpow.pop %v437
  %v439 = vmul.f32 %v225, 1.442695
  %v440 = vpow.pop %v439
  %v441 = vmul.f32 %v226, 1.442695
  %v442 = vpow.pop %v441
  %v443 = vmul.f32 %v227, 1.442695
  %v444 = vpow.pop %v443
  %v445 = vmul.f32 %v228, 1.442695
  %v446 = vpow.pop %v445
  %v447 = vmul.f32 %v229, 1.442695
  %v448 = vpow.pop %v447
  %v449 = vmul.f32 %v230, 1.442695
  %v450 = vpow.pop %v449
  %v451 = vmul.f32 %v231, 1.442695
  %v452 = vpow.pop %v451
  %v453 = vmul.f32 %v232, 1.442695
  %v454 = vpow.pop %v453
  %v455 = vmul.f32 %v233, 1.442695
  %v456 = vpow.pop %v455
  %v457 = vmul.f32 %v234, 1.442695
  %v458 = vpow.pop %v457
  %v459 = vmul.f32 %v235, 1.442695
  %v460 = vpow.pop %v459
  %v461 = vmul.f32 %v236, 1.442695
  %v462 = vpow.pop %v461
  %v463 = vmul.f32 %v237, 1.442695
  %v464 = vpow.pop %v463
  %v465 = vmul.f32 %v238, 1.442695
  %v466 = vpow.pop %v465
  %v467 = vmul.f32 %v239, 1.442695
  %v468 = vpow.pop %v467
  %v469 = vmul.f32 %v240, 1.442695
  %v470 = vpow.pop %v469
  %v471 = vmul.f32 %v241, 1.442695
  %v472 = vpow.pop %v471
  %v473 = vmul.f32 %v242, 1.442695
  %v474 = vpow.pop %v473
  %v475 = vmul.f32 %v243, 1.442695
  %v476 = vpow.pop %v475
  %v477 = vmul.f32 %v244, 1.442695
  %v478 = vpow.pop %v477
  %v479 = vmul.f32 %v245, 1.442695
  %v480 = vpow.pop %v479
  %v481 = vmul.f32 %v246, 1.442695
  %v482 = vpow.pop %v481
  %v483 = vmul.f32 %v247, 1.442695
  %v484 = vpow.pop %v483
  %v485 = vmul.f32 %v248, 1.442695
  %v486 = vpow.pop %v485
  %v487 = vmul.f32 %v249, 1.442695
  %v488 = vpow.pop %v487
  %v489 = vmul.f32 %v250, 1.442695
  %v490 = vpow.pop %v489
  %v491 = vmul.f32 %v251, 1.442695
  %v492 = vpow.pop %v491
  %v493 = vmul.f32 %v252, 1.442695
  %v494 = vpow.pop %v493
  %v495 = vmul.f32 %v253, 1.442695
  %v496 = vpow.pop %v495
  %v497 = vmul.f32 %v254, 1.442695
  %v498 = vpow.pop %v497
  %v499 = vmul.f32 %v255, 1.442695
  %v500 = vpow.pop %v499
  %v501 = vmul.f32 %v256, 1.442695
  %v502 = vpow.pop %v501
  %v503 = vmul.f32 %v257, 1.442695
  %v504 = vpow.pop %v503
  %v505 = vmul.f32 %v258, 1.442695
  %v506 = vpow.pop %v505
  %v507 = vmul.f32 %v259, 1.442695
  %v508 = vpow.pop %v507
  %v509 = vmul.f32 %v260, 1.442695
  %v510 = vpow.pop %v509
  %v511 = vmul.f32 %v261, 1.442695
  %v512 = vpow.pop %v511
  %v513 = vmul.f32 %v262, 1.442695
  %v514 = vpow.pop %v513
  %v515 = vmul.f32 %v263, 1.442695
  %v516 = vpow.pop %v515
  %v517 = vmul.f32 %v264, 1.442695
  %v518 = vpow.pop %v517
  %v519 = vmul.f32 %v265, 1.442695
  %v520 = vpow.pop %v519
  %v521 = vmul.f32 %v266, 1.442695
  %v522 = vpow.pop %v521
  %v523 = vmul.f32 %v267, 1.442695
  %v524 = vpow.pop %v523
  %v525 = vmul.f32 %v268, 1.442695
  %v526 = vpow.pop %v525
  %v527 = vmul.f32 %v269, 1.442695
  %v528 = vpow.pop %v527
  %v529 = vmul.f32 %v270, 1.442695
  %v530 = vpow.pop %v529
  %v531 = vmul.f32 %v271, 1.442695
  %v532 = vpow.pop %v531
  %v533 = vmul.f32 %v272, 1.442695
  %v534 = vpow.pop %v533
  %v535 = vmul.f32 %v273, 1.442695
  %v536 = vpow.pop %v535
  %v537 = vmul.f32 %v274, 1.442695
  %v538 = vpow.pop %v537
  %v539 = vmul.f32 %v275, 1.442695
  %v540 = vpow.pop %v539
  %v541 = vmul.f32 %v276, 1.442695
  %v542 = vpow.pop %v541
  %v543 = vmul.f32 %v277, 1.442695
  %v544 = vpow.pop %v543
  %v545 = vmul.f32 %v278, 1.442695
  %v546 = vpow.pop %v545
  %v547 = vmul.f32 %v279, 1.442695
  %v548 = vpow.pop %v547
  %v549 = vmul.f32 %v280, 1.442695
  %v550 = vpow.pop %v549
  %v551 = vmul.f32 %v281, 1.442695
  %v552 = vpow.pop %v551
  %v553 = vmul.f32 %v282, 1.442695
  %v554 = vpow.pop %v553
  %v555 = vmul.f32 %v283, 1.442695
  %v556 = vpow.pop %v555
  %v557 = vmul.f32 %v284, 1.442695
  %v558 = vpow.pop %v557
  %v559 = vmul.f32 %v285, 1.442695
  %v560 = vpow.pop %v559
  %v561 = vmul.f32 %v286, 1.442695
  %v562 = vpow.pop %v561
  %v563 = vmul.f32 %v287, 1.442695
  %v564 = vpow.pop %v563
  %v565 = vmul.f32 %v288, 1.442695
  %v566 = vpow.pop %v565
  %v567 = vmul.f32 %v289, 1.442695
  %v568 = vpow.pop %v567
  %v569 = vmul.f32 %v290, 1.442695
  %v570 = vpow.pop %v569
  %v571 = vmul.f32 %v291, 1.442695
  %v572 = vpow.pop %v571
  %v573 = vmul.f32 %v292, 1.442695
  %v574 = vpow.pop %v573
  %v575 = vmul.f32 %v293, 1.442695
  %v576 = vpow.pop %v575
  %v577 = vmul.f32 %v294, 1.442695
  %v578 = vpow.pop %v577
  %v579 = vmul.f32 %v295, 1.442695
  %v580 = vpow.pop %v579
  %v581 = vmul.f32 %v296, 1.442695
  %v582 = vpow.pop %v581
  %v583 = vmul.f32 %v297, 1.442695
  %v584 = vpow.pop %v583
  %v585 = vmul.f32 %v298, 1.442695
  %v586 = vpow.pop %v585
  %v587 = vmul.f32 %v299, 1.442695
  %v588 = vpow.pop %v587
  %v589 = vmul.f32 %v300, 1.442695
  %v590 = vpow.pop %v589
  %v591 = vmul.f32 %v301, 1.442695
  %v592 = vpow.pop %v591
  %v593 = vmul.f32 %v302, 1.442695
  %v594 = vpow.pop %v593
  %v595 = vmul.f32 %v303, 1.442695
  %v596 = vpow.pop %v595
  %v597 = vmul.f32 %v304, 1.442695
  %v598 = vpow.pop %v597
  %v599 = vmul.f32 %v305, 1.442695
  %v600 = vpow.pop %v599
  %v601 = vmul.f32 %v306, 1.442695
  %v602 = vpow.pop %v601
  %v603 = vmul.f32 %v307, 1.442695
  %v604 = vpow.pop %v603
  %v605 = vmul.f32 %v308, 1.442695
  %v606 = vpow.pop %v605
  %v607 = vmul.f32 %v309, 1.442695
  %v608 = vpow.pop %v607
  %v609 = vmul.f32 %v310, 1.442695
  %v610 = vpow.pop %v609
  %v611 = vadd.f32 %v312, 1.0
  %v612 = vadd.f32 %v314, 1.0
  %v613 = vadd.f32 %v316, 1.0
  %v614 = vadd.f32 %v318, 1.0
  %v615 = vadd.f32 %v320, 1.0
  %v616 = vadd.f32 %v322, 1.0
  %v617 = vadd.f32 %v324, 1.0
  %v618 = vadd.f32 %v326, 1.0
  %v619 = vadd.f32 %v328, 1.0
  %v620 = vadd.f32 %v330, 1.0
  %v621 = vadd.f32 %v332, 1.0
  %v622 = vadd.f32 %v334, 1.0
  %v623 = vadd.f32 %v336, 1.0
  %v624 = vadd.f32 %v338, 1.0
  %v625 = vadd.f32 %v340, 1.0
  %v626 = vadd.f32 %v342, 1.0
  %v627 = vadd.f32 %v344, 1.0
  %v628 = vadd.f32 %v346, 1.0
  %v629 = vadd.f32 %v348, 1.0
  %v630 = vadd.f32 %v350, 1.0
  %v631 = vadd.f32 %v352, 1.0
  %v632 = vadd.f32 %v354, 1.0
  %v633 = vadd.f32 %v356, 1.0
  %v634 = vadd.f32 %v358, 1.0
  %v635 = vadd.f32 %v360, 1.0
  %v636 = vadd.f32 %v362, 1.0
  %v637 = vadd.f32 %v364, 1.0
  %v638 = vadd.f32 %v366, 1.0
  %v639 = vadd.f32 %v368, 1.0
  %v640 = vadd.f32 %v370, 1.0
  %v641 = vadd.f32 %v372, 1.0
  %v642 = vadd.f32 %v374, 1.0
  %v643 = vadd.f32 %v376, 1.0
  %v644 = vadd.f32 %v378, 1.0
  %v645 = vadd.f32 %v380, 1.0
  %v646 = vadd.f32 %v382, 1.0
  %v647 = vadd.f32 %v384, 1.0
  %v648 = vadd.f32 %v386, 1.0
  %v649 = vadd.f32 %v388, 1.0
  %v650 = vadd.f32 %v390, 1.0
  %v651 = vadd.f32 %v392, 1.0
  %v652 = vadd.f32 %v394, 1.0
  %v653 = vadd.f32 %v396, 1.0
  %v654 = vadd.f32 %v398, 1.0
  %v655 = vadd.f32 %v400, 1.0
  %v656 = vadd.f32 %v402, 1.0
  %v657 = vadd.f32 %v404, 1.0
  %v658 = vadd.f32 %v406, 1.0
  %v659 = vadd.f32 %v408, 1.0
  %v660 = vadd.f32 %v410, 1.0
  %v661 = vadd.f32 %v412, 1.0
  %v662 = vadd.f32 %v414, 1.0
  %v663 = vadd.f32 %v416, 1.0
  %v664 = vadd.f32 %v418, 1.0
  %v665 = vadd.f32 %v420, 1.0
  %v666 = vadd.f32 %v422, 1.0
  %v667 = vadd.f32 %v424, 1.0
  %v668 = vadd.f32 %v426, 1.0
  %v669 = vadd.f32 %v428, 1.0
  %v670 = vadd.f32 %v430, 1.0
  %v671 = vadd.f32 %v432, 1.0
  %v672 = vadd.f32 %v434, 1.0
  %v673 = vadd.f32 %v436, 1.0
  %v674 = vadd.f32 %v438, 1.0
  %v675 = vadd.f32 %v440, 1.0
  %v676 = vadd.f32 %v442, 1.0
  %v677 = vadd.f32 %v444, 1.0
  %v678 = vadd.f32 %v446, 1.0
  %v679 = vadd.f32 %v448, 1.0
  %v680 = vadd.f32 %v450, 1.0
  %v681 = vadd.f32 %v452, 1.0
  %v682 = vadd.f32 %v454, 1.0
  %v683 = vadd.f32 %v456, 1.0
  %v684 = vadd.f32 %v458, 1.0
  %v685 = vadd.f32 %v460, 1.0
  %v686 = vadd.f32 %v462, 1.0
  %v687 = vadd.f32 %v464, 1.0
  %v688 = vadd.f32 %v466, 1.0
  %v689 = vadd.f32 %v468, 1.0
  %v690 = vadd.f32 %v470, 1.0
  %v691 = vadd.f32 %v472, 1.0
  %v692 = vadd.f32 %v474, 1.0
  %v693 = vadd.f32 %v476, 1.0
  %v694 = vadd.f32 %v478, 1.0
  %v695 = vadd.f32 %v480, 1.0
  %v696 = vadd.f32 %v482, 1.0
  %v697 = vadd.f32 %v484, 1.0
  %v698 = vadd.f32 %v486, 1.0
  %v699 = vadd.f32 %v488, 1.0
  %v700 = vadd.f32 %v490, 1.0
  %v701 = vadd.f32 %v492, 1.0
  %v702 = vadd.f32 %v494, 1.0
  %v703 = vadd.f32 %v496, 1.0
  %v704 = vadd.f32 %v498, 1.0
  %v705 = vadd.f32 %v500, 1.0
  %v706 = vadd.f32 %v502, 1.0
  %v707 = vadd.f32 %v504, 1.0
  %v708 = vadd.f32 %v506, 1.0
  %v709 = vadd.f32 %v508, 1.0
  %v710 = vadd.f32 %v510, 1.0
  %v711 = vadd.f32 %v512, 1.0
  %v712 = vadd.f32 %v514, 1.0
  %v713 = vadd.f32 %v516, 1.0
  %v714 = vadd.f32 %v518, 1.0
  %v715 = vadd.f32 %v520, 1.0
  %v716 = vadd.f32 %v522, 1.0
  %v717 = vadd.f32 %v524, 1.0
  %v718 = vadd.f32 %v526, 1.0
  %v719 = vadd.f32 %v528, 1.0
  %v720 = vadd.f32 %v530, 1.0
  %v721 = vadd.f32 %v532, 1.0
  %v722 = vadd.f32 %v534, 1.0
  %v723 = vadd.f32 %v536, 1.0
  %v724 = vadd.f32 %v538, 1.0
  %v725 = vadd.f32 %v540, 1.0
  %v726 = vadd.f32 %v542, 1.0
  %v727 = vadd.f32 %v544, 1.0
  %v728 = vadd.f32 %v546, 1.0
  %v729 = vadd.f32 %v548, 1.0
  %v730 = vadd.f32 %v550, 1.0
  %v731 = vadd.f32 %v552, 1.0
  %v732 = vadd.f32 %v554, 1.0
  %v733 = vadd.f32 %v556, 1.0
  %v734 = vadd.f32 %v558, 1.0
  %v735 = vadd.f32 %v560, 1.0
  %v736 = vadd.f32 %v562, 1.0
  %v737 = vadd.f32 %v564, 1.0
  %v738 = vadd.f32 %v566, 1.0
  %v739 = vadd.f32 %v568, 1.0
  %v740 = vadd.f32 %v570, 1.0
  %v741 = vadd.f32 %v572, 1.0
  %v742 = vadd.f32 %v574, 1.0
  %v743 = vadd.f32 %v576, 1.0
  %v744 = vadd.f32 %v578, 1.0
  %v745 = vadd.f32 %v580, 1.0
  %v746 = vadd.f32 %v582, 1.0
  %v747 = vadd.f32 %v584, 1.0
  %v748 = vadd.f32 %v586, 1.0
  %v749 = vadd.f32 %v588, 1.0
  %v750 = vadd.f32 %v590, 1.0
  %v751 = vadd.f32 %v592, 1.0
  %v752 = vadd.f32 %v594, 1.0
  %v753 = vadd.f32 %v596, 1.0
  %v754 = vadd.f32 %v598, 1.0
  %v755 = vadd.f32 %v600, 1.0
  %v756 = vadd.f32 %v602, 1.0
  %v757 = vadd.f32 %v604, 1.0
  %v758 = vadd.f32 %v606, 1.0
  %v759 = vadd.f32 %v608, 1.0
  %v760 = vadd.f32 %v610, 1.0
  %v761 = vrcp.pop %v611
  %v762 = vmul.f32 1.0, %v761
  %v763 = vrcp.pop %v612
  %v764 = vmul.f32 1.0, %v763
  %v765 = vrcp.pop %v613
  %v766 = vmul.f32 1.0, %v765
  %v767 = vrcp.pop %v614
  %v768 = vmul.f32 1.0, %v767
  %v769 = vrcp.pop %v615
  %v770 = vmul.f32 1.0, %v769
  %v771 = vrcp.pop %v616
  %v772 = vmul.f32 1.0, %v771
  %v773 = vrcp.pop %v617
  %v774 = vmul.f32 1.0, %v773
  %v775 = vrcp.pop %v618
  %v776 = vmul.f32 1.0, %v775
  %v777 = vrcp.pop %v619
  %v778 = vmul.f32 1.0, %v777
  %v779 = vrcp.pop %v620
  %v780 = vmul.f32 1.0, %v779
  %v781 = vrcp.pop %v621
  %v782 = vmul.f32 1.0, %v781
  %v783 = vrcp.pop %v622
  %v784 = vmul.f32 1.0, %v783
  %v785 = vrcp.pop %v623
  %v786 = vmul.f32 1.0, %v785
  %v787 = vrcp.pop %v624
  %v788 = vmul.f32 1.0, %v787
  %v789 = vrcp.pop %v625
  %v790 = vmul.f32 1.0, %v789
  %v791 = vrcp.pop %v626
  %v792 = vmul.f32 1.0, %v791
  %v793 = vrcp.pop %v627
  %v794 = vmul.f32 1.0, %v793
  %v795 = vrcp.pop %v628
  %v796 = vmul.f32 1.0, %v795
  %v797 = vrcp.pop %v629
  %v798 = vmul.f32 1.0, %v797
  %v799 = vrcp.pop %v630
  %v800 = vmul.f32 1.0, %v799
  %v801 = vrcp.pop %v631
  %v802 = vmul.f32 1.0, %v801
  %v803 = vrcp.pop %v632
  %v804 = vmul.f32 1.0, %v803
  %v805 = vrcp.pop %v633
  %v806 = vmul.f32 1.0, %v805
  %v807 = vrcp.pop %v634
  %v808 = vmul.f32 1.0, %v807
  %v809 = vrcp.pop %v635
  %v810 = vmul.f32 1.0, %v809
  %v811 = vrcp.pop %v636
  %v812 = vmul.f32 1.0, %v811
  %v813 = vrcp.pop %v637
  %v814 = vmul.f32 1.0, %v813
  %v815 = vrcp.pop %v638
  %v816 = vmul.f32 1.0, %v815
  %v817 = vrcp.pop %v639
  %v818 = vmul.f32 1.0, %v817
  %v819 = vrcp.pop %v640
  %v820 = vmul.f32 1.0, %v819
  %v821 = vrcp.pop %v641
  %v822 = vmul.f32 1.0, %v821
  %v823 = vrcp.pop %v642
  %v824 = vmul.f32 1.0, %v823
  %v825 = vrcp.pop %v643
  %v826 = vmul.f32 1.0, %v825
  %v827 = vrcp.pop %v644
  %v828 = vmul.f32 1.0, %v827
  %v829 = vrcp.pop %v645
  %v830 = vmul.f32 1.0, %v829
  %v831 = vrcp.pop %v646
  %v832 = vmul.f32 1.0, %v831
  %v833 = vrcp.pop %v647
  %v834 = vmul.f32 1.0, %v833
  %v835 = vrcp.pop %v648
  %v836 = vmul.f32 1.0, %v835
  %v837 = vrcp.pop %v649
  %v838 = vmul.f32 1.0, %v837
  %v839 = vrcp.pop %v650
  %v840 = vmul.f32 1.0, %v839
  %v841 = vrcp.pop %v651
  %v842 = vmul.f32 1.0, %v841
  %v843 = vrcp.pop %v652
  %v844 = vmul.f32 1.0, %v843
  %v845 = vrcp.pop %v653
  %v846 = vmul.f32 1.0, %v845
  %v847 = vrcp.pop %v654
  %v848 = vmul.f32 1.0, %v847
  %v849 = vrcp.pop %v655
  %v850 = vmul.f32 1.0, %v849
  %v851 = vrcp.pop %v656
  %v852 = vmul.f32 1.0, %v851
  %v853 = vrcp.pop %v657
  %v854 = vmul.f32 1.0, %v853
  %v855 = vrcp.pop %v658
  %v856 = vmul.f32 1.0, %v855
  %v857 = vrcp.pop %v659
  %v858 = vmul.f32 1.0, %v857
  %v859 = vrcp.pop %v660
  %v860 = vmul.f32 1.0, %v859
  %v861 = vrcp.pop %v661
  %v862 = vmul.f32 1.0, %v861
  %v863 = vrcp.pop %v662
  %v864 = vmul.f32 1.0, %v863
  %v865 = vrcp.pop %v663
  %v866 = vmul.f32 1.0, %v865
  %v867 = vrcp.pop %v664
  %v868 = vmul.f32 1.0, %v867
  %v869 = vrcp.pop %v665
  %v870 = vmul.f32 1.0, %v869
  %v871 = vrcp.pop %v666
  %v872 = vmul.f32 1.0, %v871
  %v873 = vrcp.pop %v667
  %v874 = vmul.f32 1.0, %v873
  %v875 = vrcp.pop %v668
  %v876 = vmul.f32 1.0, %v875
  %v877 = vrcp.pop %v669
  %v878 = vmul.f32 1.0, %v877
  %v879 = vrcp.pop %v670
  %v880 = vmul.f32 1.0, %v879
  %v881 = vrcp.pop %v671
  %v882 = vmul.f32 1.0, %v881
  %v883 = vrcp.pop %v672
  %v884 = vmul.f32 1.0, %v883
  %v885 = vrcp.pop %v673
  %v886 = vmul.f32 1.0, %v885
  %v887 = vrcp.pop %v674
  %v888 = vmul.f32 1.0, %v887
  %v889 = vrcp.pop %v675
  %v890 = vmul.f32 1.0, %v889
  %v891 = vrcp.pop %v676
  %v892 = vmul.f32 1.0, %v891
  %v893 = vrcp.pop %v677
  %v894 = vmul.f32 1.0, %v893
  %v895 = vrcp.pop %v678
  %v896 = vmul.f32 1.0, %v895
  %v897 = vrcp.pop %v679
  %v898 = vmul.f32 1.0, %v897
  %v899 = vrcp.pop %v680
  %v900 = vmul.f32 1.0, %v899
  %v901 = vrcp.pop %v681
  %v902 = vmul.f32 1.0, %v901
  %v903 = vrcp.pop %v682
  %v904 = vmul.f32 1.0, %v903
  %v905 = vrcp.pop %v683
  %v906 = vmul.f32 1.0, %v905
  %v907 = vrcp.pop %v684
  %v908 = vmul.f32 1.0, %v907
  %v909 = vrcp.pop %v685
  %v910 = vmul.f32 1.0, %v909
  %v911 = vrcp.pop %v686
  %v912 = vmul.f32 1.0, %v911
  %v913 = vrcp.pop %v687
  %v914 = vmul.f32 1.0, %v913
  %v915 = vrcp.pop %v688
  %v916 = vmul.f32 1.0, %v915
  %v917 = vrcp.pop %v689
  %v918 = vmul.f32 1.0, %v917
  %v919 = vrcp.pop %v690
  %v920 = vmul.f32 1.0, %v919
  %v921 = vrcp.pop %v691
  %v922 = vmul.f32 1.0, %v921
  %v923 = vrcp.pop %v692
  %v924 = vmul.f32 1.0, %v923
  %v925 = vrcp.pop %v693
  %v926 = vmul.f32 1.0, %v925
  %v927 = vrcp.pop %v694
  %v928 = vmul.f32 1.0, %v927
  %v929 = vrcp.pop %v695
  %v930 = vmul.f32 1.0, %v929
  %v931 = vrcp.pop %v696
  %v932 = vmul.f32 1.0, %v931
  %v933 = vrcp.pop %v697
  %v934 = vmul.f32 1.0, %v933
  %v935 = vrcp.pop %v698
  %v936 = vmul.f32 1.0, %v935
  %v937 = vrcp.pop %v699
  %v938 = vmul.f32 1.0, %v937
  %v939 = vrcp.pop %v700
  %v940 = vmul.f32 1.0, %v939
  %v941 = vrcp.pop %v701
  %v942 = vmul.f32 1.0, %v941
  %v943 = vrcp.pop %v702
  %v944 = vmul.f32 1.0, %v943
  %v945 = vrcp.pop %v703
  %v946 = vmul.f32 1.0, %v945
  %v947 = vrcp.pop %v704
  %v948 = vmul.f32 1.0, %v947
  %v949 = vrcp.pop %v705
  %v950 = vmul.f32 1.0, %v949
  %v951 = vrcp.pop %v706
  %v952 = vmul.f32 1.0, %v951
  %v953 = vrcp.pop %v707
  %v954 = vmul.f32 1.0, %v953
  %v955 = vrcp.pop %v708
  %v956 = vmul.f32 1.0, %v955
  %v957 = vrcp.pop %v709
  %v958 = vmul.f32 1.0, %v957
  %v959 = vrcp.pop %v710
  %v960 = vmul.f32 1.0, %v959
  %v961 = vrcp.pop %v711
  %v962 = vmul.f32 1.0, %v961
  %v963 = vrcp.pop %v712
  %v964 = vmul.f32 1.0, %v963
  %v965 = vrcp.pop %v713
  %v966 = vmul.f32 1.0, %v965
  %v967 = vrcp.pop %v714
  %v968 = vmul.f32 1.0, %v967
  %v969 = vrcp.pop %v715
  %v970 = vmul.f32 1.0, %v969
  %v971 = vrcp.pop %v716
  %v972 = vmul.f32 1.0, %v971
  %v973 = vrcp.pop %v717
  %v974 = vmul.f32 1.0, %v973
  %v975 = vrcp.pop %v718
  %v976 = vmul.f32 1.0, %v975
  %v977 = vrcp.pop %v719
  %v978 = vmul.f32 1.0, %v977
  %v979 = vrcp.pop %v720
  %v980 = vmul.f32 1.0, %v979
  %v981 = vrcp.pop %v721
  %v982 = vmul.f32 1.0, %v981
  %v983 = vrcp.pop %v722
  %v984 = vmul.f32 1.0, %v983
  %v985 = vrcp.pop %v723
  %v986 = vmul.f32 1.0, %v985
  %v987 = vrcp.pop %v724
  %v988 = vmul.f32 1.0, %v987
  %v989 = vrcp.pop %v725
  %v990 = vmul.f32 1.0, %v989
  %v991 = vrcp.pop %v726
  %v992 = vmul.f32 1.0, %v991
  %v993 = vrcp.pop %v727
  %v994 = vmul.f32 1.0, %v993
  %v995 = vrcp.pop %v728
  %v996 = vmul.f32 1.0, %v995
  %v997 = vrcp.pop %v729
  %v998 = vmul.f32 1.0, %v997
  %v999 = vrcp.pop %v730
  %v1000 = vmul.f32 1.0, %v999
  %v1001 = vrcp.pop %v731
  %v1002 = vmul.f32 1.0, %v1001
  %v1003 = vrcp.pop %v732
  %v1004 = vmul.f32 1.0, %v1003
  %v1005 = vrcp.pop %v733
  %v1006 = vmul.f32 1.0, %v1005
  %v1007 = vrcp.pop %v734
  %v1008 = vmul.f32 1.0, %v1007
  %v1009 = vrcp.pop %v735
  %v1010 = vmul.f32 1.0, %v1009
  %v1011 = vrcp.pop %v736
  %v1012 = vmul.f32 1.0, %v1011
  %v1013 = vrcp.pop %v737
  %v1014 = vmul.f32 1.0, %v1013
  %v1015 = vrcp.pop %v738
  %v1016 = vmul.f32 1.0, %v1015
  %v1017 = vrcp.pop %v739
  %v1018 = vmul.f32 1.0, %v1017
  %v1019 = vrcp.pop %v740
  %v1020 = vmul.f32 1.0, %v1019
  %v1021 = vrcp.pop %v741
  %v1022 = vmul.f32 1.0, %v1021
  %v1023 = vrcp.pop %v742
  %v1024 = vmul.f32 1.0, %v1023
  %v1025 = vrcp.pop %v743
  %v1026 = vmul.f32 1.0, %v1025
  %v1027 = vrcp.pop %v744
  %v1028 = vmul.f32 1.0, %v1027
  %v1029 = vrcp.pop %v745
  %v1030 = vmul.f32 1.0, %v1029
  %v1031 = vrcp.pop %v746
  %v1032 = vmul.f32 1.0, %v1031
  %v1033 = vrcp.pop %v747
  %v1034 = vmul.f32 1.0, %v1033
  %v1035 = vrcp.pop %v748
  %v1036 = vmul.f32 1.0, %v1035
  %v1037 = vrcp.pop %v749
  %v1038 = vmul.f32 1.0, %v1037
  %v1039 = vrcp.pop %v750
  %v1040 = vmul.f32 1.0, %v1039
  %v1041 = vrcp.pop %v751
  %v1042 = vmul.f32 1.0, %v1041
  %v1043 = vrcp.pop %v752
  %v1044 = vmul.f32 1.0, %v1043
  %v1045 = vrcp.pop %v753
  %v1046 = vmul.f32 1.0, %v1045
  %v1047 = vrcp.pop %v754
  %v1048 = vmul.f32 1.0, %v1047
  %v1049 = vrcp.pop %v755
  %v1050 = vmul.f32 1.0, %v1049
  %v1051 = vrcp.pop %v756
  %v1052 = vmul.f32 1.0, %v1051
  %v1053 = vrcp.pop %v757
  %v1054 = vmul.f32 1.0, %v1053
  %v1055 = vrcp.pop %v758
  %v1056 = vmul.f32 1.0, %v1055
  %v1057 = vrcp.pop %v759
  %v1058 = vmul.f32 1.0, %v1057
  %v1059 = vrcp.pop %v760
  %v1060 = vmul.f32 1.0, %v1059
  %v1061 = vld [vmem:[%s1] sm:$0xff]
  %v1062 = vld [vmem:[%s1 + $0x8] sm:$0xff]
  %v1063 = vld [vmem:[%s1 + $0x10] sm:$0xff]
  %v1064 = vld [vmem:[%s1 + $0x18] sm:$0xff]
  %v1065 = vld [vmem:[%s1 + $0x20] sm:$0xff]
  %v1066 = vld [vmem:[%s1 + $0x28] sm:$0xff]
  %v1067 = vld [vmem:[%s1 + $0x30] sm:$0xff]
  %v1068 = vld [vmem:[%s1 + $0x38] sm:$0xff]
  %v1069 = vld [vmem:[%s1 + $0x40] sm:$0xff]
  %v1070 = vld [vmem:[%s1 + $0x48] sm:$0xff]
  %v1071 = vld [vmem:[%s1 + $0x50] sm:$0xff]
  %v1072 = vld [vmem:[%s1 + $0x58] sm:$0xff]
  %v1073 = vld [vmem:[%s1 + $0x60] sm:$0xff]
  %v1074 = vld [vmem:[%s1 + $0x68] sm:$0xff]
  %v1075 = vld [vmem:[%s1 + $0x70] sm:$0xff]
  %v1076 = vld [vmem:[%s1 + $0x78] sm:$0xff]
  %v1077 = vld [vmem:[%s1 + $0x80] sm:$0xff]
  %v1078 = vld [vmem:[%s1 + $0x88] sm:$0xff]
  %v1079 = vld [vmem:[%s1 + $0x90] sm:$0xff]
  %v1080 = vld [vmem:[%s1 + $0x98] sm:$0xff]
  %v1081 = vld [vmem:[%s1 + $0xa0] sm:$0xff]
  %v1082 = vld [vmem:[%s1 + $0xa8] sm:$0xff]
  %v1083 = vld [vmem:[%s1 + $0xb0] sm:$0xff]
  %v1084 = vld [vmem:[%s1 + $0xb8] sm:$0xff]
  %v1085 = vld [vmem:[%s1 + $0xc0] sm:$0xff]
  %v1086 = vld [vmem:[%s1 + $0xc8] sm:$0xff]
  %v1087 = vld [vmem:[%s1 + $0xd0] sm:$0xff]
  %v1088 = vld [vmem:[%s1 + $0xd8] sm:$0xff]
  %v1089 = vld [vmem:[%s1 + $0xe0] sm:$0xff]
  %v1090 = vld [vmem:[%s1 + $0xe8] sm:$0xff]
  %v1091 = vld [vmem:[%s1 + $0xf0] sm:$0xff]
  %v1092 = vld [vmem:[%s1 + $0xf8] sm:$0xff]
  %v1093 = vld [vmem:[%s1 + $0x100] sm:$0xff]
  %v1094 = vld [vmem:[%s1 + $0x108] sm:$0xff]
  %v1095 = vld [vmem:[%s1 + $0x110] sm:$0xff]
  %v1096 = vld [vmem:[%s1 + $0x118] sm:$0xff]
  %v1097 = vld [vmem:[%s1 + $0x120] sm:$0xff]
  %v1098 = vld [vmem:[%s1 + $0x128] sm:$0xff]
  %v1099 = vld [vmem:[%s1 + $0x130] sm:$0xff]
  %v1100 = vld [vmem:[%s1 + $0x138] sm:$0xff]
  %v1101 = vld [vmem:[%s1 + $0x140] sm:$0xff]
  %v1102 = vld [vmem:[%s1 + $0x148] sm:$0xff]
  %v1103 = vld [vmem:[%s1 + $0x150] sm:$0xff]
  %v1104 = vld [vmem:[%s1 + $0x158] sm:$0xff]
  %v1105 = vld [vmem:[%s1 + $0x160] sm:$0xff]
  %v1106 = vld [vmem:[%s1 + $0x168] sm:$0xff]
  %v1107 = vld [vmem:[%s1 + $0x170] sm:$0xff]
  %v1108 = vld [vmem:[%s1 + $0x178] sm:$0xff]
  %v1109 = vld [vmem:[%s1 + $0x180] sm:$0xff]
  %v1110 = vld [vmem:[%s1 + $0x188] sm:$0xff]
  %v1111 = vld [vmem:[%s1 + $0x190] sm:$0xff]
  %v1112 = vld [vmem:[%s1 + $0x198] sm:$0xff]
  %v1113 = vld [vmem:[%s1 + $0x1a0] sm:$0xff]
  %v1114 = vld [vmem:[%s1 + $0x1a8] sm:$0xff]
  %v1115 = vld [vmem:[%s1 + $0x1b0] sm:$0xff]
  %v1116 = vld [vmem:[%s1 + $0x1b8] sm:$0xff]
  %v1117 = vld [vmem:[%s1 + $0x1c0] sm:$0xff]
  %v1118 = vld [vmem:[%s1 + $0x1c8] sm:$0xff]
  %v1119 = vld [vmem:[%s1 + $0x1d0] sm:$0xff]
  %v1120 = vld [vmem:[%s1 + $0x1d8] sm:$0xff]
  %v1121 = vld [vmem:[%s1 + $0x1e0] sm:$0xff]
  %v1122 = vld [vmem:[%s1 + $0x1e8] sm:$0xff]
  %v1123 = vld [vmem:[%s1 + $0x1f0] sm:$0xff]
  %v1124 = vld [vmem:[%s1 + $0x1f8] sm:$0xff]
  %v1125 = vld [vmem:[%s1 + $0x200] sm:$0xff]
  %v1126 = vld [vmem:[%s1 + $0x208] sm:$0xff]
  %v1127 = vld [vmem:[%s1 + $0x210] sm:$0xff]
  %v1128 = vld [vmem:[%s1 + $0x218] sm:$0xff]
  %v1129 = vld [vmem:[%s1 + $0x220] sm:$0xff]
  %v1130 = vld [vmem:[%s1 + $0x228] sm:$0xff]
  %v1131 = vld [vmem:[%s1 + $0x230] sm:$0xff]
  %v1132 = vld [vmem:[%s1 + $0x238] sm:$0xff]
  %v1133 = vld [vmem:[%s1 + $0x240] sm:$0xff]
  %v1134 = vld [vmem:[%s1 + $0x248] sm:$0xff]
  %v1135 = vld [vmem:[%s1 + $0x250] sm:$0xff]
  %v1136 = vld [vmem:[%s1 + $0x258] sm:$0xff]
  %v1137 = vld [vmem:[%s1 + $0x260] sm:$0xff]
  %v1138 = vld [vmem:[%s1 + $0x268] sm:$0xff]
  %v1139 = vld [vmem:[%s1 + $0x270] sm:$0xff]
  %v1140 = vld [vmem:[%s1 + $0x278] sm:$0xff]
  %v1141 = vld [vmem:[%s1 + $0x280] sm:$0xff]
  %v1142 = vld [vmem:[%s1 + $0x288] sm:$0xff]
  %v1143 = vld [vmem:[%s1 + $0x290] sm:$0xff]
  %v1144 = vld [vmem:[%s1 + $0x298] sm:$0xff]
  %v1145 = vld [vmem:[%s1 + $0x2a0] sm:$0xff]
  %v1146 = vld [vmem:[%s1 + $0x2a8] sm:$0xff]
  %v1147 = vld [vmem:[%s1 + $0x2b0] sm:$0xff]
  %v1148 = vld [vmem:[%s1 + $0x2b8] sm:$0xff]
  %v1149 = vld [vmem:[%s1 + $0x2c0] sm:$0xff]
  %v1150 = vld [vmem:[%s1 + $0x2c8] sm:$0xff]
  %v1151 = vld [vmem:[%s1 + $0x2d0] sm:$0xff]
  %v1152 = vld [vmem:[%s1 + $0x2d8] sm:$0xff]
  %v1153 = vld [vmem:[%s1 + $0x2e0] sm:$0xff]
  %v1154 = vld [vmem:[%s1 + $0x2e8] sm:$0xff]
  %v1155 = vld [vmem:[%s1 + $0x2f0] sm:$0xff]
  %v1156 = vld [vmem:[%s1 + $0x2f8] sm:$0xff]
  %v1157 = vld [vmem:[%s1 + $0x300] sm:$0xff]
  %v1158 = vld [vmem:[%s1 + $0x308] sm:$0xff]
  %v1159 = vld [vmem:[%s1 + $0x310] sm:$0xff]
  %v1160 = vld [vmem:[%s1 + $0x318] sm:$0xff]
  %v1161 = vld [vmem:[%s1 + $0x320] sm:$0xff]
  %v1162 = vld [vmem:[%s1 + $0x328] sm:$0xff]
  %v1163 = vld [vmem:[%s1 + $0x330] sm:$0xff]
  %v1164 = vld [vmem:[%s1 + $0x338] sm:$0xff]
  %v1165 = vld [vmem:[%s1 + $0x340] sm:$0xff]
  %v1166 = vld [vmem:[%s1 + $0x348] sm:$0xff]
  %v1167 = vld [vmem:[%s1 + $0x350] sm:$0xff]
  %v1168 = vld [vmem:[%s1 + $0x358] sm:$0xff]
  %v1169 = vld [vmem:[%s1 + $0x360] sm:$0xff]
  %v1170 = vld [vmem:[%s1 + $0x368] sm:$0xff]
  %v1171 = vld [vmem:[%s1 + $0x370] sm:$0xff]
  %v1172 = vld [vmem:[%s1 + $0x378] sm:$0xff]
  %v1173 = vld [vmem:[%s1 + $0x380] sm:$0xff]
  %v1174 = vld [vmem:[%s1 + $0x388] sm:$0xff]
  %v1175 = vld [vmem:[%s1 + $0x390] sm:$0xff]
  %v1176 = vld [vmem:[%s1 + $0x398] sm:$0xff]
  %v1177 = vld [vmem:[%s1 + $0x3a0] sm:$0xff]
  %v1178 = vld [vmem:[%s1 + $0x3a8] sm:$0xff]
  %v1179 = vld [vmem:[%s1 + $0x3b0] sm:$0xff]
  %v1180 = vld [vmem:[%s1 + $0x3b8] sm:$0xff]
  %v1181 = vld [vmem:[%s1 + $0x3c0] sm:$0xff]
  %v1182 = vld [vmem:[%s1 + $0x3c8] sm:$0xff]
  %v1183 = vld [vmem:[%s1 + $0x3d0] sm:$0xff]
  %v1184 = vld [vmem:[%s1 + $0x3d8] sm:$0xff]
  %v1185 = vld [vmem:[%s1 + $0x3e0] sm:$0xff]
  %v1186 = vld [vmem:[%s1 + $0x3e8] sm:$0xff]
  %v1187 = vld [vmem:[%s1 + $0x3f0] sm:$0xff]
  %v1188 = vld [vmem:[%s1 + $0x3f8] sm:$0xff]
  %v1189 = vld [vmem:[%s1 + $0x400] sm:$0xff]
  %v1190 = vld [vmem:[%s1 + $0x408] sm:$0xff]
  %v1191 = vld [vmem:[%s1 + $0x410] sm:$0xff]
  %v1192 = vld [vmem:[%s1 + $0x418] sm:$0xff]
  %v1193 = vld [vmem:[%s1 + $0x420] sm:$0xff]
  %v1194 = vld [vmem:[%s1 + $0x428] sm:$0xff]
  %v1195 = vld [vmem:[%s1 + $0x430] sm:$0xff]
  %v1196 = vld [vmem:[%s1 + $0x438] sm:$0xff]
  %v1197 = vld [vmem:[%s1 + $0x440] sm:$0xff]
  %v1198 = vld [vmem:[%s1 + $0x448] sm:$0xff]
  %v1199 = vld [vmem:[%s1 + $0x450] sm:$0xff]
  %v1200 = vld [vmem:[%s1 + $0x458] sm:$0xff]
  %v1201 = vld [vmem:[%s1 + $0x460] sm:$0xff]
  %v1202 = vld [vmem:[%s1 + $0x468] sm:$0xff]
  %v1203 = vld [vmem:[%s1 + $0x470] sm:$0xff]
  %v1204 = vld [vmem:[%s1 + $0x478] sm:$0xff]
  %v1205 = vld [vmem:[%s1 + $0x480] sm:$0xff]
  %v1206 = vld [vmem:[%s1 + $0x488] sm:$0xff]
  %v1207 = vld [vmem:[%s1 + $0x490] sm:$0xff]
  %v1208 = vld [vmem:[%s1 + $0x498] sm:$0xff]
  %v1209 = vld [vmem:[%s1 + $0x4a0] sm:$0xff]
  %v1210 = vld [vmem:[%s1 + $0x4a8] sm:$0xff]
  %v1211 = vld [vmem:[%s1 + $0x4b0] sm:$0xff]
  %v1212 = vld [vmem:[%s1 + $0x4b8] sm:$0xff]
  %v1213 = vld [vmem:[%s1 + $0x4c0] sm:$0xff]
  %v1214 = vld [vmem:[%s1 + $0x4c8] sm:$0xff]
  %v1215 = vld [vmem:[%s1 + $0x4d0] sm:$0xff]
  %v1216 = vld [vmem:[%s1 + $0x4d8] sm:$0xff]
  %v1217 = vld [vmem:[%s1 + $0x4e0] sm:$0xff]
  %v1218 = vld [vmem:[%s1 + $0x4e8] sm:$0xff]
  %v1219 = vld [vmem:[%s1 + $0x4f0] sm:$0xff]
  %v1220 = vld [vmem:[%s1 + $0x4f8] sm:$0xff]
  %v1221 = vld [vmem:[%s1 + $0x500] sm:$0xff]
  %v1222 = vld [vmem:[%s1 + $0x508] sm:$0xff]
  %v1223 = vld [vmem:[%s1 + $0x510] sm:$0xff]
  %v1224 = vld [vmem:[%s1 + $0x518] sm:$0xff]
  %v1225 = vld [vmem:[%s1 + $0x520] sm:$0xff]
  %v1226 = vld [vmem:[%s1 + $0x528] sm:$0xff]
  %v1227 = vld [vmem:[%s1 + $0x530] sm:$0xff]
  %v1228 = vld [vmem:[%s1 + $0x538] sm:$0xff]
  %v1229 = vld [vmem:[%s1 + $0x540] sm:$0xff]
  %v1230 = vld [vmem:[%s1 + $0x548] sm:$0xff]
  %v1231 = vld [vmem:[%s1 + $0x550] sm:$0xff]
  %v1232 = vld [vmem:[%s1 + $0x558] sm:$0xff]
  %v1233 = vld [vmem:[%s1 + $0x560] sm:$0xff]
  %v1234 = vld [vmem:[%s1 + $0x568] sm:$0xff]
  %v1235 = vld [vmem:[%s1 + $0x570] sm:$0xff]
  %v1236 = vld [vmem:[%s1 + $0x578] sm:$0xff]
  %v1237 = vld [vmem:[%s1 + $0x580] sm:$0xff]
  %v1238 = vld [vmem:[%s1 + $0x588] sm:$0xff]
  %v1239 = vld [vmem:[%s1 + $0x590] sm:$0xff]
  %v1240 = vld [vmem:[%s1 + $0x598] sm:$0xff]
  %v1241 = vld [vmem:[%s1 + $0x5a0] sm:$0xff]
  %v1242 = vld [vmem:[%s1 + $0x5a8] sm:$0xff]
  %v1243 = vld [vmem:[%s1 + $0x5b0] sm:$0xff]
  %v1244 = vld [vmem:[%s1 + $0x5b8] sm:$0xff]
  %v1245 = vld [vmem:[%s1 + $0x5c0] sm:$0xff]
  %v1246 = vld [vmem:[%s1 + $0x5c8] sm:$0xff]
  %v1247 = vld [vmem:[%s1 + $0x5d0] sm:$0xff]
  %v1248 = vld [vmem:[%s1 + $0x5d8] sm:$0xff]
  %v1249 = vld [vmem:[%s1 + $0x5e0] sm:$0xff]
  %v1250 = vld [vmem:[%s1 + $0x5e8] sm:$0xff]
  %v1251 = vld [vmem:[%s1 + $0x5f0] sm:$0xff]
  %v1252 = vld [vmem:[%s1 + $0x5f8] sm:$0xff]
  %v1253 = vld [vmem:[%s1 + $0x600] sm:$0xff]
  %v1254 = vld [vmem:[%s1 + $0x608] sm:$0xff]
  %v1255 = vld [vmem:[%s1 + $0x610] sm:$0xff]
  %v1256 = vld [vmem:[%s1 + $0x618] sm:$0xff]
  %v1257 = vld [vmem:[%s1 + $0x620] sm:$0xff]
  %v1258 = vld [vmem:[%s1 + $0x628] sm:$0xff]
  %v1259 = vld [vmem:[%s1 + $0x630] sm:$0xff]
  %v1260 = vld [vmem:[%s1 + $0x638] sm:$0xff]
  %v1261 = vld [vmem:[%s1 + $0x640] sm:$0xff]
  %v1262 = vld [vmem:[%s1 + $0x648] sm:$0xff]
  %v1263 = vld [vmem:[%s1 + $0x650] sm:$0xff]
  %v1264 = vld [vmem:[%s1 + $0x658] sm:$0xff]
  %v1265 = vld [vmem:[%s1 + $0x660] sm:$0xff]
  %v1266 = vld [vmem:[%s1 + $0x668] sm:$0xff]
  %v1267 = vld [vmem:[%s1 + $0x670] sm:$0xff]
  %v1268 = vld [vmem:[%s1 + $0x678] sm:$0xff]
  %v1269 = vld [vmem:[%s1 + $0x680] sm:$0xff]
  %v1270 = vld [vmem:[%s1 + $0x688] sm:$0xff]
  %v1271 = vld [vmem:[%s1 + $0x690] sm:$0xff]
  %v1272 = vld [vmem:[%s1 + $0x698] sm:$0xff]
  %v1273 = vld [vmem:[%s1 + $0x6a0] sm:$0xff]
  %v1274 = vld [vmem:[%s1 + $0x6a8] sm:$0xff]
  %v1275 = vld [vmem:[%s1 + $0x6b0] sm:$0xff]
  %v1276 = vld [vmem:[%s1 + $0x6b8] sm:$0xff]
  %v1277 = vld [vmem:[%s1 + $0x6c0] sm:$0xff]
  %v1278 = vld [vmem:[%s1 + $0x6c8] sm:$0xff]
  %v1279 = vld [vmem:[%s1 + $0x6d0] sm:$0xff]
  %v1280 = vld [vmem:[%s1 + $0x6d8] sm:$0xff]
  %v1281 = vld [vmem:[%s1 + $0x6e0] sm:$0xff]
  %v1282 = vld [vmem:[%s1 + $0x6e8] sm:$0xff]
  %v1283 = vld [vmem:[%s1 + $0x6f0] sm:$0xff]
  %v1284 = vld [vmem:[%s1 + $0x6f8] sm:$0xff]
  %v1285 = vld [vmem:[%s1 + $0x700] sm:$0xff]
  %v1286 = vld [vmem:[%s1 + $0x708] sm:$0xff]
  %v1287 = vld [vmem:[%s1 + $0x710] sm:$0xff]
  %v1288 = vld [vmem:[%s1 + $0x718] sm:$0xff]
  %v1289 = vld [vmem:[%s1 + $0x720] sm:$0xff]
  %v1290 = vld [vmem:[%s1 + $0x728] sm:$0xff]
  %v1291 = vld [vmem:[%s1 + $0x730] sm:$0xff]
  %v1292 = vld [vmem:[%s1 + $0x738] sm:$0xff]
  %v1293 = vld [vmem:[%s1 + $0x740] sm:$0xff]
  %v1294 = vld [vmem:[%s1 + $0x748] sm:$0xff]
  %v1295 = vld [vmem:[%s1 + $0x750] sm:$0xff]
  %v1296 = vld [vmem:[%s1 + $0x758] sm:$0xff]
  %v1297 = vld [vmem:[%s1 + $0x760] sm:$0xff]
  %v1298 = vld [vmem:[%s1 + $0x768] sm:$0xff]
  %v1299 = vld [vmem:[%s1 + $0x770] sm:$0xff]
  %v1300 = vld [vmem:[%s1 + $0x778] sm:$0xff]
  %v1301 = vld [vmem:[%s1 + $0x780] sm:$0xff]
  %v1302 = vld [vmem:[%s1 + $0x788] sm:$0xff]
  %v1303 = vld [vmem:[%s1 + $0x790] sm:$0xff]
  %v1304 = vld [vmem:[%s1 + $0x798] sm:$0xff]
  %v1305 = vld [vmem:[%s1 + $0x7a0] sm:$0xff]
  %v1306 = vld [vmem:[%s1 + $0x7a8] sm:$0xff]
  %v1307 = vld [vmem:[%s1 + $0x7b0] sm:$0xff]
  %v1308 = vld [vmem:[%s1 + $0x7b8] sm:$0xff]
  %v1309 = vld [vmem:[%s1 + $0x7c0] sm:$0xff]
  %v1310 = vld [vmem:[%s1 + $0x7c8] sm:$0xff]
  %v1311 = vld [vmem:[%s1 + $0x7d0] sm:$0xff]
  %v1312 = vld [vmem:[%s1 + $0x7d8] sm:$0xff]
  %v1313 = vld [vmem:[%s1 + $0x7e0] sm:$0xff]
  %v1314 = vld [vmem:[%s1 + $0x7e8] sm:$0xff]
  %v1315 = vld [vmem:[%s1 + $0x7f0] sm:$0xff]
  %v1316 = vld [vmem:[%s1 + $0x7f8] sm:$0xff]
  %v1317 = vld [vmem:[%s1 + $0x800] sm:$0xff]
  %v1318 = vld [vmem:[%s1 + $0x808] sm:$0xff]
  %v1319 = vld [vmem:[%s1 + $0x810] sm:$0xff]
  %v1320 = vld [vmem:[%s1 + $0x818] sm:$0xff]
  %v1321 = vld [vmem:[%s1 + $0x820] sm:$0xff]
  %v1322 = vld [vmem:[%s1 + $0x828] sm:$0xff]
  %v1323 = vld [vmem:[%s1 + $0x830] sm:$0xff]
  %v1324 = vld [vmem:[%s1 + $0x838] sm:$0xff]
  %v1325 = vld [vmem:[%s1 + $0x840] sm:$0xff]
  %v1326 = vld [vmem:[%s1 + $0x848] sm:$0xff]
  %v1327 = vld [vmem:[%s1 + $0x850] sm:$0xff]
  %v1328 = vld [vmem:[%s1 + $0x858] sm:$0xff]
  %v1329 = vld [vmem:[%s1 + $0x860] sm:$0xff]
  %v1330 = vld [vmem:[%s1 + $0x868] sm:$0xff]
  %v1331 = vld [vmem:[%s1 + $0x870] sm:$0xff]
  %v1332 = vld [vmem:[%s1 + $0x878] sm:$0xff]
  %v1333 = vld [vmem:[%s1 + $0x880] sm:$0xff]
  %v1334 = vld [vmem:[%s1 + $0x888] sm:$0xff]
  %v1335 = vld [vmem:[%s1 + $0x890] sm:$0xff]
  %v1336 = vld [vmem:[%s1 + $0x898] sm:$0xff]
  %v1337 = vld [vmem:[%s1 + $0x8a0] sm:$0xff]
  %v1338 = vld [vmem:[%s1 + $0x8a8] sm:$0xff]
  %v1339 = vld [vmem:[%s1 + $0x8b0] sm:$0xff]
  %v1340 = vld [vmem:[%s1 + $0x8b8] sm:$0xff]
  %v1341 = vld [vmem:[%s1 + $0x8c0] sm:$0xff]
  %v1342 = vld [vmem:[%s1 + $0x8c8] sm:$0xff]
  %v1343 = vld [vmem:[%s1 + $0x8d0] sm:$0xff]
  %v1344 = vld [vmem:[%s1 + $0x8d8] sm:$0xff]
  %v1345 = vld [vmem:[%s1 + $0x8e0] sm:$0xff]
  %v1346 = vld [vmem:[%s1 + $0x8e8] sm:$0xff]
  %v1347 = vld [vmem:[%s1 + $0x8f0] sm:$0xff]
  %v1348 = vld [vmem:[%s1 + $0x8f8] sm:$0xff]
  %v1349 = vld [vmem:[%s1 + $0x900] sm:$0xff]
  %v1350 = vld [vmem:[%s1 + $0x908] sm:$0xff]
  %v1351 = vld [vmem:[%s1 + $0x910] sm:$0xff]
  %v1352 = vld [vmem:[%s1 + $0x918] sm:$0xff]
  %v1353 = vld [vmem:[%s1 + $0x920] sm:$0xff]
  %v1354 = vld [vmem:[%s1 + $0x928] sm:$0xff]
  %v1355 = vld [vmem:[%s1 + $0x930] sm:$0xff]
  %v1356 = vld [vmem:[%s1 + $0x938] sm:$0xff]
  %v1357 = vld [vmem:[%s1 + $0x940] sm:$0xff]
  %v1358 = vld [vmem:[%s1 + $0x948] sm:$0xff]
  %v1359 = vld [vmem:[%s1 + $0x950] sm:$0xff]
  %v1360 = vld [vmem:[%s1 + $0x958] sm:$0xff]
  %1362 = vset.pattern.permute.xlu0 0
  %1363 = vperm.xlu0 %1362, %v762
  %v1364 = vpop.permute.xlu0 %1363
  %1367 = vset.pattern.permute.xlu0 0
  %1368 = vperm.xlu0 %1367, %v764
  %v1369 = vpop.permute.xlu0 %1368
  %1372 = vset.pattern.permute.xlu0 0
  %1373 = vperm.xlu0 %1372, %v766
  %v1374 = vpop.permute.xlu0 %1373
  %1377 = vset.pattern.permute.xlu0 0
  %1378 = vperm.xlu0 %1377, %v768
  %v1379 = vpop.permute.xlu0 %1378
  %1382 = vset.pattern.permute.xlu0 0
  %1383 = vperm.xlu0 %1382, %v770
  %v1384 = vpop.permute.xlu0 %1383
  %1387 = vset.pattern.permute.xlu0 0
  %1388 = vperm.xlu0 %1387, %v772
  %v1389 = vpop.permute.xlu0 %1388
  %1392 = vset.pattern.permute.xlu0 0
  %1393 = vperm.xlu0 %1392, %v774
  %v1394 = vpop.permute.xlu0 %1393
  %1397 = vset.pattern.permute.xlu0 0
  %1398 = vperm.xlu0 %1397, %v776
  %v1399 = vpop.permute.xlu0 %1398
  %1402 = vset.pattern.permute.xlu0 0
  %1403 = vperm.xlu0 %1402, %v778
  %v1404 = vpop.permute.xlu0 %1403
  %1407 = vset.pattern.permute.xlu0 0
  %1408 = vperm.xlu0 %1407, %v780
  %v1409 = vpop.permute.xlu0 %1408
  %1412 = vset.pattern.permute.xlu0 0
  %1413 = vperm.xlu0 %1412, %v782
  %v1414 = vpop.permute.xlu0 %1413
  %1417 = vset.pattern.permute.xlu0 0
  %1418 = vperm.xlu0 %1417, %v784
  %v1419 = vpop.permute.xlu0 %1418
  %1422 = vset.pattern.permute.xlu0 0
  %1423 = vperm.xlu0 %1422, %v786
  %v1424 = vpop.permute.xlu0 %1423
  %1427 = vset.pattern.permute.xlu0 0
  %1428 = vperm.xlu0 %1427, %v788
  %v1429 = vpop.permute.xlu0 %1428
  %1432 = vset.pattern.permute.xlu0 0
  %1433 = vperm.xlu0 %1432, %v790
  %v1434 = vpop.permute.xlu0 %1433
  %1437 = vset.pattern.permute.xlu0 0
  %1438 = vperm.xlu0 %1437, %v792
  %v1439 = vpop.permute.xlu0 %1438
  %1442 = vset.pattern.permute.xlu0 0
  %1443 = vperm.xlu0 %1442, %v794
  %v1444 = vpop.permute.xlu0 %1443
  %1447 = vset.pattern.permute.xlu0 0
  %1448 = vperm.xlu0 %1447, %v796
  %v1449 = vpop.permute.xlu0 %1448
  %1452 = vset.pattern.permute.xlu0 0
  %1453 = vperm.xlu0 %1452, %v798
  %v1454 = vpop.permute.xlu0 %1453
  %1457 = vset.pattern.permute.xlu0 0
  %1458 = vperm.xlu0 %1457, %v800
  %v1459 = vpop.permute.xlu0 %1458
  %1462 = vset.pattern.permute.xlu0 0
  %1463 = vperm.xlu0 %1462, %v802
  %v1464 = vpop.permute.xlu0 %1463
  %1467 = vset.pattern.permute.xlu0 0
  %1468 = vperm.xlu0 %1467, %v804
  %v1469 = vpop.permute.xlu0 %1468
  %1472 = vset.pattern.permute.xlu0 0
  %1473 = vperm.xlu0 %1472, %v806
  %v1474 = vpop.permute.xlu0 %1473
  %1477 = vset.pattern.permute.xlu0 0
  %1478 = vperm.xlu0 %1477, %v808
  %v1479 = vpop.permute.xlu0 %1478
  %1482 = vset.pattern.permute.xlu0 0
  %1483 = vperm.xlu0 %1482, %v810
  %v1484 = vpop.permute.xlu0 %1483
  %1487 = vset.pattern.permute.xlu0 0
  %1488 = vperm.xlu0 %1487, %v812
  %v1489 = vpop.permute.xlu0 %1488
  %1492 = vset.pattern.permute.xlu0 0
  %1493 = vperm.xlu0 %1492, %v814
  %v1494 = vpop.permute.xlu0 %1493
  %1497 = vset.pattern.permute.xlu0 0
  %1498 = vperm.xlu0 %1497, %v816
  %v1499 = vpop.permute.xlu0 %1498
  %1502 = vset.pattern.permute.xlu0 0
  %1503 = vperm.xlu0 %1502, %v818
  %v1504 = vpop.permute.xlu0 %1503
  %1507 = vset.pattern.permute.xlu0 0
  %1508 = vperm.xlu0 %1507, %v820
  %v1509 = vpop.permute.xlu0 %1508
  %1512 = vset.pattern.permute.xlu0 0
  %1513 = vperm.xlu0 %1512, %v822
  %v1514 = vpop.permute.xlu0 %1513
  %1517 = vset.pattern.permute.xlu0 0
  %1518 = vperm.xlu0 %1517, %v824
  %v1519 = vpop.permute.xlu0 %1518
  %1522 = vset.pattern.permute.xlu0 0
  %1523 = vperm.xlu0 %1522, %v826
  %v1524 = vpop.permute.xlu0 %1523
  %1527 = vset.pattern.permute.xlu0 0
  %1528 = vperm.xlu0 %1527, %v828
  %v1529 = vpop.permute.xlu0 %1528
  %1532 = vset.pattern.permute.xlu0 0
  %1533 = vperm.xlu0 %1532, %v830
  %v1534 = vpop.permute.xlu0 %1533
  %1537 = vset.pattern.permute.xlu0 0
  %1538 = vperm.xlu0 %1537, %v832
  %v1539 = vpop.permute.xlu0 %1538
  %1542 = vset.pattern.permute.xlu0 0
  %1543 = vperm.xlu0 %1542, %v834
  %v1544 = vpop.permute.xlu0 %1543
  %1547 = vset.pattern.permute.xlu0 0
  %1548 = vperm.xlu0 %1547, %v836
  %v1549 = vpop.permute.xlu0 %1548
  %1552 = vset.pattern.permute.xlu0 0
  %1553 = vperm.xlu0 %1552, %v838
  %v1554 = vpop.permute.xlu0 %1553
  %1557 = vset.pattern.permute.xlu0 0
  %1558 = vperm.xlu0 %1557, %v840
  %v1559 = vpop.permute.xlu0 %1558
  %1562 = vset.pattern.permute.xlu0 0
  %1563 = vperm.xlu0 %1562, %v842
  %v1564 = vpop.permute.xlu0 %1563
  %1567 = vset.pattern.permute.xlu0 0
  %1568 = vperm.xlu0 %1567, %v844
  %v1569 = vpop.permute.xlu0 %1568
  %1572 = vset.pattern.permute.xlu0 0
  %1573 = vperm.xlu0 %1572, %v846
  %v1574 = vpop.permute.xlu0 %1573
  %1577 = vset.pattern.permute.xlu0 0
  %1578 = vperm.xlu0 %1577, %v848
  %v1579 = vpop.permute.xlu0 %1578
  %1582 = vset.pattern.permute.xlu0 0
  %1583 = vperm.xlu0 %1582, %v850
  %v1584 = vpop.permute.xlu0 %1583
  %1587 = vset.pattern.permute.xlu0 0
  %1588 = vperm.xlu0 %1587, %v852
  %v1589 = vpop.permute.xlu0 %1588
  %1592 = vset.pattern.permute.xlu0 0
  %1593 = vperm.xlu0 %1592, %v854
  %v1594 = vpop.permute.xlu0 %1593
  %1597 = vset.pattern.permute.xlu0 0
  %1598 = vperm.xlu0 %1597, %v856
  %v1599 = vpop.permute.xlu0 %1598
  %1602 = vset.pattern.permute.xlu0 0
  %1603 = vperm.xlu0 %1602, %v858
  %v1604 = vpop.permute.xlu0 %1603
  %1607 = vset.pattern.permute.xlu0 0
  %1608 = vperm.xlu0 %1607, %v860
  %v1609 = vpop.permute.xlu0 %1608
  %1612 = vset.pattern.permute.xlu0 0
  %1613 = vperm.xlu0 %1612, %v862
  %v1614 = vpop.permute.xlu0 %1613
  %1617 = vset.pattern.permute.xlu0 0
  %1618 = vperm.xlu0 %1617, %v864
  %v1619 = vpop.permute.xlu0 %1618
  %1622 = vset.pattern.permute.xlu0 0
  %1623 = vperm.xlu0 %1622, %v866
  %v1624 = vpop.permute.xlu0 %1623
  %1627 = vset.pattern.permute.xlu0 0
  %1628 = vperm.xlu0 %1627, %v868
  %v1629 = vpop.permute.xlu0 %1628
  %1632 = vset.pattern.permute.xlu0 0
  %1633 = vperm.xlu0 %1632, %v870
  %v1634 = vpop.permute.xlu0 %1633
  %1637 = vset.pattern.permute.xlu0 0
  %1638 = vperm.xlu0 %1637, %v872
  %v1639 = vpop.permute.xlu0 %1638
  %1642 = vset.pattern.permute.xlu0 0
  %1643 = vperm.xlu0 %1642, %v874
  %v1644 = vpop.permute.xlu0 %1643
  %1647 = vset.pattern.permute.xlu0 0
  %1648 = vperm.xlu0 %1647, %v876
  %v1649 = vpop.permute.xlu0 %1648
  %1652 = vset.pattern.permute.xlu0 0
  %1653 = vperm.xlu0 %1652, %v878
  %v1654 = vpop.permute.xlu0 %1653
  %1657 = vset.pattern.permute.xlu0 0
  %1658 = vperm.xlu0 %1657, %v880
  %v1659 = vpop.permute.xlu0 %1658
  %1662 = vset.pattern.permute.xlu0 0
  %1663 = vperm.xlu0 %1662, %v882
  %v1664 = vpop.permute.xlu0 %1663
  %1667 = vset.pattern.permute.xlu0 0
  %1668 = vperm.xlu0 %1667, %v884
  %v1669 = vpop.permute.xlu0 %1668
  %1672 = vset.pattern.permute.xlu0 0
  %1673 = vperm.xlu0 %1672, %v886
  %v1674 = vpop.permute.xlu0 %1673
  %1677 = vset.pattern.permute.xlu0 0
  %1678 = vperm.xlu0 %1677, %v888
  %v1679 = vpop.permute.xlu0 %1678
  %1682 = vset.pattern.permute.xlu0 0
  %1683 = vperm.xlu0 %1682, %v890
  %v1684 = vpop.permute.xlu0 %1683
  %1687 = vset.pattern.permute.xlu0 0
  %1688 = vperm.xlu0 %1687, %v892
  %v1689 = vpop.permute.xlu0 %1688
  %1692 = vset.pattern.permute.xlu0 0
  %1693 = vperm.xlu0 %1692, %v894
  %v1694 = vpop.permute.xlu0 %1693
  %1697 = vset.pattern.permute.xlu0 0
  %1698 = vperm.xlu0 %1697, %v896
  %v1699 = vpop.permute.xlu0 %1698
  %1702 = vset.pattern.permute.xlu0 0
  %1703 = vperm.xlu0 %1702, %v898
  %v1704 = vpop.permute.xlu0 %1703
  %1707 = vset.pattern.permute.xlu0 0
  %1708 = vperm.xlu0 %1707, %v900
  %v1709 = vpop.permute.xlu0 %1708
  %1712 = vset.pattern.permute.xlu0 0
  %1713 = vperm.xlu0 %1712, %v902
  %v1714 = vpop.permute.xlu0 %1713
  %1717 = vset.pattern.permute.xlu0 0
  %1718 = vperm.xlu0 %1717, %v904
  %v1719 = vpop.permute.xlu0 %1718
  %1722 = vset.pattern.permute.xlu0 0
  %1723 = vperm.xlu0 %1722, %v906
  %v1724 = vpop.permute.xlu0 %1723
  %1727 = vset.pattern.permute.xlu0 0
  %1728 = vperm.xlu0 %1727, %v908
  %v1729 = vpop.permute.xlu0 %1728
  %1732 = vset.pattern.permute.xlu0 0
  %1733 = vperm.xlu0 %1732, %v910
  %v1734 = vpop.permute.xlu0 %1733
  %1737 = vset.pattern.permute.xlu0 0
  %1738 = vperm.xlu0 %1737, %v912
  %v1739 = vpop.permute.xlu0 %1738
  %1742 = vset.pattern.permute.xlu0 0
  %1743 = vperm.xlu0 %1742, %v914
  %v1744 = vpop.permute.xlu0 %1743
  %1747 = vset.pattern.permute.xlu0 0
  %1748 = vperm.xlu0 %1747, %v916
  %v1749 = vpop.permute.xlu0 %1748
  %1752 = vset.pattern.permute.xlu0 0
  %1753 = vperm.xlu0 %1752, %v918
  %v1754 = vpop.permute.xlu0 %1753
  %1757 = vset.pattern.permute.xlu0 0
  %1758 = vperm.xlu0 %1757, %v920
  %v1759 = vpop.permute.xlu0 %1758
  %1762 = vset.pattern.permute.xlu0 0
  %1763 = vperm.xlu0 %1762, %v922
  %v1764 = vpop.permute.xlu0 %1763
  %1767 = vset.pattern.permute.xlu0 0
  %1768 = vperm.xlu0 %1767, %v924
  %v1769 = vpop.permute.xlu0 %1768
  %1772 = vset.pattern.permute.xlu0 0
  %1773 = vperm.xlu0 %1772, %v926
  %v1774 = vpop.permute.xlu0 %1773
  %1777 = vset.pattern.permute.xlu0 0
  %1778 = vperm.xlu0 %1777, %v928
  %v1779 = vpop.permute.xlu0 %1778
  %1782 = vset.pattern.permute.xlu0 0
  %1783 = vperm.xlu0 %1782, %v930
  %v1784 = vpop.permute.xlu0 %1783
  %1787 = vset.pattern.permute.xlu0 0
  %1788 = vperm.xlu0 %1787, %v932
  %v1789 = vpop.permute.xlu0 %1788
  %1792 = vset.pattern.permute.xlu0 0
  %1793 = vperm.xlu0 %1792, %v934
  %v1794 = vpop.permute.xlu0 %1793
  %1797 = vset.pattern.permute.xlu0 0
  %1798 = vperm.xlu0 %1797, %v936
  %v1799 = vpop.permute.xlu0 %1798
  %1802 = vset.pattern.permute.xlu0 0
  %1803 = vperm.xlu0 %1802, %v938
  %v1804 = vpop.permute.xlu0 %1803
  %1807 = vset.pattern.permute.xlu0 0
  %1808 = vperm.xlu0 %1807, %v940
  %v1809 = vpop.permute.xlu0 %1808
  %1812 = vset.pattern.permute.xlu0 0
  %1813 = vperm.xlu0 %1812, %v942
  %v1814 = vpop.permute.xlu0 %1813
  %1817 = vset.pattern.permute.xlu0 0
  %1818 = vperm.xlu0 %1817, %v944
  %v1819 = vpop.permute.xlu0 %1818
  %1822 = vset.pattern.permute.xlu0 0
  %1823 = vperm.xlu0 %1822, %v946
  %v1824 = vpop.permute.xlu0 %1823
  %1827 = vset.pattern.permute.xlu0 0
  %1828 = vperm.xlu0 %1827, %v948
  %v1829 = vpop.permute.xlu0 %1828
  %1832 = vset.pattern.permute.xlu0 0
  %1833 = vperm.xlu0 %1832, %v950
  %v1834 = vpop.permute.xlu0 %1833
  %1837 = vset.pattern.permute.xlu0 0
  %1838 = vperm.xlu0 %1837, %v952
  %v1839 = vpop.permute.xlu0 %1838
  %1842 = vset.pattern.permute.xlu0 0
  %1843 = vperm.xlu0 %1842, %v954
  %v1844 = vpop.permute.xlu0 %1843
  %1847 = vset.pattern.permute.xlu0 0
  %1848 = vperm.xlu0 %1847, %v956
  %v1849 = vpop.permute.xlu0 %1848
  %1852 = vset.pattern.permute.xlu0 0
  %1853 = vperm.xlu0 %1852, %v958
  %v1854 = vpop.permute.xlu0 %1853
  %1857 = vset.pattern.permute.xlu0 0
  %1858 = vperm.xlu0 %1857, %v960
  %v1859 = vpop.permute.xlu0 %1858
  %1862 = vset.pattern.permute.xlu0 0
  %1863 = vperm.xlu0 %1862, %v962
  %v1864 = vpop.permute.xlu0 %1863
  %1867 = vset.pattern.permute.xlu0 0
  %1868 = vperm.xlu0 %1867, %v964
  %v1869 = vpop.permute.xlu0 %1868
  %1872 = vset.pattern.permute.xlu0 0
  %1873 = vperm.xlu0 %1872, %v966
  %v1874 = vpop.permute.xlu0 %1873
  %1877 = vset.pattern.permute.xlu0 0
  %1878 = vperm.xlu0 %1877, %v968
  %v1879 = vpop.permute.xlu0 %1878
  %1882 = vset.pattern.permute.xlu0 0
  %1883 = vperm.xlu0 %1882, %v970
  %v1884 = vpop.permute.xlu0 %1883
  %1887 = vset.pattern.permute.xlu0 0
  %1888 = vperm.xlu0 %1887, %v972
  %v1889 = vpop.permute.xlu0 %1888
  %1892 = vset.pattern.permute.xlu0 0
  %1893 = vperm.xlu0 %1892, %v974
  %v1894 = vpop.permute.xlu0 %1893
  %1897 = vset.pattern.permute.xlu0 0
  %1898 = vperm.xlu0 %1897, %v976
  %v1899 = vpop.permute.xlu0 %1898
  %1902 = vset.pattern.permute.xlu0 0
  %1903 = vperm.xlu0 %1902, %v978
  %v1904 = vpop.permute.xlu0 %1903
  %1907 = vset.pattern.permute.xlu0 0
  %1908 = vperm.xlu0 %1907, %v980
  %v1909 = vpop.permute.xlu0 %1908
  %1912 = vset.pattern.permute.xlu0 0
  %1913 = vperm.xlu0 %1912, %v982
  %v1914 = vpop.permute.xlu0 %1913
  %1917 = vset.pattern.permute.xlu0 0
  %1918 = vperm.xlu0 %1917, %v984
  %v1919 = vpop.permute.xlu0 %1918
  %1922 = vset.pattern.permute.xlu0 0
  %1923 = vperm.xlu0 %1922, %v986
  %v1924 = vpop.permute.xlu0 %1923
  %1927 = vset.pattern.permute.xlu0 0
  %1928 = vperm.xlu0 %1927, %v988
  %v1929 = vpop.permute.xlu0 %1928
  %1932 = vset.pattern.permute.xlu0 0
  %1933 = vperm.xlu0 %1932, %v990
  %v1934 = vpop.permute.xlu0 %1933
  %1937 = vset.pattern.permute.xlu0 0
  %1938 = vperm.xlu0 %1937, %v992
  %v1939 = vpop.permute.xlu0 %1938
  %1942 = vset.pattern.permute.xlu0 0
  %1943 = vperm.xlu0 %1942, %v994
  %v1944 = vpop.permute.xlu0 %1943
  %1947 = vset.pattern.permute.xlu0 0
  %1948 = vperm.xlu0 %1947, %v996
  %v1949 = vpop.permute.xlu0 %1948
  %1952 = vset.pattern.permute.xlu0 0
  %1953 = vperm.xlu0 %1952, %v998
  %v1954 = vpop.permute.xlu0 %1953
  %1957 = vset.pattern.permute.xlu0 0
  %1958 = vperm.xlu0 %1957, %v1000
  %v1959 = vpop.permute.xlu0 %1958
  %1962 = vset.pattern.permute.xlu0 0
  %1963 = vperm.xlu0 %1962, %v1002
  %v1964 = vpop.permute.xlu0 %1963
  %1967 = vset.pattern.permute.xlu0 0
  %1968 = vperm.xlu0 %1967, %v1004
  %v1969 = vpop.permute.xlu0 %1968
  %1972 = vset.pattern.permute.xlu0 0
  %1973 = vperm.xlu0 %1972, %v1006
  %v1974 = vpop.permute.xlu0 %1973
  %1977 = vset.pattern.permute.xlu0 0
  %1978 = vperm.xlu0 %1977, %v1008
  %v1979 = vpop.permute.xlu0 %1978
  %1982 = vset.pattern.permute.xlu0 0
  %1983 = vperm.xlu0 %1982, %v1010
  %v1984 = vpop.permute.xlu0 %1983
  %1987 = vset.pattern.permute.xlu0 0
  %1988 = vperm.xlu0 %1987, %v1012
  %v1989 = vpop.permute.xlu0 %1988
  %1992 = vset.pattern.permute.xlu0 0
  %1993 = vperm.xlu0 %1992, %v1014
  %v1994 = vpop.permute.xlu0 %1993
  %1997 = vset.pattern.permute.xlu0 0
  %1998 = vperm.xlu0 %1997, %v1016
  %v1999 = vpop.permute.xlu0 %1998
  %2002 = vset.pattern.permute.xlu0 0
  %2003 = vperm.xlu0 %2002, %v1018
  %v2004 = vpop.permute.xlu0 %2003
  %2007 = vset.pattern.permute.xlu0 0
  %2008 = vperm.xlu0 %2007, %v1020
  %v2009 = vpop.permute.xlu0 %2008
  %2012 = vset.pattern.permute.xlu0 0
  %2013 = vperm.xlu0 %2012, %v1022
  %v2014 = vpop.permute.xlu0 %2013
  %2017 = vset.pattern.permute.xlu0 0
  %2018 = vperm.xlu0 %2017, %v1024
  %v2019 = vpop.permute.xlu0 %2018
  %2022 = vset.pattern.permute.xlu0 0
  %2023 = vperm.xlu0 %2022, %v1026
  %v2024 = vpop.permute.xlu0 %2023
  %2027 = vset.pattern.permute.xlu0 0
  %2028 = vperm.xlu0 %2027, %v1028
  %v2029 = vpop.permute.xlu0 %2028
  %2032 = vset.pattern.permute.xlu0 0
  %2033 = vperm.xlu0 %2032, %v1030
  %v2034 = vpop.permute.xlu0 %2033
  %2037 = vset.pattern.permute.xlu0 0
  %2038 = vperm.xlu0 %2037, %v1032
  %v2039 = vpop.permute.xlu0 %2038
  %2042 = vset.pattern.permute.xlu0 0
  %2043 = vperm.xlu0 %2042, %v1034
  %v2044 = vpop.permute.xlu0 %2043
  %2047 = vset.pattern.permute.xlu0 0
  %2048 = vperm.xlu0 %2047, %v1036
  %v2049 = vpop.permute.xlu0 %2048
  %2052 = vset.pattern.permute.xlu0 0
  %2053 = vperm.xlu0 %2052, %v1038
  %v2054 = vpop.permute.xlu0 %2053
  %2057 = vset.pattern.permute.xlu0 0
  %2058 = vperm.xlu0 %2057, %v1040
  %v2059 = vpop.permute.xlu0 %2058
  %2062 = vset.pattern.permute.xlu0 0
  %2063 = vperm.xlu0 %2062, %v1042
  %v2064 = vpop.permute.xlu0 %2063
  %2067 = vset.pattern.permute.xlu0 0
  %2068 = vperm.xlu0 %2067, %v1044
  %v2069 = vpop.permute.xlu0 %2068
  %2072 = vset.pattern.permute.xlu0 0
  %2073 = vperm.xlu0 %2072, %v1046
  %v2074 = vpop.permute.xlu0 %2073
  %2077 = vset.pattern.permute.xlu0 0
  %2078 = vperm.xlu0 %2077, %v1048
  %v2079 = vpop.permute.xlu0 %2078
  %2082 = vset.pattern.permute.xlu0 0
  %2083 = vperm.xlu0 %2082, %v1050
  %v2084 = vpop.permute.xlu0 %2083
  %2087 = vset.pattern.permute.xlu0 0
  %2088 = vperm.xlu0 %2087, %v1052
  %v2089 = vpop.permute.xlu0 %2088
  %2092 = vset.pattern.permute.xlu0 0
  %2093 = vperm.xlu0 %2092, %v1054
  %v2094 = vpop.permute.xlu0 %2093
  %2097 = vset.pattern.permute.xlu0 0
  %2098 = vperm.xlu0 %2097, %v1056
  %v2099 = vpop.permute.xlu0 %2098
  %2102 = vset.pattern.permute.xlu0 0
  %2103 = vperm.xlu0 %2102, %v1058
  %v2104 = vpop.permute.xlu0 %2103
  %2107 = vset.pattern.permute.xlu0 0
  %2108 = vperm.xlu0 %2107, %v1060
  %v2109 = vpop.permute.xlu0 %2108
  %v2111 = vmul.f32 %v1364, %v1061
  %v2112 = vmul.f32 %v1364, %v1062
  %v2113 = vmul.f32 %v1369, %v1063
  %v2114 = vmul.f32 %v1369, %v1064
  %v2115 = vmul.f32 %v1374, %v1065
  %v2116 = vmul.f32 %v1374, %v1066
  %v2117 = vmul.f32 %v1379, %v1067
  %v2118 = vmul.f32 %v1379, %v1068
  %v2119 = vmul.f32 %v1384, %v1069
  %v2120 = vmul.f32 %v1384, %v1070
  %v2121 = vmul.f32 %v1389, %v1071
  %v2122 = vmul.f32 %v1389, %v1072
  %v2123 = vmul.f32 %v1394, %v1073
  %v2124 = vmul.f32 %v1394, %v1074
  %v2125 = vmul.f32 %v1399, %v1075
  %v2126 = vmul.f32 %v1399, %v1076
  %v2127 = vmul.f32 %v1404, %v1077
  %v2128 = vmul.f32 %v1404, %v1078
  %v2129 = vmul.f32 %v1409, %v1079
  %v2130 = vmul.f32 %v1409, %v1080
  %v2131 = vmul.f32 %v1414, %v1081
  %v2132 = vmul.f32 %v1414, %v1082
  %v2133 = vmul.f32 %v1419, %v1083
  %v2134 = vmul.f32 %v1419, %v1084
  %v2135 = vmul.f32 %v1424, %v1085
  %v2136 = vmul.f32 %v1424, %v1086
  %v2137 = vmul.f32 %v1429, %v1087
  %v2138 = vmul.f32 %v1429, %v1088
  %v2139 = vmul.f32 %v1434, %v1089
  %v2140 = vmul.f32 %v1434, %v1090
  %v2141 = vmul.f32 %v1439, %v1091
  %v2142 = vmul.f32 %v1439, %v1092
  %v2143 = vmul.f32 %v1444, %v1093
  %v2144 = vmul.f32 %v1444, %v1094
  %v2145 = vmul.f32 %v1449, %v1095
  %v2146 = vmul.f32 %v1449, %v1096
  %v2147 = vmul.f32 %v1454, %v1097
  %v2148 = vmul.f32 %v1454, %v1098
  %v2149 = vmul.f32 %v1459, %v1099
  %v2150 = vmul.f32 %v1459, %v1100
  %v2151 = vmul.f32 %v1464, %v1101
  %v2152 = vmul.f32 %v1464, %v1102
  %v2153 = vmul.f32 %v1469, %v1103
  %v2154 = vmul.f32 %v1469, %v1104
  %v2155 = vmul.f32 %v1474, %v1105
  %v2156 = vmul.f32 %v1474, %v1106
  %v2157 = vmul.f32 %v1479, %v1107
  %v2158 = vmul.f32 %v1479, %v1108
  %v2159 = vmul.f32 %v1484, %v1109
  %v2160 = vmul.f32 %v1484, %v1110
  %v2161 = vmul.f32 %v1489, %v1111
  %v2162 = vmul.f32 %v1489, %v1112
  %v2163 = vmul.f32 %v1494, %v1113
  %v2164 = vmul.f32 %v1494, %v1114
  %v2165 = vmul.f32 %v1499, %v1115
  %v2166 = vmul.f32 %v1499, %v1116
  %v2167 = vmul.f32 %v1504, %v1117
  %v2168 = vmul.f32 %v1504, %v1118
  %v2169 = vmul.f32 %v1509, %v1119
  %v2170 = vmul.f32 %v1509, %v1120
  %v2171 = vmul.f32 %v1514, %v1121
  %v2172 = vmul.f32 %v1514, %v1122
  %v2173 = vmul.f32 %v1519, %v1123
  %v2174 = vmul.f32 %v1519, %v1124
  %v2175 = vmul.f32 %v1524, %v1125
  %v2176 = vmul.f32 %v1524, %v1126
  %v2177 = vmul.f32 %v1529, %v1127
  %v2178 = vmul.f32 %v1529, %v1128
  %v2179 = vmul.f32 %v1534, %v1129
  %v2180 = vmul.f32 %v1534, %v1130
  %v2181 = vmul.f32 %v1539, %v1131
  %v2182 = vmul.f32 %v1539, %v1132
  %v2183 = vmul.f32 %v1544, %v1133
  %v2184 = vmul.f32 %v1544, %v1134
  %v2185 = vmul.f32 %v1549, %v1135
  %v2186 = vmul.f32 %v1549, %v1136
  %v2187 = vmul.f32 %v1554, %v1137
  %v2188 = vmul.f32 %v1554, %v1138
  %v2189 = vmul.f32 %v1559, %v1139
  %v2190 = vmul.f32 %v1559, %v1140
  %v2191 = vmul.f32 %v1564, %v1141
  %v2192 = vmul.f32 %v1564, %v1142
  %v2193 = vmul.f32 %v1569, %v1143
  %v2194 = vmul.f32 %v1569, %v1144
  %v2195 = vmul.f32 %v1574, %v1145
  %v2196 = vmul.f32 %v1574, %v1146
  %v2197 = vmul.f32 %v1579, %v1147
  %v2198 = vmul.f32 %v1579, %v1148
  %v2199 = vmul.f32 %v1584, %v1149
  %v2200 = vmul.f32 %v1584, %v1150
  %v2201 = vmul.f32 %v1589, %v1151
  %v2202 = vmul.f32 %v1589, %v1152
  %v2203 = vmul.f32 %v1594, %v1153
  %v2204 = vmul.f32 %v1594, %v1154
  %v2205 = vmul.f32 %v1599, %v1155
  %v2206 = vmul.f32 %v1599, %v1156
  %v2207 = vmul.f32 %v1604, %v1157
  %v2208 = vmul.f32 %v1604, %v1158
  %v2209 = vmul.f32 %v1609, %v1159
  %v2210 = vmul.f32 %v1609, %v1160
  %v2211 = vmul.f32 %v1614, %v1161
  %v2212 = vmul.f32 %v1614, %v1162
  %v2213 = vmul.f32 %v1619, %v1163
  %v2214 = vmul.f32 %v1619, %v1164
  %v2215 = vmul.f32 %v1624, %v1165
  %v2216 = vmul.f32 %v1624, %v1166
  %v2217 = vmul.f32 %v1629, %v1167
  %v2218 = vmul.f32 %v1629, %v1168
  %v2219 = vmul.f32 %v1634, %v1169
  %v2220 = vmul.f32 %v1634, %v1170
  %v2221 = vmul.f32 %v1639, %v1171
  %v2222 = vmul.f32 %v1639, %v1172
  %v2223 = vmul.f32 %v1644, %v1173
  %v2224 = vmul.f32 %v1644, %v1174
  %v2225 = vmul.f32 %v1649, %v1175
  %v2226 = vmul.f32 %v1649, %v1176
  %v2227 = vmul.f32 %v1654, %v1177
  %v2228 = vmul.f32 %v1654, %v1178
  %v2229 = vmul.f32 %v1659, %v1179
  %v2230 = vmul.f32 %v1659, %v1180
  %v2231 = vmul.f32 %v1664, %v1181
  %v2232 = vmul.f32 %v1664, %v1182
  %v2233 = vmul.f32 %v1669, %v1183
  %v2234 = vmul.f32 %v1669, %v1184
  %v2235 = vmul.f32 %v1674, %v1185
  %v2236 = vmul.f32 %v1674, %v1186
  %v2237 = vmul.f32 %v1679, %v1187
  %v2238 = vmul.f32 %v1679, %v1188
  %v2239 = vmul.f32 %v1684, %v1189
  %v2240 = vmul.f32 %v1684, %v1190
  %v2241 = vmul.f32 %v1689, %v1191
  %v2242 = vmul.f32 %v1689, %v1192
  %v2243 = vmul.f32 %v1694, %v1193
  %v2244 = vmul.f32 %v1694, %v1194
  %v2245 = vmul.f32 %v1699, %v1195
  %v2246 = vmul.f32 %v1699, %v1196
  %v2247 = vmul.f32 %v1704, %v1197
  %v2248 = vmul.f32 %v1704, %v1198
  %v2249 = vmul.f32 %v1709, %v1199
  %v2250 = vmul.f32 %v1709, %v1200
  %v2251 = vmul.f32 %v1714, %v1201
  %v2252 = vmul.f32 %v1714, %v1202
  %v2253 = vmul.f32 %v1719, %v1203
  %v2254 = vmul.f32 %v1719, %v1204
  %v2255 = vmul.f32 %v1724, %v1205
  %v2256 = vmul.f32 %v1724, %v1206
  %v2257 = vmul.f32 %v1729, %v1207
  %v2258 = vmul.f32 %v1729, %v1208
  %v2259 = vmul.f32 %v1734, %v1209
  %v2260 = vmul.f32 %v1734, %v1210
  %v2261 = vmul.f32 %v1739, %v1211
  %v2262 = vmul.f32 %v1739, %v1212
  %v2263 = vmul.f32 %v1744, %v1213
  %v2264 = vmul.f32 %v1744, %v1214
  %v2265 = vmul.f32 %v1749, %v1215
  %v2266 = vmul.f32 %v1749, %v1216
  %v2267 = vmul.f32 %v1754, %v1217
  %v2268 = vmul.f32 %v1754, %v1218
  %v2269 = vmul.f32 %v1759, %v1219
  %v2270 = vmul.f32 %v1759, %v1220
  %v2271 = vmul.f32 %v1764, %v1221
  %v2272 = vmul.f32 %v1764, %v1222
  %v2273 = vmul.f32 %v1769, %v1223
  %v2274 = vmul.f32 %v1769, %v1224
  %v2275 = vmul.f32 %v1774, %v1225
  %v2276 = vmul.f32 %v1774, %v1226
  %v2277 = vmul.f32 %v1779, %v1227
  %v2278 = vmul.f32 %v1779, %v1228
  %v2279 = vmul.f32 %v1784, %v1229
  %v2280 = vmul.f32 %v1784, %v1230
  %v2281 = vmul.f32 %v1789, %v1231
  %v2282 = vmul.f32 %v1789, %v1232
  %v2283 = vmul.f32 %v1794, %v1233
  %v2284 = vmul.f32 %v1794, %v1234
  %v2285 = vmul.f32 %v1799, %v1235
  %v2286 = vmul.f32 %v1799, %v1236
  %v2287 = vmul.f32 %v1804, %v1237
  %v2288 = vmul.f32 %v1804, %v1238
  %v2289 = vmul.f32 %v1809, %v1239
  %v2290 = vmul.f32 %v1809, %v1240
  %v2291 = vmul.f32 %v1814, %v1241
  %v2292 = vmul.f32 %v1814, %v1242
  %v2293 = vmul.f32 %v1819, %v1243
  %v2294 = vmul.f32 %v1819, %v1244
  %v2295 = vmul.f32 %v1824, %v1245
  %v2296 = vmul.f32 %v1824, %v1246
  %v2297 = vmul.f32 %v1829, %v1247
  %v2298 = vmul.f32 %v1829, %v1248
  %v2299 = vmul.f32 %v1834, %v1249
  %v2300 = vmul.f32 %v1834, %v1250
  %v2301 = vmul.f32 %v1839, %v1251
  %v2302 = vmul.f32 %v1839, %v1252
  %v2303 = vmul.f32 %v1844, %v1253
  %v2304 = vmul.f32 %v1844, %v1254
  %v2305 = vmul.f32 %v1849, %v1255
  %v2306 = vmul.f32 %v1849, %v1256
  %v2307 = vmul.f32 %v1854, %v1257
  %v2308 = vmul.f32 %v1854, %v1258
  %v2309 = vmul.f32 %v1859, %v1259
  %v2310 = vmul.f32 %v1859, %v1260
  %v2311 = vmul.f32 %v1864, %v1261
  %v2312 = vmul.f32 %v1864, %v1262
  %v2313 = vmul.f32 %v1869, %v1263
  %v2314 = vmul.f32 %v1869, %v1264
  %v2315 = vmul.f32 %v1874, %v1265
  %v2316 = vmul.f32 %v1874, %v1266
  %v2317 = vmul.f32 %v1879, %v1267
  %v2318 = vmul.f32 %v1879, %v1268
  %v2319 = vmul.f32 %v1884, %v1269
  %v2320 = vmul.f32 %v1884, %v1270
  %v2321 = vmul.f32 %v1889, %v1271
  %v2322 = vmul.f32 %v1889, %v1272
  %v2323 = vmul.f32 %v1894, %v1273
  %v2324 = vmul.f32 %v1894, %v1274
  %v2325 = vmul.f32 %v1899, %v1275
  %v2326 = vmul.f32 %v1899, %v1276
  %v2327 = vmul.f32 %v1904, %v1277
  %v2328 = vmul.f32 %v1904, %v1278
  %v2329 = vmul.f32 %v1909, %v1279
  %v2330 = vmul.f32 %v1909, %v1280
  %v2331 = vmul.f32 %v1914, %v1281
  %v2332 = vmul.f32 %v1914, %v1282
  %v2333 = vmul.f32 %v1919, %v1283
  %v2334 = vmul.f32 %v1919, %v1284
  %v2335 = vmul.f32 %v1924, %v1285
  %v2336 = vmul.f32 %v1924, %v1286
  %v2337 = vmul.f32 %v1929, %v1287
  %v2338 = vmul.f32 %v1929, %v1288
  %v2339 = vmul.f32 %v1934, %v1289
  %v2340 = vmul.f32 %v1934, %v1290
  %v2341 = vmul.f32 %v1939, %v1291
  %v2342 = vmul.f32 %v1939, %v1292
  %v2343 = vmul.f32 %v1944, %v1293
  %v2344 = vmul.f32 %v1944, %v1294
  %v2345 = vmul.f32 %v1949, %v1295
  %v2346 = vmul.f32 %v1949, %v1296
  %v2347 = vmul.f32 %v1954, %v1297
  %v2348 = vmul.f32 %v1954, %v1298
  %v2349 = vmul.f32 %v1959, %v1299
  %v2350 = vmul.f32 %v1959, %v1300
  %v2351 = vmul.f32 %v1964, %v1301
  %v2352 = vmul.f32 %v1964, %v1302
  %v2353 = vmul.f32 %v1969, %v1303
  %v2354 = vmul.f32 %v1969, %v1304
  %v2355 = vmul.f32 %v1974, %v1305
  %v2356 = vmul.f32 %v1974, %v1306
  %v2357 = vmul.f32 %v1979, %v1307
  %v2358 = vmul.f32 %v1979, %v1308
  %v2359 = vmul.f32 %v1984, %v1309
  %v2360 = vmul.f32 %v1984, %v1310
  %v2361 = vmul.f32 %v1989, %v1311
  %v2362 = vmul.f32 %v1989, %v1312
  %v2363 = vmul.f32 %v1994, %v1313
  %v2364 = vmul.f32 %v1994, %v1314
  %v2365 = vmul.f32 %v1999, %v1315
  %v2366 = vmul.f32 %v1999, %v1316
  %v2367 = vmul.f32 %v2004, %v1317
  %v2368 = vmul.f32 %v2004, %v1318
  %v2369 = vmul.f32 %v2009, %v1319
  %v2370 = vmul.f32 %v2009, %v1320
  %v2371 = vmul.f32 %v2014, %v1321
  %v2372 = vmul.f32 %v2014, %v1322
  %v2373 = vmul.f32 %v2019, %v1323
  %v2374 = vmul.f32 %v2019, %v1324
  %v2375 = vmul.f32 %v2024, %v1325
  %v2376 = vmul.f32 %v2024, %v1326
  %v2377 = vmul.f32 %v2029, %v1327
  %v2378 = vmul.f32 %v2029, %v1328
  %v2379 = vmul.f32 %v2034, %v1329
  %v2380 = vmul.f32 %v2034, %v1330
  %v2381 = vmul.f32 %v2039, %v1331
  %v2382 = vmul.f32 %v2039, %v1332
  %v2383 = vmul.f32 %v2044, %v1333
  %v2384 = vmul.f32 %v2044, %v1334
  %v2385 = vmul.f32 %v2049, %v1335
  %v2386 = vmul.f32 %v2049, %v1336
  %v2387 = vmul.f32 %v2054, %v1337
  %v2388 = vmul.f32 %v2054, %v1338
  %v2389 = vmul.f32 %v2059, %v1339
  %v2390 = vmul.f32 %v2059, %v1340
  %v2391 = vmul.f32 %v2064, %v1341
  %v2392 = vmul.f32 %v2064, %v1342
  %v2393 = vmul.f32 %v2069, %v1343
  %v2394 = vmul.f32 %v2069, %v1344
  %v2395 = vmul.f32 %v2074, %v1345
  %v2396 = vmul.f32 %v2074, %v1346
  %v2397 = vmul.f32 %v2079, %v1347
  %v2398 = vmul.f32 %v2079, %v1348
  %v2399 = vmul.f32 %v2084, %v1349
  %v2400 = vmul.f32 %v2084, %v1350
  %v2401 = vmul.f32 %v2089, %v1351
  %v2402 = vmul.f32 %v2089, %v1352
  %v2403 = vmul.f32 %v2094, %v1353
  %v2404 = vmul.f32 %v2094, %v1354
  %v2405 = vmul.f32 %v2099, %v1355
  %v2406 = vmul.f32 %v2099, %v1356
  %v2407 = vmul.f32 %v2104, %v1357
  %v2408 = vmul.f32 %v2104, %v1358
  %v2409 = vmul.f32 %v2109, %v1359
  %v2410 = vmul.f32 %v2109, %v1360
  %2411 = vst [vmem:[%s2] sm:$0xff] %v2111
  %vm2412 = vcmask 556032
  %2413 = vst.msk [vmem:[%s2 + $0x8] sm:$0xff] %vm2412, %v2112
  %2414 = vst [vmem:[%s2 + $0x10] sm:$0xff] %v2113
  %2415 = vst.msk [vmem:[%s2 + $0x18] sm:$0xff] %vm2412, %v2114
  %2416 = vst [vmem:[%s2 + $0x20] sm:$0xff] %v2115
  %2417 = vst.msk [vmem:[%s2 + $0x28] sm:$0xff] %vm2412, %v2116
  %2418 = vst [vmem:[%s2 + $0x30] sm:$0xff] %v2117
  %2419 = vst.msk [vmem:[%s2 + $0x38] sm:$0xff] %vm2412, %v2118
  %2420 = vst [vmem:[%s2 + $0x40] sm:$0xff] %v2119
  %2421 = vst.msk [vmem:[%s2 + $0x48] sm:$0xff] %vm2412, %v2120
  %2422 = vst [vmem:[%s2 + $0x50] sm:$0xff] %v2121
  %2423 = vst.msk [vmem:[%s2 + $0x58] sm:$0xff] %vm2412, %v2122
  %2424 = vst [vmem:[%s2 + $0x60] sm:$0xff] %v2123
  %2425 = vst.msk [vmem:[%s2 + $0x68] sm:$0xff] %vm2412, %v2124
  %2426 = vst [vmem:[%s2 + $0x70] sm:$0xff] %v2125
  %2427 = vst.msk [vmem:[%s2 + $0x78] sm:$0xff] %vm2412, %v2126
  %2428 = vst [vmem:[%s2 + $0x80] sm:$0xff] %v2127
  %2429 = vst.msk [vmem:[%s2 + $0x88] sm:$0xff] %vm2412, %v2128
  %2430 = vst [vmem:[%s2 + $0x90] sm:$0xff] %v2129
  %2431 = vst.msk [vmem:[%s2 + $0x98] sm:$0xff] %vm2412, %v2130
  %2432 = vst [vmem:[%s2 + $0xa0] sm:$0xff] %v2131
  %2433 = vst.msk [vmem:[%s2 + $0xa8] sm:$0xff] %vm2412, %v2132
  %2434 = vst [vmem:[%s2 + $0xb0] sm:$0xff] %v2133
  %2435 = vst.msk [vmem:[%s2 + $0xb8] sm:$0xff] %vm2412, %v2134
  %2436 = vst [vmem:[%s2 + $0xc0] sm:$0xff] %v2135
  %2437 = vst.msk [vmem:[%s2 + $0xc8] sm:$0xff] %vm2412, %v2136
  %2438 = vst [vmem:[%s2 + $0xd0] sm:$0xff] %v2137
  %2439 = vst.msk [vmem:[%s2 + $0xd8] sm:$0xff] %vm2412, %v2138
  %2440 = vst [vmem:[%s2 + $0xe0] sm:$0xff] %v2139
  %2441 = vst.msk [vmem:[%s2 + $0xe8] sm:$0xff] %vm2412, %v2140
  %2442 = vst [vmem:[%s2 + $0xf0] sm:$0xff] %v2141
  %2443 = vst.msk [vmem:[%s2 + $0xf8] sm:$0xff] %vm2412, %v2142
  %2444 = vst [vmem:[%s2 + $0x100] sm:$0xff] %v2143
  %2445 = vst.msk [vmem:[%s2 + $0x108] sm:$0xff] %vm2412, %v2144
  %2446 = vst [vmem:[%s2 + $0x110] sm:$0xff] %v2145
  %2447 = vst.msk [vmem:[%s2 + $0x118] sm:$0xff] %vm2412, %v2146
  %2448 = vst [vmem:[%s2 + $0x120] sm:$0xff] %v2147
  %2449 = vst.msk [vmem:[%s2 + $0x128] sm:$0xff] %vm2412, %v2148
  %2450 = vst [vmem:[%s2 + $0x130] sm:$0xff] %v2149
  %2451 = vst.msk [vmem:[%s2 + $0x138] sm:$0xff] %vm2412, %v2150
  %2452 = vst [vmem:[%s2 + $0x140] sm:$0xff] %v2151
  %2453 = vst.msk [vmem:[%s2 + $0x148] sm:$0xff] %vm2412, %v2152
  %2454 = vst [vmem:[%s2 + $0x150] sm:$0xff] %v2153
  %2455 = vst.msk [vmem:[%s2 + $0x158] sm:$0xff] %vm2412, %v2154
  %2456 = vst [vmem:[%s2 + $0x160] sm:$0xff] %v2155
  %2457 = vst.msk [vmem:[%s2 + $0x168] sm:$0xff] %vm2412, %v2156
  %2458 = vst [vmem:[%s2 + $0x170] sm:$0xff] %v2157
  %2459 = vst.msk [vmem:[%s2 + $0x178] sm:$0xff] %vm2412, %v2158
  %2460 = vst [vmem:[%s2 + $0x180] sm:$0xff] %v2159
  %2461 = vst.msk [vmem:[%s2 + $0x188] sm:$0xff] %vm2412, %v2160
  %2462 = vst [vmem:[%s2 + $0x190] sm:$0xff] %v2161
  %2463 = vst.msk [vmem:[%s2 + $0x198] sm:$0xff] %vm2412, %v2162
  %2464 = vst [vmem:[%s2 + $0x1a0] sm:$0xff] %v2163
  %2465 = vst.msk [vmem:[%s2 + $0x1a8] sm:$0xff] %vm2412, %v2164
  %2466 = vst [vmem:[%s2 + $0x1b0] sm:$0xff] %v2165
  %2467 = vst.msk [vmem:[%s2 + $0x1b8] sm:$0xff] %vm2412, %v2166
  %2468 = vst [vmem:[%s2 + $0x1c0] sm:$0xff] %v2167
  %2469 = vst.msk [vmem:[%s2 + $0x1c8] sm:$0xff] %vm2412, %v2168
  %2470 = vst [vmem:[%s2 + $0x1d0] sm:$0xff] %v2169
  %2471 = vst.msk [vmem:[%s2 + $0x1d8] sm:$0xff] %vm2412, %v2170
  %2472 = vst [vmem:[%s2 + $0x1e0] sm:$0xff] %v2171
  %2473 = vst.msk [vmem:[%s2 + $0x1e8] sm:$0xff] %vm2412, %v2172
  %2474 = vst [vmem:[%s2 + $0x1f0] sm:$0xff] %v2173
  %2475 = vst.msk [vmem:[%s2 + $0x1f8] sm:$0xff] %vm2412, %v2174
  %2476 = vst [vmem:[%s2 + $0x200] sm:$0xff] %v2175
  %2477 = vst.msk [vmem:[%s2 + $0x208] sm:$0xff] %vm2412, %v2176
  %2478 = vst [vmem:[%s2 + $0x210] sm:$0xff] %v2177
  %2479 = vst.msk [vmem:[%s2 + $0x218] sm:$0xff] %vm2412, %v2178
  %2480 = vst [vmem:[%s2 + $0x220] sm:$0xff] %v2179
  %2481 = vst.msk [vmem:[%s2 + $0x228] sm:$0xff] %vm2412, %v2180
  %2482 = vst [vmem:[%s2 + $0x230] sm:$0xff] %v2181
  %2483 = vst.msk [vmem:[%s2 + $0x238] sm:$0xff] %vm2412, %v2182
  %2484 = vst [vmem:[%s2 + $0x240] sm:$0xff] %v2183
  %2485 = vst.msk [vmem:[%s2 + $0x248] sm:$0xff] %vm2412, %v2184
  %2486 = vst [vmem:[%s2 + $0x250] sm:$0xff] %v2185
  %2487 = vst.msk [vmem:[%s2 + $0x258] sm:$0xff] %vm2412, %v2186
  %2488 = vst [vmem:[%s2 + $0x260] sm:$0xff] %v2187
  %2489 = vst.msk [vmem:[%s2 + $0x268] sm:$0xff] %vm2412, %v2188
  %2490 = vst [vmem:[%s2 + $0x270] sm:$0xff] %v2189
  %2491 = vst.msk [vmem:[%s2 + $0x278] sm:$0xff] %vm2412, %v2190
  %2492 = vst [vmem:[%s2 + $0x280] sm:$0xff] %v2191
  %2493 = vst.msk [vmem:[%s2 + $0x288] sm:$0xff] %vm2412, %v2192
  %2494 = vst [vmem:[%s2 + $0x290] sm:$0xff] %v2193
  %2495 = vst.msk [vmem:[%s2 + $0x298] sm:$0xff] %vm2412, %v2194
  %2496 = vst [vmem:[%s2 + $0x2a0] sm:$0xff] %v2195
  %2497 = vst.msk [vmem:[%s2 + $0x2a8] sm:$0xff] %vm2412, %v2196
  %2498 = vst [vmem:[%s2 + $0x2b0] sm:$0xff] %v2197
  %2499 = vst.msk [vmem:[%s2 + $0x2b8] sm:$0xff] %vm2412, %v2198
  %2500 = vst [vmem:[%s2 + $0x2c0] sm:$0xff] %v2199
  %2501 = vst.msk [vmem:[%s2 + $0x2c8] sm:$0xff] %vm2412, %v2200
  %2502 = vst [vmem:[%s2 + $0x2d0] sm:$0xff] %v2201
  %2503 = vst.msk [vmem:[%s2 + $0x2d8] sm:$0xff] %vm2412, %v2202
  %2504 = vst [vmem:[%s2 + $0x2e0] sm:$0xff] %v2203
  %2505 = vst.msk [vmem:[%s2 + $0x2e8] sm:$0xff] %vm2412, %v2204
  %2506 = vst [vmem:[%s2 + $0x2f0] sm:$0xff] %v2205
  %2507 = vst.msk [vmem:[%s2 + $0x2f8] sm:$0xff] %vm2412, %v2206
  %2508 = vst [vmem:[%s2 + $0x300] sm:$0xff] %v2207
  %2509 = vst.msk [vmem:[%s2 + $0x308] sm:$0xff] %vm2412, %v2208
  %2510 = vst [vmem:[%s2 + $0x310] sm:$0xff] %v2209
  %2511 = vst.msk [vmem:[%s2 + $0x318] sm:$0xff] %vm2412, %v2210
  %2512 = vst [vmem:[%s2 + $0x320] sm:$0xff] %v2211
  %2513 = vst.msk [vmem:[%s2 + $0x328] sm:$0xff] %vm2412, %v2212
  %2514 = vst [vmem:[%s2 + $0x330] sm:$0xff] %v2213
  %2515 = vst.msk [vmem:[%s2 + $0x338] sm:$0xff] %vm2412, %v2214
  %2516 = vst [vmem:[%s2 + $0x340] sm:$0xff] %v2215
  %2517 = vst.msk [vmem:[%s2 + $0x348] sm:$0xff] %vm2412, %v2216
  %2518 = vst [vmem:[%s2 + $0x350] sm:$0xff] %v2217
  %2519 = vst.msk [vmem:[%s2 + $0x358] sm:$0xff] %vm2412, %v2218
  %2520 = vst [vmem:[%s2 + $0x360] sm:$0xff] %v2219
  %2521 = vst.msk [vmem:[%s2 + $0x368] sm:$0xff] %vm2412, %v2220
  %2522 = vst [vmem:[%s2 + $0x370] sm:$0xff] %v2221
  %2523 = vst.msk [vmem:[%s2 + $0x378] sm:$0xff] %vm2412, %v2222
  %2524 = vst [vmem:[%s2 + $0x380] sm:$0xff] %v2223
  %2525 = vst.msk [vmem:[%s2 + $0x388] sm:$0xff] %vm2412, %v2224
  %2526 = vst [vmem:[%s2 + $0x390] sm:$0xff] %v2225
  %2527 = vst.msk [vmem:[%s2 + $0x398] sm:$0xff] %vm2412, %v2226
  %2528 = vst [vmem:[%s2 + $0x3a0] sm:$0xff] %v2227
  %2529 = vst.msk [vmem:[%s2 + $0x3a8] sm:$0xff] %vm2412, %v2228
  %2530 = vst [vmem:[%s2 + $0x3b0] sm:$0xff] %v2229
  %2531 = vst.msk [vmem:[%s2 + $0x3b8] sm:$0xff] %vm2412, %v2230
  %2532 = vst [vmem:[%s2 + $0x3c0] sm:$0xff] %v2231
  %2533 = vst.msk [vmem:[%s2 + $0x3c8] sm:$0xff] %vm2412, %v2232
  %2534 = vst [vmem:[%s2 + $0x3d0] sm:$0xff] %v2233
  %2535 = vst.msk [vmem:[%s2 + $0x3d8] sm:$0xff] %vm2412, %v2234
  %2536 = vst [vmem:[%s2 + $0x3e0] sm:$0xff] %v2235
  %2537 = vst.msk [vmem:[%s2 + $0x3e8] sm:$0xff] %vm2412, %v2236
  %2538 = vst [vmem:[%s2 + $0x3f0] sm:$0xff] %v2237
  %2539 = vst.msk [vmem:[%s2 + $0x3f8] sm:$0xff] %vm2412, %v2238
  %2540 = vst [vmem:[%s2 + $0x400] sm:$0xff] %v2239
  %2541 = vst.msk [vmem:[%s2 + $0x408] sm:$0xff] %vm2412, %v2240
  %2542 = vst [vmem:[%s2 + $0x410] sm:$0xff] %v2241
  %2543 = vst.msk [vmem:[%s2 + $0x418] sm:$0xff] %vm2412, %v2242
  %2544 = vst [vmem:[%s2 + $0x420] sm:$0xff] %v2243
  %2545 = vst.msk [vmem:[%s2 + $0x428] sm:$0xff] %vm2412, %v2244
  %2546 = vst [vmem:[%s2 + $0x430] sm:$0xff] %v2245
  %2547 = vst.msk [vmem:[%s2 + $0x438] sm:$0xff] %vm2412, %v2246
  %2548 = vst [vmem:[%s2 + $0x440] sm:$0xff] %v2247
  %2549 = vst.msk [vmem:[%s2 + $0x448] sm:$0xff] %vm2412, %v2248
  %2550 = vst [vmem:[%s2 + $0x450] sm:$0xff] %v2249
  %2551 = vst.msk [vmem:[%s2 + $0x458] sm:$0xff] %vm2412, %v2250
  %2552 = vst [vmem:[%s2 + $0x460] sm:$0xff] %v2251
  %2553 = vst.msk [vmem:[%s2 + $0x468] sm:$0xff] %vm2412, %v2252
  %2554 = vst [vmem:[%s2 + $0x470] sm:$0xff] %v2253
  %2555 = vst.msk [vmem:[%s2 + $0x478] sm:$0xff] %vm2412, %v2254
  %2556 = vst [vmem:[%s2 + $0x480] sm:$0xff] %v2255
  %2557 = vst.msk [vmem:[%s2 + $0x488] sm:$0xff] %vm2412, %v2256
  %2558 = vst [vmem:[%s2 + $0x490] sm:$0xff] %v2257
  %2559 = vst.msk [vmem:[%s2 + $0x498] sm:$0xff] %vm2412, %v2258
  %2560 = vst [vmem:[%s2 + $0x4a0] sm:$0xff] %v2259
  %2561 = vst.msk [vmem:[%s2 + $0x4a8] sm:$0xff] %vm2412, %v2260
  %2562 = vst [vmem:[%s2 + $0x4b0] sm:$0xff] %v2261
  %2563 = vst.msk [vmem:[%s2 + $0x4b8] sm:$0xff] %vm2412, %v2262
  %2564 = vst [vmem:[%s2 + $0x4c0] sm:$0xff] %v2263
  %2565 = vst.msk [vmem:[%s2 + $0x4c8] sm:$0xff] %vm2412, %v2264
  %2566 = vst [vmem:[%s2 + $0x4d0] sm:$0xff] %v2265
  %2567 = vst.msk [vmem:[%s2 + $0x4d8] sm:$0xff] %vm2412, %v2266
  %2568 = vst [vmem:[%s2 + $0x4e0] sm:$0xff] %v2267
  %2569 = vst.msk [vmem:[%s2 + $0x4e8] sm:$0xff] %vm2412, %v2268
  %2570 = vst [vmem:[%s2 + $0x4f0] sm:$0xff] %v2269
  %2571 = vst.msk [vmem:[%s2 + $0x4f8] sm:$0xff] %vm2412, %v2270
  %2572 = vst [vmem:[%s2 + $0x500] sm:$0xff] %v2271
  %2573 = vst.msk [vmem:[%s2 + $0x508] sm:$0xff] %vm2412, %v2272
  %2574 = vst [vmem:[%s2 + $0x510] sm:$0xff] %v2273
  %2575 = vst.msk [vmem:[%s2 + $0x518] sm:$0xff] %vm2412, %v2274
  %2576 = vst [vmem:[%s2 + $0x520] sm:$0xff] %v2275
  %2577 = vst.msk [vmem:[%s2 + $0x528] sm:$0xff] %vm2412, %v2276
  %2578 = vst [vmem:[%s2 + $0x530] sm:$0xff] %v2277
  %2579 = vst.msk [vmem:[%s2 + $0x538] sm:$0xff] %vm2412, %v2278
  %2580 = vst [vmem:[%s2 + $0x540] sm:$0xff] %v2279
  %2581 = vst.msk [vmem:[%s2 + $0x548] sm:$0xff] %vm2412, %v2280
  %2582 = vst [vmem:[%s2 + $0x550] sm:$0xff] %v2281
  %2583 = vst.msk [vmem:[%s2 + $0x558] sm:$0xff] %vm2412, %v2282
  %2584 = vst [vmem:[%s2 + $0x560] sm:$0xff] %v2283
  %2585 = vst.msk [vmem:[%s2 + $0x568] sm:$0xff] %vm2412, %v2284
  %2586 = vst [vmem:[%s2 + $0x570] sm:$0xff] %v2285
  %2587 = vst.msk [vmem:[%s2 + $0x578] sm:$0xff] %vm2412, %v2286
  %2588 = vst [vmem:[%s2 + $0x580] sm:$0xff] %v2287
  %2589 = vst.msk [vmem:[%s2 + $0x588] sm:$0xff] %vm2412, %v2288
  %2590 = vst [vmem:[%s2 + $0x590] sm:$0xff] %v2289
  %2591 = vst.msk [vmem:[%s2 + $0x598] sm:$0xff] %vm2412, %v2290
  %2592 = vst [vmem:[%s2 + $0x5a0] sm:$0xff] %v2291
  %2593 = vst.msk [vmem:[%s2 + $0x5a8] sm:$0xff] %vm2412, %v2292
  %2594 = vst [vmem:[%s2 + $0x5b0] sm:$0xff] %v2293
  %2595 = vst.msk [vmem:[%s2 + $0x5b8] sm:$0xff] %vm2412, %v2294
  %2596 = vst [vmem:[%s2 + $0x5c0] sm:$0xff] %v2295
  %2597 = vst.msk [vmem:[%s2 + $0x5c8] sm:$0xff] %vm2412, %v2296
  %2598 = vst [vmem:[%s2 + $0x5d0] sm:$0xff] %v2297
  %2599 = vst.msk [vmem:[%s2 + $0x5d8] sm:$0xff] %vm2412, %v2298
  %2600 = vst [vmem:[%s2 + $0x5e0] sm:$0xff] %v2299
  %2601 = vst.msk [vmem:[%s2 + $0x5e8] sm:$0xff] %vm2412, %v2300
  %2602 = vst [vmem:[%s2 + $0x5f0] sm:$0xff] %v2301
  %2603 = vst.msk [vmem:[%s2 + $0x5f8] sm:$0xff] %vm2412, %v2302
  %2604 = vst [vmem:[%s2 + $0x600] sm:$0xff] %v2303
  %2605 = vst.msk [vmem:[%s2 + $0x608] sm:$0xff] %vm2412, %v2304
  %2606 = vst [vmem:[%s2 + $0x610] sm:$0xff] %v2305
  %2607 = vst.msk [vmem:[%s2 + $0x618] sm:$0xff] %vm2412, %v2306
  %2608 = vst [vmem:[%s2 + $0x620] sm:$0xff] %v2307
  %2609 = vst.msk [vmem:[%s2 + $0x628] sm:$0xff] %vm2412, %v2308
  %2610 = vst [vmem:[%s2 + $0x630] sm:$0xff] %v2309
  %2611 = vst.msk [vmem:[%s2 + $0x638] sm:$0xff] %vm2412, %v2310
  %2612 = vst [vmem:[%s2 + $0x640] sm:$0xff] %v2311
  %2613 = vst.msk [vmem:[%s2 + $0x648] sm:$0xff] %vm2412, %v2312
  %2614 = vst [vmem:[%s2 + $0x650] sm:$0xff] %v2313
  %2615 = vst.msk [vmem:[%s2 + $0x658] sm:$0xff] %vm2412, %v2314
  %2616 = vst [vmem:[%s2 + $0x660] sm:$0xff] %v2315
  %2617 = vst.msk [vmem:[%s2 + $0x668] sm:$0xff] %vm2412, %v2316
  %2618 = vst [vmem:[%s2 + $0x670] sm:$0xff] %v2317
  %2619 = vst.msk [vmem:[%s2 + $0x678] sm:$0xff] %vm2412, %v2318
  %2620 = vst [vmem:[%s2 + $0x680] sm:$0xff] %v2319
  %2621 = vst.msk [vmem:[%s2 + $0x688] sm:$0xff] %vm2412, %v2320
  %2622 = vst [vmem:[%s2 + $0x690] sm:$0xff] %v2321
  %2623 = vst.msk [vmem:[%s2 + $0x698] sm:$0xff] %vm2412, %v2322
  %2624 = vst [vmem:[%s2 + $0x6a0] sm:$0xff] %v2323
  %2625 = vst.msk [vmem:[%s2 + $0x6a8] sm:$0xff] %vm2412, %v2324
  %2626 = vst [vmem:[%s2 + $0x6b0] sm:$0xff] %v2325
  %2627 = vst.msk [vmem:[%s2 + $0x6b8] sm:$0xff] %vm2412, %v2326
  %2628 = vst [vmem:[%s2 + $0x6c0] sm:$0xff] %v2327
  %2629 = vst.msk [vmem:[%s2 + $0x6c8] sm:$0xff] %vm2412, %v2328
  %2630 = vst [vmem:[%s2 + $0x6d0] sm:$0xff] %v2329
  %2631 = vst.msk [vmem:[%s2 + $0x6d8] sm:$0xff] %vm2412, %v2330
  %2632 = vst [vmem:[%s2 + $0x6e0] sm:$0xff] %v2331
  %2633 = vst.msk [vmem:[%s2 + $0x6e8] sm:$0xff] %vm2412, %v2332
  %2634 = vst [vmem:[%s2 + $0x6f0] sm:$0xff] %v2333
  %2635 = vst.msk [vmem:[%s2 + $0x6f8] sm:$0xff] %vm2412, %v2334
  %2636 = vst [vmem:[%s2 + $0x700] sm:$0xff] %v2335
  %2637 = vst.msk [vmem:[%s2 + $0x708] sm:$0xff] %vm2412, %v2336
  %2638 = vst [vmem:[%s2 + $0x710] sm:$0xff] %v2337
  %2639 = vst.msk [vmem:[%s2 + $0x718] sm:$0xff] %vm2412, %v2338
  %2640 = vst [vmem:[%s2 + $0x720] sm:$0xff] %v2339
  %2641 = vst.msk [vmem:[%s2 + $0x728] sm:$0xff] %vm2412, %v2340
  %2642 = vst [vmem:[%s2 + $0x730] sm:$0xff] %v2341
  %2643 = vst.msk [vmem:[%s2 + $0x738] sm:$0xff] %vm2412, %v2342
  %2644 = vst [vmem:[%s2 + $0x740] sm:$0xff] %v2343
  %2645 = vst.msk [vmem:[%s2 + $0x748] sm:$0xff] %vm2412, %v2344
  %2646 = vst [vmem:[%s2 + $0x750] sm:$0xff] %v2345
  %2647 = vst.msk [vmem:[%s2 + $0x758] sm:$0xff] %vm2412, %v2346
  %2648 = vst [vmem:[%s2 + $0x760] sm:$0xff] %v2347
  %2649 = vst.msk [vmem:[%s2 + $0x768] sm:$0xff] %vm2412, %v2348
  %2650 = vst [vmem:[%s2 + $0x770] sm:$0xff] %v2349
  %2651 = vst.msk [vmem:[%s2 + $0x778] sm:$0xff] %vm2412, %v2350
  %2652 = vst [vmem:[%s2 + $0x780] sm:$0xff] %v2351
  %2653 = vst.msk [vmem:[%s2 + $0x788] sm:$0xff] %vm2412, %v2352
  %2654 = vst [vmem:[%s2 + $0x790] sm:$0xff] %v2353
  %2655 = vst.msk [vmem:[%s2 + $0x798] sm:$0xff] %vm2412, %v2354
  %2656 = vst [vmem:[%s2 + $0x7a0] sm:$0xff] %v2355
  %2657 = vst.msk [vmem:[%s2 + $0x7a8] sm:$0xff] %vm2412, %v2356
  %2658 = vst [vmem:[%s2 + $0x7b0] sm:$0xff] %v2357
  %2659 = vst.msk [vmem:[%s2 + $0x7b8] sm:$0xff] %vm2412, %v2358
  %2660 = vst [vmem:[%s2 + $0x7c0] sm:$0xff] %v2359
  %2661 = vst.msk [vmem:[%s2 + $0x7c8] sm:$0xff] %vm2412, %v2360
  %2662 = vst [vmem:[%s2 + $0x7d0] sm:$0xff] %v2361
  %2663 = vst.msk [vmem:[%s2 + $0x7d8] sm:$0xff] %vm2412, %v2362
  %2664 = vst [vmem:[%s2 + $0x7e0] sm:$0xff] %v2363
  %2665 = vst.msk [vmem:[%s2 + $0x7e8] sm:$0xff] %vm2412, %v2364
  %2666 = vst [vmem:[%s2 + $0x7f0] sm:$0xff] %v2365
  %2667 = vst.msk [vmem:[%s2 + $0x7f8] sm:$0xff] %vm2412, %v2366
  %2668 = vst [vmem:[%s2 + $0x800] sm:$0xff] %v2367
  %2669 = vst.msk [vmem:[%s2 + $0x808] sm:$0xff] %vm2412, %v2368
  %2670 = vst [vmem:[%s2 + $0x810] sm:$0xff] %v2369
  %2671 = vst.msk [vmem:[%s2 + $0x818] sm:$0xff] %vm2412, %v2370
  %2672 = vst [vmem:[%s2 + $0x820] sm:$0xff] %v2371
  %2673 = vst.msk [vmem:[%s2 + $0x828] sm:$0xff] %vm2412, %v2372
  %2674 = vst [vmem:[%s2 + $0x830] sm:$0xff] %v2373
  %2675 = vst.msk [vmem:[%s2 + $0x838] sm:$0xff] %vm2412, %v2374
  %2676 = vst [vmem:[%s2 + $0x840] sm:$0xff] %v2375
  %2677 = vst.msk [vmem:[%s2 + $0x848] sm:$0xff] %vm2412, %v2376
  %2678 = vst [vmem:[%s2 + $0x850] sm:$0xff] %v2377
  %2679 = vst.msk [vmem:[%s2 + $0x858] sm:$0xff] %vm2412, %v2378
  %2680 = vst [vmem:[%s2 + $0x860] sm:$0xff] %v2379
  %2681 = vst.msk [vmem:[%s2 + $0x868] sm:$0xff] %vm2412, %v2380
  %2682 = vst [vmem:[%s2 + $0x870] sm:$0xff] %v2381
  %2683 = vst.msk [vmem:[%s2 + $0x878] sm:$0xff] %vm2412, %v2382
  %2684 = vst [vmem:[%s2 + $0x880] sm:$0xff] %v2383
  %2685 = vst.msk [vmem:[%s2 + $0x888] sm:$0xff] %vm2412, %v2384
  %2686 = vst [vmem:[%s2 + $0x890] sm:$0xff] %v2385
  %2687 = vst.msk [vmem:[%s2 + $0x898] sm:$0xff] %vm2412, %v2386
  %2688 = vst [vmem:[%s2 + $0x8a0] sm:$0xff] %v2387
  %2689 = vst.msk [vmem:[%s2 + $0x8a8] sm:$0xff] %vm2412, %v2388
  %2690 = vst [vmem:[%s2 + $0x8b0] sm:$0xff] %v2389
  %2691 = vst.msk [vmem:[%s2 + $0x8b8] sm:$0xff] %vm2412, %v2390
  %2692 = vst [vmem:[%s2 + $0x8c0] sm:$0xff] %v2391
  %2693 = vst.msk [vmem:[%s2 + $0x8c8] sm:$0xff] %vm2412, %v2392
  %2694 = vst [vmem:[%s2 + $0x8d0] sm:$0xff] %v2393
  %2695 = vst.msk [vmem:[%s2 + $0x8d8] sm:$0xff] %vm2412, %v2394
  %2696 = vst [vmem:[%s2 + $0x8e0] sm:$0xff] %v2395
  %2697 = vst.msk [vmem:[%s2 + $0x8e8] sm:$0xff] %vm2412, %v2396
  %2698 = vst [vmem:[%s2 + $0x8f0] sm:$0xff] %v2397
  %2699 = vst.msk [vmem:[%s2 + $0x8f8] sm:$0xff] %vm2412, %v2398
  %2700 = vst [vmem:[%s2 + $0x900] sm:$0xff] %v2399
  %2701 = vst.msk [vmem:[%s2 + $0x908] sm:$0xff] %vm2412, %v2400
  %2702 = vst [vmem:[%s2 + $0x910] sm:$0xff] %v2401
  %2703 = vst.msk [vmem:[%s2 + $0x918] sm:$0xff] %vm2412, %v2402
  %2704 = vst [vmem:[%s2 + $0x920] sm:$0xff] %v2403
  %2705 = vst.msk [vmem:[%s2 + $0x928] sm:$0xff] %vm2412, %v2404
  %2706 = vst [vmem:[%s2 + $0x930] sm:$0xff] %v2405
  %2707 = vst.msk [vmem:[%s2 + $0x938] sm:$0xff] %vm2412, %v2406
  %2708 = vst [vmem:[%s2 + $0x940] sm:$0xff] %v2407
  %2709 = vst.msk [vmem:[%s2 + $0x948] sm:$0xff] %vm2412, %v2408
  %2710 = vst [vmem:[%s2 + $0x950] sm:$0xff] %v2409
  %2711 = vst.msk [vmem:[%s2 + $0x958] sm:$0xff] %vm2412, %v2410
  // Predicated region
  $region10: #{tpu_custom_call.1} parent=0 // pred_check
    _
  $region11: #{tpu_custom_call.1} parent=0 // pred_check_branch
    %2713 = sbr.rel (0) target = $region13
  $region12: #{tpu_custom_call.1} parent=0 // pred_region
    _
  $region13: #{tpu_custom_call.1} parent=0 // pred_fallthru
    _
  // Predicated region
  $region14: #{tpu_custom_call.1} parent=0 // pred_check
    _
  $region15: #{tpu_custom_call.1} parent=0 // pred_check_branch
    %2715 = sbr.rel (0) target = $region17
  $region16: #{tpu_custom_call.1} parent=0 // pred_region
    _
  $region17: #{tpu_custom_call.1} parent=0 // pred_fallthru
    _

</llo_original>
